<compile_context>
chip_gen: v7x
topology: tpu7x:2x2x1
jax: 0.10.0
libtpu: 0.0.40
codegen_flags: <defaults>
</compile_context>

<pallas_src>
import functools
import math

import jax
import jax.numpy as jnp
from jax.experimental import pallas as pl
from jax.experimental.pallas import tpu as pltpu


def _temporal_mhsa_kernel(x_ref, w_ref, b_ref, rel_ref, bo_ref, out_ref, *,
                          heads, head_dim, block_b, seq_len):
    """Processes `block_b` batch rows per grid step.

    x_ref   : (block_b, S, Din)    input tile
    w_ref   : (Din, 2*E + heads)   fused [Q*scale | K | V @ Wo] weights
    b_ref   : (1,   2*E + heads)   fused bias
    rel_ref : (1, S, 1)            relative positional bias (added to K)
    bo_ref  : (1, 1) in SMEM       o_proj bias (scalar)
    out_ref : (block_b, S)         per-token scalar output
    """
    TB, S = block_b, seq_len
    E = heads * head_dim
    N = TB * S
    d_in = x_ref.shape[-1]

    # One projection matmul for the whole tile: (TB*S, Din) @ (Din, 2E+H).
    x = x_ref[...].reshape(N, d_in)
    proj = jnp.dot(x, w_ref[...], preferred_element_type=jnp.float32) + b_ref[...]
    proj = proj.reshape(TB, S, 2 * E + heads)

    rel = rel_ref[...]                       # (1, S, 1): broadcasts over batch & head_dim

    acc = jnp.zeros((TB, S, 1), dtype=jnp.float32)
    for h in range(heads):                   # heads == 2 -> unrolled at trace time
        q = proj[:, :, h * head_dim:(h + 1) * head_dim]                   # (TB,S,hd), pre-scaled
        k = proj[:, :, E + h * head_dim:E + (h + 1) * head_dim] + rel     # (TB,S,hd)
        vo = proj[:, :, 2 * E + h:2 * E + h + 1]                          # (TB,S,1), o_proj folded

        # Key positions onto the lane axis (small XLU relayout, no MXU).
        k_t = jnp.swapaxes(k, 1, 2)                                       # (TB,hd,S)
        vo_t = jnp.swapaxes(vo, 1, 2)                                     # (TB,1,S)

        # logits[b,i,j] = sum_d q[b,i,d] * k[b,j,d]  -- head_dim=2 contraction
        # done as broadcast multiply-adds on the VPU (no tiny MXU pushes).
        logits = q[:, :, 0:1] * k_t[:, 0:1, :]                            # (TB,S,S)
        for d in range(1, head_dim):
            logits = logits + q[:, :, d:d + 1] * k_t[:, d:d + 1, :]

        m = jnp.max(logits, axis=-1, keepdims=True)
        e = jnp.exp(logits - m)
        attn = e * pl.reciprocal(jnp.sum(e, axis=-1, keepdims=True), approx=True)

        # Value step has output width 1: elementwise multiply + lane reduce.
        acc = acc + jnp.sum(attn * vo_t, axis=-1, keepdims=True)          # (TB,S,1)

    out = acc[:, :, 0] + bo_ref[0, 0]                                     # scalar bias from SMEM
    out_ref[...] = out.astype(out_ref.dtype)


def _fuse_params(wqkv_t, bqkv, wo_t, heads):
    """Re-arrange qkv / o_proj parameters into one fused projection.

    Returns
      w_fused : (Din, 2*E + heads) with columns [Q_h... | K_h... | (V_h @ Wo_h)...]
      b_fused : (1,   2*E + heads)
    Q columns (and bias) are pre-scaled by 1/sqrt(head_dim); the o_proj weight
    is folded into the per-head V columns (exact linear reassociation).
    """
    _, three_e = wqkv_t.shape
    E = three_e // 3
    hd = E // heads
    scale = 1.0 / math.sqrt(hd)
    bqkv = bqkv.reshape(1, three_e)
    wo_t = wo_t.reshape(E, 1)

    wq, wk, wvo, bq, bk, bvo = [], [], [], [], [], []
    for h in range(heads):
        base = 3 * hd * h
        wo_h = wo_t[h * hd:(h + 1) * hd, :]                               # (hd, 1)
        wq.append(wqkv_t[:, base:base + hd] * scale)
        wk.append(wqkv_t[:, base + hd:base + 2 * hd])
        wvo.append(wqkv_t[:, base + 2 * hd:base + 3 * hd] @ wo_h)
        bq.append(bqkv[:, base:base + hd] * scale)
        bk.append(bqkv[:, base + hd:base + 2 * hd])
        bvo.append(bqkv[:, base + 2 * hd:base + 3 * hd] @ wo_h)
    w_fused = jnp.concatenate(wq + wk + wvo, axis=1)
    b_fused = jnp.concatenate(bq + bk + bvo, axis=1)
    return w_fused, b_fused


def prepare_temporal_mhsa_params(wqkv_t, bqkv, rel, wo_t, bo, *, heads=2):
    """One-time parameter fusion (hoisted out of the per-forward path)."""
    w_fused, b_fused = _fuse_params(wqkv_t, bqkv, wo_t, heads)
    rel3 = rel.reshape(1, -1, 1).astype(w_fused.dtype)                    # (1, S, 1)
    bo2 = bo.reshape(1, 1).astype(jnp.float32)                            # SMEM scalar
    return w_fused, b_fused, rel3, bo2


@functools.partial(jax.jit, static_argnames=("heads", "block_b"))
def temporal_mhsa(x, w_fused, b_fused, rel3, bo2, *, heads=2, block_b=None):
    """x: (B, S, Din) -> (B, S, 1), matching TemporalMHSA.forward.

    Default block_b=None processes the whole batch in a single grid step
    (no per-step pipeline overhead, no batch pad).  For large batches pass a
    block_b that divides B and is a multiple of 8 (e.g. B//2 for a balanced
    2-step grid on a 2-TensorCore v7x chip).
    """
    B, S, d_in = x.shape
    two_e_h = w_fused.shape[1]
    E = (two_e_h - heads) // 2
    hd = E // heads

    if block_b is None:
        block_b = B                                     # single grid step
    assert B % block_b == 0, "block_b must divide the batch (no pad path)"
    assert block_b == B or block_b % 8 == 0, "tiled block_b must be a multiple of 8"
    assert S % 8 == 0, "seq_len must be a multiple of 8 (sublane-aligned reshapes)"
    nb = B // block_b

    kernel = functools.partial(_temporal_mhsa_kernel, heads=heads, head_dim=hd,
                               block_b=block_b, seq_len=S)

    out = pl.pallas_call(
        kernel,
        out_shape=jax.ShapeDtypeStruct((B, S), x.dtype),
        grid=(nb,),
        in_specs=[
            pl.BlockSpec((block_b, S, d_in), lambda b: (b, 0, 0)),      # x tile
            pl.BlockSpec((d_in, two_e_h), lambda b: (0, 0)),            # fused weights
            pl.BlockSpec((1, two_e_h), lambda b: (0, 0)),               # fused bias
            pl.BlockSpec((1, S, 1), lambda b: (0, 0, 0)),               # rel
            pl.BlockSpec(memory_space=pltpu.MemorySpace.SMEM),          # o_proj bias scalar
        ],
        out_specs=pl.BlockSpec((block_b, S), lambda b: (b, 0)),
        compiler_params=pltpu.CompilerParams(
            dimension_semantics=("parallel",)),
    )(x, w_fused, b_fused, rel3, bo2)

    return out[:, :, None]                                              # metadata-only reshape


def temporal_mhsa_reference(x, wqkv_t, bqkv, rel, wo_t, bo, *, heads=2):
    """Pure-JAX reference mirroring the PyTorch forward exactly."""
    B, S, _ = x.shape
    three_e = wqkv_t.shape[1]
    E = three_e // 3
    hd = E // heads

    qkv = x @ wqkv_t + bqkv.reshape(1, 1, three_e)                      # (B, S, 3E)
    qkv = qkv.reshape(B, S, heads, 3 * hd).transpose(0, 2, 1, 3)        # (B, H, S, 3hd)
    q, k, v = jnp.split(qkv, 3, axis=-1)                                # each (B, H, S, hd)
    k = k + rel.reshape(1, 1, S, 1)
    logits = jnp.einsum("bhqd,bhkd->bhqk", q, k) / math.sqrt(hd)
    attn = jax.nn.softmax(logits, axis=-1)
    vals = jnp.einsum("bhqk,bhkd->bhqd", attn, v)                       # (B, H, S, hd)
    vals = vals.transpose(0, 2, 1, 3).reshape(B, S, E)
    return vals @ wo_t.reshape(E, 1) + bo.reshape(1, 1)                 # (B, S, 1)


if __name__ == "__main__":
    # Module hyper-parameters (PyTorch defaults): input_dim=2, seq_len=16, heads=2.
    input_dim, seq_len, heads = 2, 16, 2
    embedding_dim = 4
    batch = 20

    key = jax.random.PRNGKey(0)
    kx, kw1, kb1, kr, kw2, kb2 = jax.random.split(key, 6)

    x = jax.random.normal(kx, (batch, seq_len, input_dim), dtype=jnp.float32)

    # Parameters (shapes from TemporalMHSA.__init__); Linear weights stored
    # pre-transposed to (in_features, out_features).
    wqkv_t = 0.3 * jax.random.normal(kw1, (input_dim, 3 * embedding_dim), jnp.float32)
    bqkv = 0.1 * jax.random.normal(kb1, (1, 3 * embedding_dim), jnp.float32)
    rel = jax.random.normal(kr, (seq_len, 1), jnp.float32)              # nn.Parameter rel
    wo_t = 0.3 * jax.random.normal(kw2, (embedding_dim, 1), jnp.float32)
    bo = 0.1 * jax.random.normal(kb2, (1, 1), jnp.float32)

    # One-time parameter fusion (module init), hoisted out of the forward path.
    fused = prepare_temporal_mhsa_params(wqkv_t, bqkv, rel, wo_t, bo, heads=heads)
    fused = tuple(jax.block_until_ready(p) for p in fused)

    out = temporal_mhsa(x, *fused, heads=heads)                         # single grid step
    out = jax.block_until_ready(out)

    ref = temporal_mhsa_reference(x, wqkv_t, bqkv, rel, wo_t, bo, heads=heads)
    assert out.shape == (batch, seq_len, 1)
    max_err = float(jnp.max(jnp.abs(out - ref)))
    # Tolerance covers the (exact-in-algebra) weight folding and the
    # approximate EUP reciprocal in the softmax denominator.
    assert jnp.allclose(out, ref, atol=2e-3, rtol=2e-3), \
        f"mismatch vs reference, max|diff|={max_err}"

    print("KERNEL_OK")
</pallas_src>

<mosaic_0001>
module attributes {stable_mosaic.version = 11 : i64} {
  func.func @_temporal_mhsa_kernel(%arg0: i32, %arg1: memref<20x16x2xf32, #tpu.memory_space<vmem>>, %arg2: memref<2x10xf32, #tpu.memory_space<vmem>>, %arg3: memref<1x10xf32, #tpu.memory_space<vmem>>, %arg4: memref<1x16x1xf32, #tpu.memory_space<vmem>>, %arg5: memref<1x1xf32, #tpu.memory_space<smem>>, %arg6: memref<20x16xf32, #tpu.memory_space<vmem>>) attributes {dimension_semantics = [#tpu.dimension_semantics<parallel>], iteration_bounds = array<i64: 1>, scalar_prefetch = 0 : i64, scratch_operands = 0 : i64, tpu.core_type = #tpu.core_type<tc>, window_params = [{transform_indices = @transform_0, window_bounds = array<i64: 20, 16, 2>}, {pipeline_mode = #tpu.pipeline_mode<synchronous>, transform_indices = @transform_1, window_bounds = array<i64: 2, 10>}, {pipeline_mode = #tpu.pipeline_mode<synchronous>, transform_indices = @transform_2, window_bounds = array<i64: 1, 10>}, {pipeline_mode = #tpu.pipeline_mode<synchronous>, transform_indices = @transform_3, window_bounds = array<i64: 1, 16, 1>}, {transform_indices = @transform_4, window_bounds = array<i64: 1, 1>}, {transform_indices = @transform_5, window_bounds = array<i64: 20, 16>}]} {
    %c0 = arith.constant 0 : index
    %c0_0 = arith.constant 0 : index
    %c0_1 = arith.constant 0 : index
    %0 = vector.load %arg1[%c0, %c0_0, %c0_1] : memref<20x16x2xf32, #tpu.memory_space<vmem>>, vector<20x16x2xf32>
    %1 = vector.shape_cast %0 : vector<20x16x2xf32> to vector<320x2xf32>
    %c0_2 = arith.constant 0 : index
    %c0_3 = arith.constant 0 : index
    %2 = vector.load %arg2[%c0_2, %c0_3] : memref<2x10xf32, #tpu.memory_space<vmem>>, vector<2x10xf32>
    %cst = arith.constant dense<0.000000e+00> : vector<320x10xf32>
    %3 = tpu.matmul %1, %2, %cst {dimension_numbers = #tpu.dot_dimension_numbers<[1], [0], [0], [1], [0, 0, 1, 1], [], []>} : vector<320x2xf32>, vector<2x10xf32>, vector<320x10xf32> -> vector<320x10xf32>
    %c0_4 = arith.constant 0 : index
    %c0_5 = arith.constant 0 : index
    %4 = vector.load %arg3[%c0_4, %c0_5] : memref<1x10xf32, #tpu.memory_space<vmem>>, vector<1x10xf32>
    %5 = vector.broadcast %4 : vector<1x10xf32> to vector<320x10xf32>
    %6 = arith.addf %3, %5 : vector<320x10xf32>
    %7 = vector.shape_cast %6 : vector<320x10xf32> to vector<20x16x10xf32>
    %c0_6 = arith.constant 0 : index
    %c0_7 = arith.constant 0 : index
    %c0_8 = arith.constant 0 : index
    %8 = vector.load %arg4[%c0_6, %c0_7, %c0_8] : memref<1x16x1xf32, #tpu.memory_space<vmem>>, vector<1x16x1xf32>
    %cst_9 = arith.constant 0.000000e+00 : f32
    %9 = vector.broadcast %cst_9 : f32 to vector<20x16x1xf32>
    %10 = vector.extract_strided_slice %7 {offsets = [0, 0, 0], sizes = [20, 16, 2], strides = [1, 1, 1]} : vector<20x16x10xf32> to vector<20x16x2xf32>
    %11 = vector.extract_strided_slice %7 {offsets = [0, 0, 4], sizes = [20, 16, 2], strides = [1, 1, 1]} : vector<20x16x10xf32> to vector<20x16x2xf32>
    %12 = vector.broadcast %8 : vector<1x16x1xf32> to vector<20x16x2xf32>
    %13 = arith.addf %11, %12 : vector<20x16x2xf32>
    %14 = vector.extract_strided_slice %7 {offsets = [0, 0, 8], sizes = [20, 16, 1], strides = [1, 1, 1]} : vector<20x16x10xf32> to vector<20x16x1xf32>
    %15 = tpu.transpose %13, [0, 2, 1] : vector<20x16x2xf32> -> vector<20x2x16xf32>
    %16 = tpu.transpose %14, [0, 2, 1] : vector<20x16x1xf32> -> vector<20x1x16xf32>
    %17 = vector.extract_strided_slice %10 {offsets = [0, 0, 0], sizes = [20, 16, 1], strides = [1, 1, 1]} : vector<20x16x2xf32> to vector<20x16x1xf32>
    %18 = vector.extract_strided_slice %15 {offsets = [0, 0, 0], sizes = [20, 1, 16], strides = [1, 1, 1]} : vector<20x2x16xf32> to vector<20x1x16xf32>
    %19 = vector.broadcast %17 : vector<20x16x1xf32> to vector<20x16x16xf32>
    %20 = vector.broadcast %18 : vector<20x1x16xf32> to vector<20x16x16xf32>
    %21 = arith.mulf %19, %20 : vector<20x16x16xf32>
    %22 = vector.extract_strided_slice %10 {offsets = [0, 0, 1], sizes = [20, 16, 1], strides = [1, 1, 1]} : vector<20x16x2xf32> to vector<20x16x1xf32>
    %23 = vector.extract_strided_slice %15 {offsets = [0, 1, 0], sizes = [20, 1, 16], strides = [1, 1, 1]} : vector<20x2x16xf32> to vector<20x1x16xf32>
    %24 = vector.broadcast %22 : vector<20x16x1xf32> to vector<20x16x16xf32>
    %25 = vector.broadcast %23 : vector<20x1x16xf32> to vector<20x16x16xf32>
    %26 = arith.mulf %24, %25 : vector<20x16x16xf32>
    %27 = arith.addf %21, %26 : vector<20x16x16xf32>
    %cst_10 = arith.constant dense<0xFF800000> : vector<20x16xf32>
    %28 = vector.multi_reduction <maximumf>, %27, %cst_10 [2] : vector<20x16x16xf32> to vector<20x16xf32>
    %29 = vector.shape_cast %28 : vector<20x16xf32> to vector<20x16x1xf32>
    %30 = vector.broadcast %29 : vector<20x16x1xf32> to vector<20x16x16xf32>
    %31 = arith.subf %27, %30 : vector<20x16x16xf32>
    %32 = math.exp %31 : vector<20x16x16xf32>
    %cst_11 = arith.constant dense<0.000000e+00> : vector<20x16xf32>
    %33 = vector.multi_reduction <add>, %32, %cst_11 [2] : vector<20x16x16xf32> to vector<20x16xf32>
    %34 = vector.shape_cast %33 : vector<20x16xf32> to vector<20x16x1xf32>
    %35 = tpu.reciprocal %34 {approx = true} : vector<20x16x1xf32> -> vector<20x16x1xf32>
    %36 = vector.broadcast %35 : vector<20x16x1xf32> to vector<20x16x16xf32>
    %37 = arith.mulf %32, %36 : vector<20x16x16xf32>
    %38 = vector.broadcast %16 : vector<20x1x16xf32> to vector<20x16x16xf32>
    %39 = arith.mulf %37, %38 : vector<20x16x16xf32>
    %cst_12 = arith.constant dense<0.000000e+00> : vector<20x16xf32>
    %40 = vector.multi_reduction <add>, %39, %cst_12 [2] : vector<20x16x16xf32> to vector<20x16xf32>
    %41 = vector.shape_cast %40 : vector<20x16xf32> to vector<20x16x1xf32>
    %42 = arith.addf %9, %41 : vector<20x16x1xf32>
    %43 = vector.extract_strided_slice %7 {offsets = [0, 0, 2], sizes = [20, 16, 2], strides = [1, 1, 1]} : vector<20x16x10xf32> to vector<20x16x2xf32>
    %44 = vector.extract_strided_slice %7 {offsets = [0, 0, 6], sizes = [20, 16, 2], strides = [1, 1, 1]} : vector<20x16x10xf32> to vector<20x16x2xf32>
    %45 = vector.broadcast %8 : vector<1x16x1xf32> to vector<20x16x2xf32>
    %46 = arith.addf %44, %45 : vector<20x16x2xf32>
    %47 = vector.extract_strided_slice %7 {offsets = [0, 0, 9], sizes = [20, 16, 1], strides = [1, 1, 1]} : vector<20x16x10xf32> to vector<20x16x1xf32>
    %48 = tpu.transpose %46, [0, 2, 1] : vector<20x16x2xf32> -> vector<20x2x16xf32>
    %49 = tpu.transpose %47, [0, 2, 1] : vector<20x16x1xf32> -> vector<20x1x16xf32>
    %50 = vector.extract_strided_slice %43 {offsets = [0, 0, 0], sizes = [20, 16, 1], strides = [1, 1, 1]} : vector<20x16x2xf32> to vector<20x16x1xf32>
    %51 = vector.extract_strided_slice %48 {offsets = [0, 0, 0], sizes = [20, 1, 16], strides = [1, 1, 1]} : vector<20x2x16xf32> to vector<20x1x16xf32>
    %52 = vector.broadcast %50 : vector<20x16x1xf32> to vector<20x16x16xf32>
    %53 = vector.broadcast %51 : vector<20x1x16xf32> to vector<20x16x16xf32>
    %54 = arith.mulf %52, %53 : vector<20x16x16xf32>
    %55 = vector.extract_strided_slice %43 {offsets = [0, 0, 1], sizes = [20, 16, 1], strides = [1, 1, 1]} : vector<20x16x2xf32> to vector<20x16x1xf32>
    %56 = vector.extract_strided_slice %48 {offsets = [0, 1, 0], sizes = [20, 1, 16], strides = [1, 1, 1]} : vector<20x2x16xf32> to vector<20x1x16xf32>
    %57 = vector.broadcast %55 : vector<20x16x1xf32> to vector<20x16x16xf32>
    %58 = vector.broadcast %56 : vector<20x1x16xf32> to vector<20x16x16xf32>
    %59 = arith.mulf %57, %58 : vector<20x16x16xf32>
    %60 = arith.addf %54, %59 : vector<20x16x16xf32>
    %cst_13 = arith.constant dense<0xFF800000> : vector<20x16xf32>
    %61 = vector.multi_reduction <maximumf>, %60, %cst_13 [2] : vector<20x16x16xf32> to vector<20x16xf32>
    %62 = vector.shape_cast %61 : vector<20x16xf32> to vector<20x16x1xf32>
    %63 = vector.broadcast %62 : vector<20x16x1xf32> to vector<20x16x16xf32>
    %64 = arith.subf %60, %63 : vector<20x16x16xf32>
    %65 = math.exp %64 : vector<20x16x16xf32>
    %cst_14 = arith.constant dense<0.000000e+00> : vector<20x16xf32>
    %66 = vector.multi_reduction <add>, %65, %cst_14 [2] : vector<20x16x16xf32> to vector<20x16xf32>
    %67 = vector.shape_cast %66 : vector<20x16xf32> to vector<20x16x1xf32>
    %68 = tpu.reciprocal %67 {approx = true} : vector<20x16x1xf32> -> vector<20x16x1xf32>
    %69 = vector.broadcast %68 : vector<20x16x1xf32> to vector<20x16x16xf32>
    %70 = arith.mulf %65, %69 : vector<20x16x16xf32>
    %71 = vector.broadcast %49 : vector<20x1x16xf32> to vector<20x16x16xf32>
    %72 = arith.mulf %70, %71 : vector<20x16x16xf32>
    %cst_15 = arith.constant dense<0.000000e+00> : vector<20x16xf32>
    %73 = vector.multi_reduction <add>, %72, %cst_15 [2] : vector<20x16x16xf32> to vector<20x16xf32>
    %74 = vector.shape_cast %73 : vector<20x16xf32> to vector<20x16x1xf32>
    %75 = arith.addf %42, %74 : vector<20x16x1xf32>
    %76 = vector.shape_cast %75 : vector<20x16x1xf32> to vector<20x16xf32>
    %c0_16 = arith.constant 0 : index
    %c0_17 = arith.constant 0 : index
    %77 = memref.load %arg5[%c0_16, %c0_17] : memref<1x1xf32, #tpu.memory_space<smem>>
    %78 = vector.broadcast %77 : f32 to vector<20x16xf32>
    %79 = arith.addf %76, %78 : vector<20x16xf32>
    %c0_18 = arith.constant 0 : index
    %c0_19 = arith.constant 0 : index
    %80 = vector.load %arg6[%c0_18, %c0_19] : memref<20x16xf32, #tpu.memory_space<vmem>>, vector<20x16xf32>
    tpu.vector_store %arg6[%c0_18, %c0_19], %79 {strides = array<i32>} : memref<20x16xf32, #tpu.memory_space<vmem>>, vector<20x16xf32>,
    return
  }
  func.func @transform_0(%arg0: i32) -> (i32, i32, i32) {
    %c0_i32 = arith.constant 0 : i32
    %c0_i32_0 = arith.constant 0 : i32
    %c0_i32_1 = arith.constant 0 : i32
    return %arg0, %c0_i32, %c0_i32_0 : i32, i32, i32
  }
  func.func @transform_1(%arg0: i32) -> (i32, i32) {
    %c0_i32 = arith.constant 0 : i32
    %c0_i32_0 = arith.constant 0 : i32
    %c0_i32_1 = arith.constant 0 : i32
    return %c0_i32, %c0_i32_0 : i32, i32
  }
  func.func @transform_2(%arg0: i32) -> (i32, i32) {
    %c0_i32 = arith.constant 0 : i32
    %c0_i32_0 = arith.constant 0 : i32
    %c0_i32_1 = arith.constant 0 : i32
    return %c0_i32, %c0_i32_0 : i32, i32
  }
  func.func @transform_3(%arg0: i32) -> (i32, i32, i32) {
    %c0_i32 = arith.constant 0 : i32
    %c0_i32_0 = arith.constant 0 : i32
    %c0_i32_1 = arith.constant 0 : i32
    %c0_i32_2 = arith.constant 0 : i32
    return %c0_i32, %c0_i32_0, %c0_i32_1 : i32, i32, i32
  }
  func.func @transform_4(%arg0: i32) -> (i32, i32) {
    %c0_i32 = arith.constant 0 : i32
    %c0_i32_0 = arith.constant 0 : i32
    %c0_i32_1 = arith.constant 0 : i32
    return %c0_i32, %c0_i32_0 : i32, i32
  }
  func.func @transform_5(%arg0: i32) -> (i32, i32) {
    %c0_i32 = arith.constant 0 : i32
    %c0_i32_0 = arith.constant 0 : i32
    return %arg0, %c0_i32 : i32, i32
  }
}

</mosaic_0001>

<llo_original>
// kernel: temporal_mhsa.1
$region0: #{temporal_mhsa.1}
  #allocation0 [shape = 'u32[]', space=smem, size = 0x4, offset = 0x4, fixed_abs, tag = 'smem constant byte address 0x4 - core index']
  #allocation1 [shape = 'u32[144,128]{1,0:T(1,128)}', space=vmem, size = 0x12000, scoped, tag = 'internal scratch']
  #allocation2 [shape = 'f32[1,1]{1,0:T(1,128)S(6)}', space=smem, size = 0x200, scoped, tag = 'scoped memory for temporal_mhsa.1']
  %s0 = inlined_call_operand.vmem [shape: f32[20,16,2], index: 0, kind: input, shape index: {}]
  %s1 = inlined_call_operand.vmem [shape: f32[2,10], index: 1, kind: input, shape index: {}]
  %s2 = inlined_call_operand.vmem [shape: f32[1,10], index: 2, kind: input, shape index: {}]
  %s3 = inlined_call_operand.vmem [shape: f32[1,16,1], index: 3, kind: input, shape index: {}]
  %s4 = inlined_call_operand.<no memory space> [shape: f32[1,1], index: 4, kind: input, shape index: {}]
  %s5 = inlined_call_operand.vmem [shape: f32[20,16], index: 5, kind: output, shape index: {}]
  %s6 = sld [smem:[#allocation0]]
  $region30: #{temporal_mhsa.1} parent=0
    _
  %s8 = ssub.s32 1, %s6
  %s9 = scalar_select 0, %s8, %s6
  %10 = sst [smem:[#allocation2]] %s4
  // Predicated region
  $region2: #{temporal_mhsa.1} parent=0 // pred_check
    _
  $region3: #{temporal_mhsa.1} parent=0 // pred_check_branch
    %12 = sbr.rel (0) target = $region5
  $region4: #{temporal_mhsa.1} parent=0 // pred_region
    _
  $region5: #{temporal_mhsa.1} parent=0 // pred_fallthru
    _
  // Predicated region
  $region6: #{temporal_mhsa.1} parent=0 // pred_check
    _
  $region7: #{temporal_mhsa.1} parent=0 // pred_check_branch
    %14 = sbr.rel (0) target = $region9
  $region8: #{temporal_mhsa.1} parent=0 // pred_region
    _
  $region9: #{temporal_mhsa.1} parent=0 // pred_fallthru
    _
  // Predicated region
  $region10: #{temporal_mhsa.1} parent=0 // pred_check
    _
  $region11: #{temporal_mhsa.1} parent=0 // pred_check_branch
    %16 = sbr.rel (0) target = $region13
  $region12: #{temporal_mhsa.1} parent=0 // pred_region
    _
  $region13: #{temporal_mhsa.1} parent=0 // pred_fallthru
    _
  // Predicated region
  $region14: #{temporal_mhsa.1} parent=0 // pred_check
    _
  $region15: #{temporal_mhsa.1} parent=0 // pred_check_branch
    %18 = sbr.rel (0) target = $region17
  $region16: #{temporal_mhsa.1} parent=0 // pred_region
    _
  $region17: #{temporal_mhsa.1} parent=0 // pred_fallthru
    _
  // Predicated region
  $region18: #{temporal_mhsa.1} parent=0 // pred_check
    _
  $region19: #{temporal_mhsa.1} parent=0 // pred_check_branch
    %20 = sbr.rel (0) target = $region21
  $region20: #{temporal_mhsa.1} parent=0 // pred_region
    _
  $region21: #{temporal_mhsa.1} parent=0 // pred_fallthru
    _
  %v21 = vld [vmem:[%s0] sm:$0xff]
  %v22 = vld [vmem:[%s0 + $0x8] sm:$0xff]
  %v23 = vld [vmem:[%s0 + $0x10] sm:$0xff]
  %v24 = vld [vmem:[%s0 + $0x18] sm:$0xff]
  %v25 = vld [vmem:[%s0 + $0x20] sm:$0xff]
  %v26 = vld [vmem:[%s0 + $0x28] sm:$0xff]
  %v27 = vld [vmem:[%s0 + $0x30] sm:$0xff]
  %v28 = vld [vmem:[%s0 + $0x38] sm:$0xff]
  %v29 = vld [vmem:[%s0 + $0x40] sm:$0xff]
  %v30 = vld [vmem:[%s0 + $0x48] sm:$0xff]
  %v31 = vld [vmem:[%s0 + $0x50] sm:$0xff]
  %v32 = vld [vmem:[%s0 + $0x58] sm:$0xff]
  %v33 = vld [vmem:[%s0 + $0x60] sm:$0xff]
  %v34 = vld [vmem:[%s0 + $0x68] sm:$0xff]
  %v35 = vld [vmem:[%s0 + $0x70] sm:$0xff]
  %v36 = vld [vmem:[%s0 + $0x78] sm:$0xff]
  %v37 = vld [vmem:[%s0 + $0x80] sm:$0xff]
  %v38 = vld [vmem:[%s0 + $0x88] sm:$0xff]
  %v39 = vld [vmem:[%s0 + $0x90] sm:$0xff]
  %v40 = vld [vmem:[%s0 + $0x98] sm:$0xff]
  %v41 = vld [vmem:[%s0 + $0xa0] sm:$0xff]
  %v42 = vld [vmem:[%s0 + $0xa8] sm:$0xff]
  %v43 = vld [vmem:[%s0 + $0xb0] sm:$0xff]
  %v44 = vld [vmem:[%s0 + $0xb8] sm:$0xff]
  %v45 = vld [vmem:[%s0 + $0xc0] sm:$0xff]
  %v46 = vld [vmem:[%s0 + $0xc8] sm:$0xff]
  %v47 = vld [vmem:[%s0 + $0xd0] sm:$0xff]
  %v48 = vld [vmem:[%s0 + $0xd8] sm:$0xff]
  %v49 = vld [vmem:[%s0 + $0xe0] sm:$0xff]
  %v50 = vld [vmem:[%s0 + $0xe8] sm:$0xff]
  %v51 = vld [vmem:[%s0 + $0xf0] sm:$0xff]
  %v52 = vld [vmem:[%s0 + $0xf8] sm:$0xff]
  %v53 = vld [vmem:[%s0 + $0x100] sm:$0xff]
  %v54 = vld [vmem:[%s0 + $0x108] sm:$0xff]
  %v55 = vld [vmem:[%s0 + $0x110] sm:$0xff]
  %v56 = vld [vmem:[%s0 + $0x118] sm:$0xff]
  %v57 = vld [vmem:[%s0 + $0x120] sm:$0xff]
  %v58 = vld [vmem:[%s0 + $0x128] sm:$0xff]
  %v59 = vld [vmem:[%s0 + $0x130] sm:$0xff]
  %v60 = vld [vmem:[%s0 + $0x138] sm:$0xff]
  %v61 = vld [vmem:[%s1] sm:$0x3]
  %v62 = vld [vmem:[%s2] sm:$0x1]
  %v64 = vlaneseq
  %v65 = vshrl.u32 %v64, 7
  %v66 = vsub.s32 0, %v65
  %v67 = vrot.slane %v62, %v66
  %vm69 = vcmask 15360
  %v71 = vsel %vm69, %v21, 0
  %v74 = vsel %vm69, %v22, 0
  %v77 = vsel %vm69, %v23, 0
  %v80 = vsel %vm69, %v24, 0
  %v83 = vsel %vm69, %v25, 0
  %v86 = vsel %vm69, %v26, 0
  %v89 = vsel %vm69, %v27, 0
  %v92 = vsel %vm69, %v28, 0
  %v95 = vsel %vm69, %v29, 0
  %v98 = vsel %vm69, %v30, 0
  %v101 = vsel %vm69, %v31, 0
  %v104 = vsel %vm69, %v32, 0
  %v107 = vsel %vm69, %v33, 0
  %v110 = vsel %vm69, %v34, 0
  %v113 = vsel %vm69, %v35, 0
  %v116 = vsel %vm69, %v36, 0
  %v119 = vsel %vm69, %v37, 0
  %v122 = vsel %vm69, %v38, 0
  %v125 = vsel %vm69, %v39, 0
  %v128 = vsel %vm69, %v40, 0
  %v131 = vsel %vm69, %v41, 0
  %v134 = vsel %vm69, %v42, 0
  %v137 = vsel %vm69, %v43, 0
  %v140 = vsel %vm69, %v44, 0
  %v143 = vsel %vm69, %v45, 0
  %v146 = vsel %vm69, %v46, 0
  %v149 = vsel %vm69, %v47, 0
  %v152 = vsel %vm69, %v48, 0
  %v155 = vsel %vm69, %v49, 0
  %v158 = vsel %vm69, %v50, 0
  %v161 = vsel %vm69, %v51, 0
  %v164 = vsel %vm69, %v52, 0
  %v167 = vsel %vm69, %v53, 0
  %v170 = vsel %vm69, %v54, 0
  %v173 = vsel %vm69, %v55, 0
  %v176 = vsel %vm69, %v56, 0
  %v179 = vsel %vm69, %v57, 0
  %v182 = vsel %vm69, %v58, 0
  %v185 = vsel %vm69, %v59, 0
  %v188 = vsel %vm69, %v60, 0
  %vm190 = vcmask 1041408
  %v192 = vsel %vm190, %v61, 0
  %194 = vmatprep.subr.mxu0 0.0
  %195 = vmatpush1.msra.mxu0 %v192
  %196 = vmatprep.subr.mxu0 0.0
  %197 = vmatpush1.msra.mxu0 0.0
  %198 = vmatprep.subr.mxu0 0.0
  %199 = vmatpush1.msra.mxu0 0.0
  %200 = vmatprep.subr.mxu0 0.0
  %201 = vmatpush1.msra.mxu0 0.0
  %202 = vmatprep.subr.mxu0 0.0
  %203 = vmatpush1.msra.mxu0 0.0
  %204 = vmatprep.subr.mxu0 0.0
  %205 = vmatpush1.msra.mxu0 0.0
  %206 = vmatprep.subr.mxu0 0.0
  %207 = vmatpush1.msra.mxu0 0.0
  %208 = vmatprep.subr.mxu0 0.0
  %209 = vmatpush1.msra.mxu0 0.0
  %210 = vmatprep.subr.mxu0 0.0
  %211 = vmatpush1.msra.mxu0 0.0
  %212 = vmatprep.subr.mxu0 0.0
  %213 = vmatpush1.msra.mxu0 0.0
  %214 = vmatprep.subr.mxu0 0.0
  %215 = vmatpush1.msra.mxu0 0.0
  %216 = vmatprep.subr.mxu0 0.0
  %217 = vmatpush1.msra.mxu0 0.0
  %218 = vmatprep.subr.mxu0 0.0
  %219 = vmatpush1.msra.mxu0 0.0
  %220 = vmatprep.subr.mxu0 0.0
  %221 = vmatpush1.msra.mxu0 0.0
  %222 = vmatprep.subr.mxu0 0.0
  %223 = vmatpush1.msra.mxu0 0.0
  %224 = vmatprep.subr.mxu0 0.0
  %225 = vmatpush1.msra.mxu0 0.0
  %226 = vmatprep.subr.mxu0 0.0
  %227 = vmatpush1.msra.mxu0 0.0
  %228 = vmatprep.subr.mxu0 0.0
  %229 = vmatpush1.msra.mxu0 0.0
  %230 = vmatprep.subr.mxu0 0.0
  %231 = vmatpush1.msra.mxu0 0.0
  %232 = vmatprep.subr.mxu0 0.0
  %233 = vmatpush1.msra.mxu0 0.0
  %234 = vmatprep.subr.mxu0 0.0
  %235 = vmatpush1.msra.mxu0 0.0
  %236 = vmatprep.subr.mxu0 0.0
  %237 = vmatpush1.msra.mxu0 0.0
  %238 = vmatprep.subr.mxu0 0.0
  %239 = vmatpush1.msra.mxu0 0.0
  %240 = vmatprep.subr.mxu0 0.0
  %241 = vmatpush1.msra.mxu0 0.0
  %242 = vmatprep.subr.mxu0 0.0
  %243 = vmatpush1.msra.mxu0 0.0
  %244 = vmatprep.subr.mxu0 0.0
  %245 = vmatpush1.msra.mxu0 0.0
  %246 = vmatprep.subr.mxu0 0.0
  %247 = vmatpush1.msra.mxu0 0.0
  %248 = vmatprep.subr.mxu0 0.0
  %249 = vmatpush1.msra.mxu0 0.0
  %250 = vmatprep.subr.mxu0 0.0
  %251 = vmatpush1.msra.mxu0 0.0
  %252 = vmatprep.subr.mxu0 0.0
  %253 = vmatpush1.msra.mxu0 0.0
  %254 = vmatprep.subr.mxu0 0.0
  %255 = vmatpush1.msra.mxu0 0.0
  %256 = vmatprep.subr.mxu0 0.0
  %257 = vmatpush1.msra.mxu0 0.0
  %258 = vmatprep.mubr.f32.mxu0 0.0
  %259 = vmatmul.mubr.f32.gmra.mrb[0].mxu0 %v71
  %v260 = vpop.f32.mrb[0].mxu0
  %v261 = vadd.f32 %v67, %v260
  %v262 = vpop.f32.mrb[0].mxu0
  %263 = vmatprep.mubr.f32.mxu0 0.0
  %264 = vmatmul.mubr.f32.gmra.mrb[0].mxu0 %v74
  %v265 = vpop.f32.mrb[0].mxu0
  %v266 = vadd.f32 %v67, %v265
  %v267 = vpop.f32.mrb[0].mxu0
  %268 = vmatprep.mubr.f32.mxu0 0.0
  %269 = vmatmul.mubr.f32.gmra.mrb[0].mxu0 %v77
  %v270 = vpop.f32.mrb[0].mxu0
  %v271 = vadd.f32 %v67, %v270
  %v272 = vpop.f32.mrb[0].mxu0
  %273 = vmatprep.mubr.f32.mxu0 0.0
  %274 = vmatmul.mubr.f32.gmra.mrb[0].mxu0 %v80
  %v275 = vpop.f32.mrb[0].mxu0
  %v276 = vadd.f32 %v67, %v275
  %v277 = vpop.f32.mrb[0].mxu0
  %278 = vmatprep.mubr.f32.mxu0 0.0
  %279 = vmatmul.mubr.f32.gmra.mrb[0].mxu0 %v83
  %v280 = vpop.f32.mrb[0].mxu0
  %v281 = vadd.f32 %v67, %v280
  %v282 = vpop.f32.mrb[0].mxu0
  %283 = vmatprep.mubr.f32.mxu0 0.0
  %284 = vmatmul.mubr.f32.gmra.mrb[0].mxu0 %v86
  %v285 = vpop.f32.mrb[0].mxu0
  %v286 = vadd.f32 %v67, %v285
  %v287 = vpop.f32.mrb[0].mxu0
  %288 = vmatprep.mubr.f32.mxu0 0.0
  %289 = vmatmul.mubr.f32.gmra.mrb[0].mxu0 %v89
  %v290 = vpop.f32.mrb[0].mxu0
  %v291 = vadd.f32 %v67, %v290
  %v292 = vpop.f32.mrb[0].mxu0
  %293 = vmatprep.mubr.f32.mxu0 0.0
  %294 = vmatmul.mubr.f32.gmra.mrb[0].mxu0 %v92
  %v295 = vpop.f32.mrb[0].mxu0
  %v296 = vadd.f32 %v67, %v295
  %v297 = vpop.f32.mrb[0].mxu0
  %298 = vmatprep.mubr.f32.mxu0 0.0
  %299 = vmatmul.mubr.f32.gmra.mrb[0].mxu0 %v95
  %v300 = vpop.f32.mrb[0].mxu0
  %v301 = vadd.f32 %v67, %v300
  %v302 = vpop.f32.mrb[0].mxu0
  %303 = vmatprep.mubr.f32.mxu0 0.0
  %304 = vmatmul.mubr.f32.gmra.mrb[0].mxu0 %v98
  %v305 = vpop.f32.mrb[0].mxu0
  %v306 = vadd.f32 %v67, %v305
  %v307 = vpop.f32.mrb[0].mxu0
  %308 = vmatprep.mubr.f32.mxu0 0.0
  %309 = vmatmul.mubr.f32.gmra.mrb[0].mxu0 %v101
  %v310 = vpop.f32.mrb[0].mxu0
  %v311 = vadd.f32 %v67, %v310
  %v312 = vpop.f32.mrb[0].mxu0
  %313 = vmatprep.mubr.f32.mxu0 0.0
  %314 = vmatmul.mubr.f32.gmra.mrb[0].mxu0 %v104
  %v315 = vpop.f32.mrb[0].mxu0
  %v316 = vadd.f32 %v67, %v315
  %v317 = vpop.f32.mrb[0].mxu0
  %318 = vmatprep.mubr.f32.mxu0 0.0
  %319 = vmatmul.mubr.f32.gmra.mrb[0].mxu0 %v107
  %v320 = vpop.f32.mrb[0].mxu0
  %v321 = vadd.f32 %v67, %v320
  %v322 = vpop.f32.mrb[0].mxu0
  %323 = vmatprep.mubr.f32.mxu0 0.0
  %324 = vmatmul.mubr.f32.gmra.mrb[0].mxu0 %v110
  %v325 = vpop.f32.mrb[0].mxu0
  %v326 = vadd.f32 %v67, %v325
  %v327 = vpop.f32.mrb[0].mxu0
  %328 = vmatprep.mubr.f32.mxu0 0.0
  %329 = vmatmul.mubr.f32.gmra.mrb[0].mxu0 %v113
  %v330 = vpop.f32.mrb[0].mxu0
  %v331 = vadd.f32 %v67, %v330
  %v332 = vpop.f32.mrb[0].mxu0
  %333 = vmatprep.mubr.f32.mxu0 0.0
  %334 = vmatmul.mubr.f32.gmra.mrb[0].mxu0 %v116
  %v335 = vpop.f32.mrb[0].mxu0
  %v336 = vadd.f32 %v67, %v335
  %v337 = vpop.f32.mrb[0].mxu0
  %338 = vmatprep.mubr.f32.mxu0 0.0
  %339 = vmatmul.mubr.f32.gmra.mrb[0].mxu0 %v119
  %v340 = vpop.f32.mrb[0].mxu0
  %v341 = vadd.f32 %v67, %v340
  %v342 = vpop.f32.mrb[0].mxu0
  %343 = vmatprep.mubr.f32.mxu0 0.0
  %344 = vmatmul.mubr.f32.gmra.mrb[0].mxu0 %v122
  %v345 = vpop.f32.mrb[0].mxu0
  %v346 = vadd.f32 %v67, %v345
  %v347 = vpop.f32.mrb[0].mxu0
  %348 = vmatprep.mubr.f32.mxu0 0.0
  %349 = vmatmul.mubr.f32.gmra.mrb[0].mxu0 %v125
  %v350 = vpop.f32.mrb[0].mxu0
  %v351 = vadd.f32 %v67, %v350
  %v352 = vpop.f32.mrb[0].mxu0
  %353 = vmatprep.mubr.f32.mxu0 0.0
  %354 = vmatmul.mubr.f32.gmra.mrb[0].mxu0 %v128
  %v355 = vpop.f32.mrb[0].mxu0
  %v356 = vadd.f32 %v67, %v355
  %v357 = vpop.f32.mrb[0].mxu0
  %358 = vmatprep.mubr.f32.mxu0 0.0
  %359 = vmatmul.mubr.f32.gmra.mrb[0].mxu0 %v131
  %v360 = vpop.f32.mrb[0].mxu0
  %v361 = vadd.f32 %v67, %v360
  %v362 = vpop.f32.mrb[0].mxu0
  %363 = vmatprep.mubr.f32.mxu0 0.0
  %364 = vmatmul.mubr.f32.gmra.mrb[0].mxu0 %v134
  %v365 = vpop.f32.mrb[0].mxu0
  %v366 = vadd.f32 %v67, %v365
  %v367 = vpop.f32.mrb[0].mxu0
  %368 = vmatprep.mubr.f32.mxu0 0.0
  %369 = vmatmul.mubr.f32.gmra.mrb[0].mxu0 %v137
  %v370 = vpop.f32.mrb[0].mxu0
  %v371 = vadd.f32 %v67, %v370
  %v372 = vpop.f32.mrb[0].mxu0
  %373 = vmatprep.mubr.f32.mxu0 0.0
  %374 = vmatmul.mubr.f32.gmra.mrb[0].mxu0 %v140
  %v375 = vpop.f32.mrb[0].mxu0
  %v376 = vadd.f32 %v67, %v375
  %v377 = vpop.f32.mrb[0].mxu0
  %378 = vmatprep.mubr.f32.mxu0 0.0
  %379 = vmatmul.mubr.f32.gmra.mrb[0].mxu0 %v143
  %v380 = vpop.f32.mrb[0].mxu0
  %v381 = vadd.f32 %v67, %v380
  %v382 = vpop.f32.mrb[0].mxu0
  %383 = vmatprep.mubr.f32.mxu0 0.0
  %384 = vmatmul.mubr.f32.gmra.mrb[0].mxu0 %v146
  %v385 = vpop.f32.mrb[0].mxu0
  %v386 = vadd.f32 %v67, %v385
  %v387 = vpop.f32.mrb[0].mxu0
  %388 = vmatprep.mubr.f32.mxu0 0.0
  %389 = vmatmul.mubr.f32.gmra.mrb[0].mxu0 %v149
  %v390 = vpop.f32.mrb[0].mxu0
  %v391 = vadd.f32 %v67, %v390
  %v392 = vpop.f32.mrb[0].mxu0
  %393 = vmatprep.mubr.f32.mxu0 0.0
  %394 = vmatmul.mubr.f32.gmra.mrb[0].mxu0 %v152
  %v395 = vpop.f32.mrb[0].mxu0
  %v396 = vadd.f32 %v67, %v395
  %v397 = vpop.f32.mrb[0].mxu0
  %398 = vmatprep.mubr.f32.mxu0 0.0
  %399 = vmatmul.mubr.f32.gmra.mrb[0].mxu0 %v155
  %v400 = vpop.f32.mrb[0].mxu0
  %v401 = vadd.f32 %v67, %v400
  %v402 = vpop.f32.mrb[0].mxu0
  %403 = vmatprep.mubr.f32.mxu0 0.0
  %404 = vmatmul.mubr.f32.gmra.mrb[0].mxu0 %v158
  %v405 = vpop.f32.mrb[0].mxu0
  %v406 = vadd.f32 %v67, %v405
  %v407 = vpop.f32.mrb[0].mxu0
  %408 = vmatprep.mubr.f32.mxu0 0.0
  %409 = vmatmul.mubr.f32.gmra.mrb[0].mxu0 %v161
  %v410 = vpop.f32.mrb[0].mxu0
  %v411 = vadd.f32 %v67, %v410
  %v412 = vpop.f32.mrb[0].mxu0
  %413 = vmatprep.mubr.f32.mxu0 0.0
  %414 = vmatmul.mubr.f32.gmra.mrb[0].mxu0 %v164
  %v415 = vpop.f32.mrb[0].mxu0
  %v416 = vadd.f32 %v67, %v415
  %v417 = vpop.f32.mrb[0].mxu0
  %418 = vmatprep.mubr.f32.mxu0 0.0
  %419 = vmatmul.mubr.f32.gmra.mrb[0].mxu0 %v167
  %v420 = vpop.f32.mrb[0].mxu0
  %v421 = vadd.f32 %v67, %v420
  %v422 = vpop.f32.mrb[0].mxu0
  %423 = vmatprep.mubr.f32.mxu0 0.0
  %424 = vmatmul.mubr.f32.gmra.mrb[0].mxu0 %v170
  %v425 = vpop.f32.mrb[0].mxu0
  %v426 = vadd.f32 %v67, %v425
  %v427 = vpop.f32.mrb[0].mxu0
  %428 = vmatprep.mubr.f32.mxu0 0.0
  %429 = vmatmul.mubr.f32.gmra.mrb[0].mxu0 %v173
  %v430 = vpop.f32.mrb[0].mxu0
  %v431 = vadd.f32 %v67, %v430
  %v432 = vpop.f32.mrb[0].mxu0
  %433 = vmatprep.mubr.f32.mxu0 0.0
  %434 = vmatmul.mubr.f32.gmra.mrb[0].mxu0 %v176
  %v435 = vpop.f32.mrb[0].mxu0
  %v436 = vadd.f32 %v67, %v435
  %v437 = vpop.f32.mrb[0].mxu0
  %438 = vmatprep.mubr.f32.mxu0 0.0
  %439 = vmatmul.mubr.f32.gmra.mrb[0].mxu0 %v179
  %v440 = vpop.f32.mrb[0].mxu0
  %v441 = vadd.f32 %v67, %v440
  %v442 = vpop.f32.mrb[0].mxu0
  %443 = vmatprep.mubr.f32.mxu0 0.0
  %444 = vmatmul.mubr.f32.gmra.mrb[0].mxu0 %v182
  %v445 = vpop.f32.mrb[0].mxu0
  %v446 = vadd.f32 %v67, %v445
  %v447 = vpop.f32.mrb[0].mxu0
  %448 = vmatprep.mubr.f32.mxu0 0.0
  %449 = vmatmul.mubr.f32.gmra.mrb[0].mxu0 %v185
  %v450 = vpop.f32.mrb[0].mxu0
  %v451 = vadd.f32 %v67, %v450
  %v452 = vpop.f32.mrb[0].mxu0
  %453 = vmatprep.mubr.f32.mxu0 0.0
  %454 = vmatmul.mubr.f32.gmra.mrb[0].mxu0 %v188
  %v455 = vpop.f32.mrb[0].mxu0
  %v456 = vadd.f32 %v67, %v455
  %v457 = vpop.f32.mrb[0].mxu0
  %458 = vdwg.mxu0
  %v459 = vld [vmem:[%s3] sm:$0xff]
  %v460 = vld [vmem:[%s3 + $0x8] sm:$0xff]
  %462 = vset.pattern.permute.xlu0 0
  %463 = vperm.xlu0 %462, %v459
  %v464 = vpop.permute.xlu0 %463
  %467 = vset.pattern.permute.xlu0 0
  %468 = vperm.xlu0 %467, %v460
  %v469 = vpop.permute.xlu0 %468
  %v471 = vadd.f32 %v261, %v464
  %v472 = vadd.f32 %v266, %v469
  %v473 = vadd.f32 %v271, %v464
  %v474 = vadd.f32 %v276, %v469
  %v475 = vadd.f32 %v281, %v464
  %v476 = vadd.f32 %v286, %v469
  %v477 = vadd.f32 %v291, %v464
  %v478 = vadd.f32 %v296, %v469
  %v479 = vadd.f32 %v301, %v464
  %v480 = vadd.f32 %v306, %v469
  %v481 = vadd.f32 %v311, %v464
  %v482 = vadd.f32 %v316, %v469
  %v483 = vadd.f32 %v321, %v464
  %v484 = vadd.f32 %v326, %v469
  %v485 = vadd.f32 %v331, %v464
  %v486 = vadd.f32 %v336, %v469
  %v487 = vadd.f32 %v341, %v464
  %v488 = vadd.f32 %v346, %v469
  %v489 = vadd.f32 %v351, %v464
  %v490 = vadd.f32 %v356, %v469
  %v491 = vadd.f32 %v361, %v464
  %v492 = vadd.f32 %v366, %v469
  %v493 = vadd.f32 %v371, %v464
  %v494 = vadd.f32 %v376, %v469
  %v495 = vadd.f32 %v381, %v464
  %v496 = vadd.f32 %v386, %v469
  %v497 = vadd.f32 %v391, %v464
  %v498 = vadd.f32 %v396, %v469
  %v499 = vadd.f32 %v401, %v464
  %v500 = vadd.f32 %v406, %v469
  %v501 = vadd.f32 %v411, %v464
  %v502 = vadd.f32 %v416, %v469
  %v503 = vadd.f32 %v421, %v464
  %v504 = vadd.f32 %v426, %v469
  %v505 = vadd.f32 %v431, %v464
  %v506 = vadd.f32 %v436, %v469
  %v507 = vadd.f32 %v441, %v464
  %v508 = vadd.f32 %v446, %v469
  %v509 = vadd.f32 %v451, %v464
  %v510 = vadd.f32 %v456, %v469
  %551 = vrot.lane.b32.xlu0 %v471, 124
  %v552 = vpop.permute.xlu0 %551
  %553 = vrot.lane.b32.xlu0 %v472, 124
  %v554 = vpop.permute.xlu0 %553
  %555 = vrot.lane.b32.xlu0 %v473, 124
  %v556 = vpop.permute.xlu0 %555
  %557 = vrot.lane.b32.xlu0 %v474, 124
  %v558 = vpop.permute.xlu0 %557
  %559 = vrot.lane.b32.xlu0 %v475, 124
  %v560 = vpop.permute.xlu0 %559
  %561 = vrot.lane.b32.xlu0 %v476, 124
  %v562 = vpop.permute.xlu0 %561
  %563 = vrot.lane.b32.xlu0 %v477, 124
  %v564 = vpop.permute.xlu0 %563
  %565 = vrot.lane.b32.xlu0 %v478, 124
  %v566 = vpop.permute.xlu0 %565
  %567 = vrot.lane.b32.xlu0 %v479, 124
  %v568 = vpop.permute.xlu0 %567
  %569 = vrot.lane.b32.xlu0 %v480, 124
  %v570 = vpop.permute.xlu0 %569
  %571 = vrot.lane.b32.xlu0 %v481, 124
  %v572 = vpop.permute.xlu0 %571
  %573 = vrot.lane.b32.xlu0 %v482, 124
  %v574 = vpop.permute.xlu0 %573
  %575 = vrot.lane.b32.xlu0 %v483, 124
  %v576 = vpop.permute.xlu0 %575
  %577 = vrot.lane.b32.xlu0 %v484, 124
  %v578 = vpop.permute.xlu0 %577
  %579 = vrot.lane.b32.xlu0 %v485, 124
  %v580 = vpop.permute.xlu0 %579
  %581 = vrot.lane.b32.xlu0 %v486, 124
  %v582 = vpop.permute.xlu0 %581
  %583 = vrot.lane.b32.xlu0 %v487, 124
  %v584 = vpop.permute.xlu0 %583
  %585 = vrot.lane.b32.xlu0 %v488, 124
  %v586 = vpop.permute.xlu0 %585
  %587 = vrot.lane.b32.xlu0 %v489, 124
  %v588 = vpop.permute.xlu0 %587
  %589 = vrot.lane.b32.xlu0 %v490, 124
  %v590 = vpop.permute.xlu0 %589
  %591 = vrot.lane.b32.xlu0 %v491, 124
  %v592 = vpop.permute.xlu0 %591
  %593 = vrot.lane.b32.xlu0 %v492, 124
  %v594 = vpop.permute.xlu0 %593
  %595 = vrot.lane.b32.xlu0 %v493, 124
  %v596 = vpop.permute.xlu0 %595
  %597 = vrot.lane.b32.xlu0 %v494, 124
  %v598 = vpop.permute.xlu0 %597
  %599 = vrot.lane.b32.xlu0 %v495, 124
  %v600 = vpop.permute.xlu0 %599
  %601 = vrot.lane.b32.xlu0 %v496, 124
  %v602 = vpop.permute.xlu0 %601
  %603 = vrot.lane.b32.xlu0 %v497, 124
  %v604 = vpop.permute.xlu0 %603
  %605 = vrot.lane.b32.xlu0 %v498, 124
  %v606 = vpop.permute.xlu0 %605
  %607 = vrot.lane.b32.xlu0 %v499, 124
  %v608 = vpop.permute.xlu0 %607
  %609 = vrot.lane.b32.xlu0 %v500, 124
  %v610 = vpop.permute.xlu0 %609
  %611 = vrot.lane.b32.xlu0 %v501, 124
  %v612 = vpop.permute.xlu0 %611
  %613 = vrot.lane.b32.xlu0 %v502, 124
  %v614 = vpop.permute.xlu0 %613
  %615 = vrot.lane.b32.xlu0 %v503, 124
  %v616 = vpop.permute.xlu0 %615
  %617 = vrot.lane.b32.xlu0 %v504, 124
  %v618 = vpop.permute.xlu0 %617
  %619 = vrot.lane.b32.xlu0 %v505, 124
  %v620 = vpop.permute.xlu0 %619
  %621 = vrot.lane.b32.xlu0 %v506, 124
  %v622 = vpop.permute.xlu0 %621
  %623 = vrot.lane.b32.xlu0 %v507, 124
  %v624 = vpop.permute.xlu0 %623
  %625 = vrot.lane.b32.xlu0 %v508, 124
  %v626 = vpop.permute.xlu0 %625
  %627 = vrot.lane.b32.xlu0 %v509, 124
  %v628 = vpop.permute.xlu0 %627
  %629 = vrot.lane.b32.xlu0 %v510, 124
  %v630 = vpop.permute.xlu0 %629
  %671 = vxpose.xlu0.b32.start [1/16] %v552, 128
  %672 = vxpose.xlu0.b32.cont [2/16] %v554, 128
  %673 = vxpose.xlu0.b32.cont [3/16] 0.0, 128
  %674 = vxpose.xlu0.b32.cont [4/16] 0.0, 128
  %675 = vxpose.xlu0.b32.cont [5/16] 0.0, 128
  %676 = vxpose.xlu0.b32.cont [6/16] 0.0, 128
  %677 = vxpose.xlu0.b32.cont [7/16] 0.0, 128
  %678 = vxpose.xlu0.b32.cont [8/16] 0.0, 128
  %679 = vxpose.xlu0.b32.cont [9/16] 0.0, 128
  %680 = vxpose.xlu0.b32.cont [10/16] 0.0, 128
  %681 = vxpose.xlu0.b32.cont [11/16] 0.0, 128
  %682 = vxpose.xlu0.b32.cont [12/16] 0.0, 128
  %683 = vxpose.xlu0.b32.cont [13/16] 0.0, 128
  %684 = vxpose.xlu0.b32.cont [14/16] 0.0, 128
  %685 = vxpose.xlu0.b32.cont [15/16] 0.0, 128
  %686 = vxpose.xlu0.b32.end [16/16] 0.0, 128
  %v687 = vpop.trf.xlu0
  %v688 = vpop.trf.xlu0
  %v689 = vpop.trf.xlu0
  %v690 = vpop.trf.xlu0
  %v691 = vpop.trf.xlu0
  %v692 = vpop.trf.xlu0
  %v693 = vpop.trf.xlu0
  %v694 = vpop.trf.xlu0
  %v695 = vpop.trf.xlu0
  %v696 = vpop.trf.xlu0
  %v697 = vpop.trf.xlu0
  %v698 = vpop.trf.xlu0
  %v699 = vpop.trf.xlu0
  %v700 = vpop.trf.xlu0
  %v701 = vpop.trf.xlu0
  %v702 = vpop.trf.xlu0
  %703 = vxpose.xlu0.b32.start [1/16] %v556, 128
  %704 = vxpose.xlu0.b32.cont [2/16] %v558, 128
  %705 = vxpose.xlu0.b32.cont [3/16] 0.0, 128
  %706 = vxpose.xlu0.b32.cont [4/16] 0.0, 128
  %707 = vxpose.xlu0.b32.cont [5/16] 0.0, 128
  %708 = vxpose.xlu0.b32.cont [6/16] 0.0, 128
  %709 = vxpose.xlu0.b32.cont [7/16] 0.0, 128
  %710 = vxpose.xlu0.b32.cont [8/16] 0.0, 128
  %711 = vxpose.xlu0.b32.cont [9/16] 0.0, 128
  %712 = vxpose.xlu0.b32.cont [10/16] 0.0, 128
  %713 = vxpose.xlu0.b32.cont [11/16] 0.0, 128
  %714 = vxpose.xlu0.b32.cont [12/16] 0.0, 128
  %715 = vxpose.xlu0.b32.cont [13/16] 0.0, 128
  %716 = vxpose.xlu0.b32.cont [14/16] 0.0, 128
  %717 = vxpose.xlu0.b32.cont [15/16] 0.0, 128
  %718 = vxpose.xlu0.b32.end [16/16] 0.0, 128
  %v719 = vpop.trf.xlu0
  %v720 = vpop.trf.xlu0
  %v721 = vpop.trf.xlu0
  %v722 = vpop.trf.xlu0
  %v723 = vpop.trf.xlu0
  %v724 = vpop.trf.xlu0
  %v725 = vpop.trf.xlu0
  %v726 = vpop.trf.xlu0
  %v727 = vpop.trf.xlu0
  %v728 = vpop.trf.xlu0
  %v729 = vpop.trf.xlu0
  %v730 = vpop.trf.xlu0
  %v731 = vpop.trf.xlu0
  %v732 = vpop.trf.xlu0
  %v733 = vpop.trf.xlu0
  %v734 = vpop.trf.xlu0
  %735 = vxpose.xlu0.b32.start [1/16] %v560, 128
  %736 = vxpose.xlu0.b32.cont [2/16] %v562, 128
  %737 = vxpose.xlu0.b32.cont [3/16] 0.0, 128
  %738 = vxpose.xlu0.b32.cont [4/16] 0.0, 128
  %739 = vxpose.xlu0.b32.cont [5/16] 0.0, 128
  %740 = vxpose.xlu0.b32.cont [6/16] 0.0, 128
  %741 = vxpose.xlu0.b32.cont [7/16] 0.0, 128
  %742 = vxpose.xlu0.b32.cont [8/16] 0.0, 128
  %743 = vxpose.xlu0.b32.cont [9/16] 0.0, 128
  %744 = vxpose.xlu0.b32.cont [10/16] 0.0, 128
  %745 = vxpose.xlu0.b32.cont [11/16] 0.0, 128
  %746 = vxpose.xlu0.b32.cont [12/16] 0.0, 128
  %747 = vxpose.xlu0.b32.cont [13/16] 0.0, 128
  %748 = vxpose.xlu0.b32.cont [14/16] 0.0, 128
  %749 = vxpose.xlu0.b32.cont [15/16] 0.0, 128
  %750 = vxpose.xlu0.b32.end [16/16] 0.0, 128
  %v751 = vpop.trf.xlu0
  %v752 = vpop.trf.xlu0
  %v753 = vpop.trf.xlu0
  %v754 = vpop.trf.xlu0
  %v755 = vpop.trf.xlu0
  %v756 = vpop.trf.xlu0
  %v757 = vpop.trf.xlu0
  %v758 = vpop.trf.xlu0
  %v759 = vpop.trf.xlu0
  %v760 = vpop.trf.xlu0
  %v761 = vpop.trf.xlu0
  %v762 = vpop.trf.xlu0
  %v763 = vpop.trf.xlu0
  %v764 = vpop.trf.xlu0
  %v765 = vpop.trf.xlu0
  %v766 = vpop.trf.xlu0
  %767 = vxpose.xlu0.b32.start [1/16] %v564, 128
  %768 = vxpose.xlu0.b32.cont [2/16] %v566, 128
  %769 = vxpose.xlu0.b32.cont [3/16] 0.0, 128
  %770 = vxpose.xlu0.b32.cont [4/16] 0.0, 128
  %771 = vxpose.xlu0.b32.cont [5/16] 0.0, 128
  %772 = vxpose.xlu0.b32.cont [6/16] 0.0, 128
  %773 = vxpose.xlu0.b32.cont [7/16] 0.0, 128
  %774 = vxpose.xlu0.b32.cont [8/16] 0.0, 128
  %775 = vxpose.xlu0.b32.cont [9/16] 0.0, 128
  %776 = vxpose.xlu0.b32.cont [10/16] 0.0, 128
  %777 = vxpose.xlu0.b32.cont [11/16] 0.0, 128
  %778 = vxpose.xlu0.b32.cont [12/16] 0.0, 128
  %779 = vxpose.xlu0.b32.cont [13/16] 0.0, 128
  %780 = vxpose.xlu0.b32.cont [14/16] 0.0, 128
  %781 = vxpose.xlu0.b32.cont [15/16] 0.0, 128
  %782 = vxpose.xlu0.b32.end [16/16] 0.0, 128
  %v783 = vpop.trf.xlu0
  %v784 = vpop.trf.xlu0
  %v785 = vpop.trf.xlu0
  %v786 = vpop.trf.xlu0
  %v787 = vpop.trf.xlu0
  %v788 = vpop.trf.xlu0
  %v789 = vpop.trf.xlu0
  %v790 = vpop.trf.xlu0
  %v791 = vpop.trf.xlu0
  %v792 = vpop.trf.xlu0
  %v793 = vpop.trf.xlu0
  %v794 = vpop.trf.xlu0
  %v795 = vpop.trf.xlu0
  %v796 = vpop.trf.xlu0
  %v797 = vpop.trf.xlu0
  %v798 = vpop.trf.xlu0
  %799 = vxpose.xlu0.b32.start [1/16] %v568, 128
  %800 = vxpose.xlu0.b32.cont [2/16] %v570, 128
  %801 = vxpose.xlu0.b32.cont [3/16] 0.0, 128
  %802 = vxpose.xlu0.b32.cont [4/16] 0.0, 128
  %803 = vxpose.xlu0.b32.cont [5/16] 0.0, 128
  %804 = vxpose.xlu0.b32.cont [6/16] 0.0, 128
  %805 = vxpose.xlu0.b32.cont [7/16] 0.0, 128
  %806 = vxpose.xlu0.b32.cont [8/16] 0.0, 128
  %807 = vxpose.xlu0.b32.cont [9/16] 0.0, 128
  %808 = vxpose.xlu0.b32.cont [10/16] 0.0, 128
  %809 = vxpose.xlu0.b32.cont [11/16] 0.0, 128
  %810 = vxpose.xlu0.b32.cont [12/16] 0.0, 128
  %811 = vxpose.xlu0.b32.cont [13/16] 0.0, 128
  %812 = vxpose.xlu0.b32.cont [14/16] 0.0, 128
  %813 = vxpose.xlu0.b32.cont [15/16] 0.0, 128
  %814 = vxpose.xlu0.b32.end [16/16] 0.0, 128
  %v815 = vpop.trf.xlu0
  %v816 = vpop.trf.xlu0
  %v817 = vpop.trf.xlu0
  %v818 = vpop.trf.xlu0
  %v819 = vpop.trf.xlu0
  %v820 = vpop.trf.xlu0
  %v821 = vpop.trf.xlu0
  %v822 = vpop.trf.xlu0
  %v823 = vpop.trf.xlu0
  %v824 = vpop.trf.xlu0
  %v825 = vpop.trf.xlu0
  %v826 = vpop.trf.xlu0
  %v827 = vpop.trf.xlu0
  %v828 = vpop.trf.xlu0
  %v829 = vpop.trf.xlu0
  %v830 = vpop.trf.xlu0
  %831 = vxpose.xlu0.b32.start [1/16] %v572, 128
  %832 = vxpose.xlu0.b32.cont [2/16] %v574, 128
  %833 = vxpose.xlu0.b32.cont [3/16] 0.0, 128
  %834 = vxpose.xlu0.b32.cont [4/16] 0.0, 128
  %835 = vxpose.xlu0.b32.cont [5/16] 0.0, 128
  %836 = vxpose.xlu0.b32.cont [6/16] 0.0, 128
  %837 = vxpose.xlu0.b32.cont [7/16] 0.0, 128
  %838 = vxpose.xlu0.b32.cont [8/16] 0.0, 128
  %839 = vxpose.xlu0.b32.cont [9/16] 0.0, 128
  %840 = vxpose.xlu0.b32.cont [10/16] 0.0, 128
  %841 = vxpose.xlu0.b32.cont [11/16] 0.0, 128
  %842 = vxpose.xlu0.b32.cont [12/16] 0.0, 128
  %843 = vxpose.xlu0.b32.cont [13/16] 0.0, 128
  %844 = vxpose.xlu0.b32.cont [14/16] 0.0, 128
  %845 = vxpose.xlu0.b32.cont [15/16] 0.0, 128
  %846 = vxpose.xlu0.b32.end [16/16] 0.0, 128
  %v847 = vpop.trf.xlu0
  %v848 = vpop.trf.xlu0
  %v849 = vpop.trf.xlu0
  %v850 = vpop.trf.xlu0
  %v851 = vpop.trf.xlu0
  %v852 = vpop.trf.xlu0
  %v853 = vpop.trf.xlu0
  %v854 = vpop.trf.xlu0
  %v855 = vpop.trf.xlu0
  %v856 = vpop.trf.xlu0
  %v857 = vpop.trf.xlu0
  %v858 = vpop.trf.xlu0
  %v859 = vpop.trf.xlu0
  %v860 = vpop.trf.xlu0
  %v861 = vpop.trf.xlu0
  %v862 = vpop.trf.xlu0
  %863 = vxpose.xlu0.b32.start [1/16] %v576, 128
  %864 = vxpose.xlu0.b32.cont [2/16] %v578, 128
  %865 = vxpose.xlu0.b32.cont [3/16] 0.0, 128
  %866 = vxpose.xlu0.b32.cont [4/16] 0.0, 128
  %867 = vxpose.xlu0.b32.cont [5/16] 0.0, 128
  %868 = vxpose.xlu0.b32.cont [6/16] 0.0, 128
  %869 = vxpose.xlu0.b32.cont [7/16] 0.0, 128
  %870 = vxpose.xlu0.b32.cont [8/16] 0.0, 128
  %871 = vxpose.xlu0.b32.cont [9/16] 0.0, 128
  %872 = vxpose.xlu0.b32.cont [10/16] 0.0, 128
  %873 = vxpose.xlu0.b32.cont [11/16] 0.0, 128
  %874 = vxpose.xlu0.b32.cont [12/16] 0.0, 128
  %875 = vxpose.xlu0.b32.cont [13/16] 0.0, 128
  %876 = vxpose.xlu0.b32.cont [14/16] 0.0, 128
  %877 = vxpose.xlu0.b32.cont [15/16] 0.0, 128
  %878 = vxpose.xlu0.b32.end [16/16] 0.0, 128
  %v879 = vpop.trf.xlu0
  %v880 = vpop.trf.xlu0
  %v881 = vpop.trf.xlu0
  %v882 = vpop.trf.xlu0
  %v883 = vpop.trf.xlu0
  %v884 = vpop.trf.xlu0
  %v885 = vpop.trf.xlu0
  %v886 = vpop.trf.xlu0
  %v887 = vpop.trf.xlu0
  %v888 = vpop.trf.xlu0
  %v889 = vpop.trf.xlu0
  %v890 = vpop.trf.xlu0
  %v891 = vpop.trf.xlu0
  %v892 = vpop.trf.xlu0
  %v893 = vpop.trf.xlu0
  %v894 = vpop.trf.xlu0
  %895 = vxpose.xlu0.b32.start [1/16] %v580, 128
  %896 = vxpose.xlu0.b32.cont [2/16] %v582, 128
  %897 = vxpose.xlu0.b32.cont [3/16] 0.0, 128
  %898 = vxpose.xlu0.b32.cont [4/16] 0.0, 128
  %899 = vxpose.xlu0.b32.cont [5/16] 0.0, 128
  %900 = vxpose.xlu0.b32.cont [6/16] 0.0, 128
  %901 = vxpose.xlu0.b32.cont [7/16] 0.0, 128
  %902 = vxpose.xlu0.b32.cont [8/16] 0.0, 128
  %903 = vxpose.xlu0.b32.cont [9/16] 0.0, 128
  %904 = vxpose.xlu0.b32.cont [10/16] 0.0, 128
  %905 = vxpose.xlu0.b32.cont [11/16] 0.0, 128
  %906 = vxpose.xlu0.b32.cont [12/16] 0.0, 128
  %907 = vxpose.xlu0.b32.cont [13/16] 0.0, 128
  %908 = vxpose.xlu0.b32.cont [14/16] 0.0, 128
  %909 = vxpose.xlu0.b32.cont [15/16] 0.0, 128
  %910 = vxpose.xlu0.b32.end [16/16] 0.0, 128
  %v911 = vpop.trf.xlu0
  %v912 = vpop.trf.xlu0
  %v913 = vpop.trf.xlu0
  %v914 = vpop.trf.xlu0
  %v915 = vpop.trf.xlu0
  %v916 = vpop.trf.xlu0
  %v917 = vpop.trf.xlu0
  %v918 = vpop.trf.xlu0
  %v919 = vpop.trf.xlu0
  %v920 = vpop.trf.xlu0
  %v921 = vpop.trf.xlu0
  %v922 = vpop.trf.xlu0
  %v923 = vpop.trf.xlu0
  %v924 = vpop.trf.xlu0
  %v925 = vpop.trf.xlu0
  %v926 = vpop.trf.xlu0
  %927 = vxpose.xlu0.b32.start [1/16] %v584, 128
  %928 = vxpose.xlu0.b32.cont [2/16] %v586, 128
  %929 = vxpose.xlu0.b32.cont [3/16] 0.0, 128
  %930 = vxpose.xlu0.b32.cont [4/16] 0.0, 128
  %931 = vxpose.xlu0.b32.cont [5/16] 0.0, 128
  %932 = vxpose.xlu0.b32.cont [6/16] 0.0, 128
  %933 = vxpose.xlu0.b32.cont [7/16] 0.0, 128
  %934 = vxpose.xlu0.b32.cont [8/16] 0.0, 128
  %935 = vxpose.xlu0.b32.cont [9/16] 0.0, 128
  %936 = vxpose.xlu0.b32.cont [10/16] 0.0, 128
  %937 = vxpose.xlu0.b32.cont [11/16] 0.0, 128
  %938 = vxpose.xlu0.b32.cont [12/16] 0.0, 128
  %939 = vxpose.xlu0.b32.cont [13/16] 0.0, 128
  %940 = vxpose.xlu0.b32.cont [14/16] 0.0, 128
  %941 = vxpose.xlu0.b32.cont [15/16] 0.0, 128
  %942 = vxpose.xlu0.b32.end [16/16] 0.0, 128
  %v943 = vpop.trf.xlu0
  %v944 = vpop.trf.xlu0
  %v945 = vpop.trf.xlu0
  %v946 = vpop.trf.xlu0
  %v947 = vpop.trf.xlu0
  %v948 = vpop.trf.xlu0
  %v949 = vpop.trf.xlu0
  %v950 = vpop.trf.xlu0
  %v951 = vpop.trf.xlu0
  %v952 = vpop.trf.xlu0
  %v953 = vpop.trf.xlu0
  %v954 = vpop.trf.xlu0
  %v955 = vpop.trf.xlu0
  %v956 = vpop.trf.xlu0
  %v957 = vpop.trf.xlu0
  %v958 = vpop.trf.xlu0
  %959 = vxpose.xlu0.b32.start [1/16] %v588, 128
  %960 = vxpose.xlu0.b32.cont [2/16] %v590, 128
  %961 = vxpose.xlu0.b32.cont [3/16] 0.0, 128
  %962 = vxpose.xlu0.b32.cont [4/16] 0.0, 128
  %963 = vxpose.xlu0.b32.cont [5/16] 0.0, 128
  %964 = vxpose.xlu0.b32.cont [6/16] 0.0, 128
  %965 = vxpose.xlu0.b32.cont [7/16] 0.0, 128
  %966 = vxpose.xlu0.b32.cont [8/16] 0.0, 128
  %967 = vxpose.xlu0.b32.cont [9/16] 0.0, 128
  %968 = vxpose.xlu0.b32.cont [10/16] 0.0, 128
  %969 = vxpose.xlu0.b32.cont [11/16] 0.0, 128
  %970 = vxpose.xlu0.b32.cont [12/16] 0.0, 128
  %971 = vxpose.xlu0.b32.cont [13/16] 0.0, 128
  %972 = vxpose.xlu0.b32.cont [14/16] 0.0, 128
  %973 = vxpose.xlu0.b32.cont [15/16] 0.0, 128
  %974 = vxpose.xlu0.b32.end [16/16] 0.0, 128
  %v975 = vpop.trf.xlu0
  %v976 = vpop.trf.xlu0
  %v977 = vpop.trf.xlu0
  %v978 = vpop.trf.xlu0
  %v979 = vpop.trf.xlu0
  %v980 = vpop.trf.xlu0
  %v981 = vpop.trf.xlu0
  %v982 = vpop.trf.xlu0
  %v983 = vpop.trf.xlu0
  %v984 = vpop.trf.xlu0
  %v985 = vpop.trf.xlu0
  %v986 = vpop.trf.xlu0
  %v987 = vpop.trf.xlu0
  %v988 = vpop.trf.xlu0
  %v989 = vpop.trf.xlu0
  %v990 = vpop.trf.xlu0
  %991 = vxpose.xlu0.b32.start [1/16] %v592, 128
  %992 = vxpose.xlu0.b32.cont [2/16] %v594, 128
  %993 = vxpose.xlu0.b32.cont [3/16] 0.0, 128
  %994 = vxpose.xlu0.b32.cont [4/16] 0.0, 128
  %995 = vxpose.xlu0.b32.cont [5/16] 0.0, 128
  %996 = vxpose.xlu0.b32.cont [6/16] 0.0, 128
  %997 = vxpose.xlu0.b32.cont [7/16] 0.0, 128
  %998 = vxpose.xlu0.b32.cont [8/16] 0.0, 128
  %999 = vxpose.xlu0.b32.cont [9/16] 0.0, 128
  %1000 = vxpose.xlu0.b32.cont [10/16] 0.0, 128
  %1001 = vxpose.xlu0.b32.cont [11/16] 0.0, 128
  %1002 = vxpose.xlu0.b32.cont [12/16] 0.0, 128
  %1003 = vxpose.xlu0.b32.cont [13/16] 0.0, 128
  %1004 = vxpose.xlu0.b32.cont [14/16] 0.0, 128
  %1005 = vxpose.xlu0.b32.cont [15/16] 0.0, 128
  %1006 = vxpose.xlu0.b32.end [16/16] 0.0, 128
  %v1007 = vpop.trf.xlu0
  %v1008 = vpop.trf.xlu0
  %v1009 = vpop.trf.xlu0
  %v1010 = vpop.trf.xlu0
  %v1011 = vpop.trf.xlu0
  %v1012 = vpop.trf.xlu0
  %v1013 = vpop.trf.xlu0
  %v1014 = vpop.trf.xlu0
  %v1015 = vpop.trf.xlu0
  %v1016 = vpop.trf.xlu0
  %v1017 = vpop.trf.xlu0
  %v1018 = vpop.trf.xlu0
  %v1019 = vpop.trf.xlu0
  %v1020 = vpop.trf.xlu0
  %v1021 = vpop.trf.xlu0
  %v1022 = vpop.trf.xlu0
  %1023 = vxpose.xlu0.b32.start [1/16] %v596, 128
  %1024 = vxpose.xlu0.b32.cont [2/16] %v598, 128
  %1025 = vxpose.xlu0.b32.cont [3/16] 0.0, 128
  %1026 = vxpose.xlu0.b32.cont [4/16] 0.0, 128
  %1027 = vxpose.xlu0.b32.cont [5/16] 0.0, 128
  %1028 = vxpose.xlu0.b32.cont [6/16] 0.0, 128
  %1029 = vxpose.xlu0.b32.cont [7/16] 0.0, 128
  %1030 = vxpose.xlu0.b32.cont [8/16] 0.0, 128
  %1031 = vxpose.xlu0.b32.cont [9/16] 0.0, 128
  %1032 = vxpose.xlu0.b32.cont [10/16] 0.0, 128
  %1033 = vxpose.xlu0.b32.cont [11/16] 0.0, 128
  %1034 = vxpose.xlu0.b32.cont [12/16] 0.0, 128
  %1035 = vxpose.xlu0.b32.cont [13/16] 0.0, 128
  %1036 = vxpose.xlu0.b32.cont [14/16] 0.0, 128
  %1037 = vxpose.xlu0.b32.cont [15/16] 0.0, 128
  %1038 = vxpose.xlu0.b32.end [16/16] 0.0, 128
  %v1039 = vpop.trf.xlu0
  %v1040 = vpop.trf.xlu0
  %v1041 = vpop.trf.xlu0
  %v1042 = vpop.trf.xlu0
  %v1043 = vpop.trf.xlu0
  %v1044 = vpop.trf.xlu0
  %v1045 = vpop.trf.xlu0
  %v1046 = vpop.trf.xlu0
  %v1047 = vpop.trf.xlu0
  %v1048 = vpop.trf.xlu0
  %v1049 = vpop.trf.xlu0
  %v1050 = vpop.trf.xlu0
  %v1051 = vpop.trf.xlu0
  %v1052 = vpop.trf.xlu0
  %v1053 = vpop.trf.xlu0
  %v1054 = vpop.trf.xlu0
  %1055 = vxpose.xlu0.b32.start [1/16] %v600, 128
  %1056 = vxpose.xlu0.b32.cont [2/16] %v602, 128
  %1057 = vxpose.xlu0.b32.cont [3/16] 0.0, 128
  %1058 = vxpose.xlu0.b32.cont [4/16] 0.0, 128
  %1059 = vxpose.xlu0.b32.cont [5/16] 0.0, 128
  %1060 = vxpose.xlu0.b32.cont [6/16] 0.0, 128
  %1061 = vxpose.xlu0.b32.cont [7/16] 0.0, 128
  %1062 = vxpose.xlu0.b32.cont [8/16] 0.0, 128
  %1063 = vxpose.xlu0.b32.cont [9/16] 0.0, 128
  %1064 = vxpose.xlu0.b32.cont [10/16] 0.0, 128
  %1065 = vxpose.xlu0.b32.cont [11/16] 0.0, 128
  %1066 = vxpose.xlu0.b32.cont [12/16] 0.0, 128
  %1067 = vxpose.xlu0.b32.cont [13/16] 0.0, 128
  %1068 = vxpose.xlu0.b32.cont [14/16] 0.0, 128
  %1069 = vxpose.xlu0.b32.cont [15/16] 0.0, 128
  %1070 = vxpose.xlu0.b32.end [16/16] 0.0, 128
  %v1071 = vpop.trf.xlu0
  %v1072 = vpop.trf.xlu0
  %v1073 = vpop.trf.xlu0
  %v1074 = vpop.trf.xlu0
  %v1075 = vpop.trf.xlu0
  %v1076 = vpop.trf.xlu0
  %v1077 = vpop.trf.xlu0
  %v1078 = vpop.trf.xlu0
  %v1079 = vpop.trf.xlu0
  %v1080 = vpop.trf.xlu0
  %v1081 = vpop.trf.xlu0
  %v1082 = vpop.trf.xlu0
  %v1083 = vpop.trf.xlu0
  %v1084 = vpop.trf.xlu0
  %v1085 = vpop.trf.xlu0
  %v1086 = vpop.trf.xlu0
  %1087 = vxpose.xlu0.b32.start [1/16] %v604, 128
  %1088 = vxpose.xlu0.b32.cont [2/16] %v606, 128
  %1089 = vxpose.xlu0.b32.cont [3/16] 0.0, 128
  %1090 = vxpose.xlu0.b32.cont [4/16] 0.0, 128
  %1091 = vxpose.xlu0.b32.cont [5/16] 0.0, 128
  %1092 = vxpose.xlu0.b32.cont [6/16] 0.0, 128
  %1093 = vxpose.xlu0.b32.cont [7/16] 0.0, 128
  %1094 = vxpose.xlu0.b32.cont [8/16] 0.0, 128
  %1095 = vxpose.xlu0.b32.cont [9/16] 0.0, 128
  %1096 = vxpose.xlu0.b32.cont [10/16] 0.0, 128
  %1097 = vxpose.xlu0.b32.cont [11/16] 0.0, 128
  %1098 = vxpose.xlu0.b32.cont [12/16] 0.0, 128
  %1099 = vxpose.xlu0.b32.cont [13/16] 0.0, 128
  %1100 = vxpose.xlu0.b32.cont [14/16] 0.0, 128
  %1101 = vxpose.xlu0.b32.cont [15/16] 0.0, 128
  %1102 = vxpose.xlu0.b32.end [16/16] 0.0, 128
  %v1103 = vpop.trf.xlu0
  %v1104 = vpop.trf.xlu0
  %v1105 = vpop.trf.xlu0
  %v1106 = vpop.trf.xlu0
  %v1107 = vpop.trf.xlu0
  %v1108 = vpop.trf.xlu0
  %v1109 = vpop.trf.xlu0
  %v1110 = vpop.trf.xlu0
  %v1111 = vpop.trf.xlu0
  %v1112 = vpop.trf.xlu0
  %v1113 = vpop.trf.xlu0
  %v1114 = vpop.trf.xlu0
  %v1115 = vpop.trf.xlu0
  %v1116 = vpop.trf.xlu0
  %v1117 = vpop.trf.xlu0
  %v1118 = vpop.trf.xlu0
  %1119 = vxpose.xlu0.b32.start [1/16] %v608, 128
  %1120 = vxpose.xlu0.b32.cont [2/16] %v610, 128
  %1121 = vxpose.xlu0.b32.cont [3/16] 0.0, 128
  %1122 = vxpose.xlu0.b32.cont [4/16] 0.0, 128
  %1123 = vxpose.xlu0.b32.cont [5/16] 0.0, 128
  %1124 = vxpose.xlu0.b32.cont [6/16] 0.0, 128
  %1125 = vxpose.xlu0.b32.cont [7/16] 0.0, 128
  %1126 = vxpose.xlu0.b32.cont [8/16] 0.0, 128
  %1127 = vxpose.xlu0.b32.cont [9/16] 0.0, 128
  %1128 = vxpose.xlu0.b32.cont [10/16] 0.0, 128
  %1129 = vxpose.xlu0.b32.cont [11/16] 0.0, 128
  %1130 = vxpose.xlu0.b32.cont [12/16] 0.0, 128
  %1131 = vxpose.xlu0.b32.cont [13/16] 0.0, 128
  %1132 = vxpose.xlu0.b32.cont [14/16] 0.0, 128
  %1133 = vxpose.xlu0.b32.cont [15/16] 0.0, 128
  %1134 = vxpose.xlu0.b32.end [16/16] 0.0, 128
  %v1135 = vpop.trf.xlu0
  %v1136 = vpop.trf.xlu0
  %v1137 = vpop.trf.xlu0
  %v1138 = vpop.trf.xlu0
  %v1139 = vpop.trf.xlu0
  %v1140 = vpop.trf.xlu0
  %v1141 = vpop.trf.xlu0
  %v1142 = vpop.trf.xlu0
  %v1143 = vpop.trf.xlu0
  %v1144 = vpop.trf.xlu0
  %v1145 = vpop.trf.xlu0
  %v1146 = vpop.trf.xlu0
  %v1147 = vpop.trf.xlu0
  %v1148 = vpop.trf.xlu0
  %v1149 = vpop.trf.xlu0
  %v1150 = vpop.trf.xlu0
  %1151 = vxpose.xlu0.b32.start [1/16] %v612, 128
  %1152 = vxpose.xlu0.b32.cont [2/16] %v614, 128
  %1153 = vxpose.xlu0.b32.cont [3/16] 0.0, 128
  %1154 = vxpose.xlu0.b32.cont [4/16] 0.0, 128
  %1155 = vxpose.xlu0.b32.cont [5/16] 0.0, 128
  %1156 = vxpose.xlu0.b32.cont [6/16] 0.0, 128
  %1157 = vxpose.xlu0.b32.cont [7/16] 0.0, 128
  %1158 = vxpose.xlu0.b32.cont [8/16] 0.0, 128
  %1159 = vxpose.xlu0.b32.cont [9/16] 0.0, 128
  %1160 = vxpose.xlu0.b32.cont [10/16] 0.0, 128
  %1161 = vxpose.xlu0.b32.cont [11/16] 0.0, 128
  %1162 = vxpose.xlu0.b32.cont [12/16] 0.0, 128
  %1163 = vxpose.xlu0.b32.cont [13/16] 0.0, 128
  %1164 = vxpose.xlu0.b32.cont [14/16] 0.0, 128
  %1165 = vxpose.xlu0.b32.cont [15/16] 0.0, 128
  %1166 = vxpose.xlu0.b32.end [16/16] 0.0, 128
  %v1167 = vpop.trf.xlu0
  %v1168 = vpop.trf.xlu0
  %v1169 = vpop.trf.xlu0
  %v1170 = vpop.trf.xlu0
  %v1171 = vpop.trf.xlu0
  %v1172 = vpop.trf.xlu0
  %v1173 = vpop.trf.xlu0
  %v1174 = vpop.trf.xlu0
  %v1175 = vpop.trf.xlu0
  %v1176 = vpop.trf.xlu0
  %v1177 = vpop.trf.xlu0
  %v1178 = vpop.trf.xlu0
  %v1179 = vpop.trf.xlu0
  %v1180 = vpop.trf.xlu0
  %v1181 = vpop.trf.xlu0
  %v1182 = vpop.trf.xlu0
  %1183 = vxpose.xlu0.b32.start [1/16] %v616, 128
  %1184 = vxpose.xlu0.b32.cont [2/16] %v618, 128
  %1185 = vxpose.xlu0.b32.cont [3/16] 0.0, 128
  %1186 = vxpose.xlu0.b32.cont [4/16] 0.0, 128
  %1187 = vxpose.xlu0.b32.cont [5/16] 0.0, 128
  %1188 = vxpose.xlu0.b32.cont [6/16] 0.0, 128
  %1189 = vxpose.xlu0.b32.cont [7/16] 0.0, 128
  %1190 = vxpose.xlu0.b32.cont [8/16] 0.0, 128
  %1191 = vxpose.xlu0.b32.cont [9/16] 0.0, 128
  %1192 = vxpose.xlu0.b32.cont [10/16] 0.0, 128
  %1193 = vxpose.xlu0.b32.cont [11/16] 0.0, 128
  %1194 = vxpose.xlu0.b32.cont [12/16] 0.0, 128
  %1195 = vxpose.xlu0.b32.cont [13/16] 0.0, 128
  %1196 = vxpose.xlu0.b32.cont [14/16] 0.0, 128
  %1197 = vxpose.xlu0.b32.cont [15/16] 0.0, 128
  %1198 = vxpose.xlu0.b32.end [16/16] 0.0, 128
  %v1199 = vpop.trf.xlu0
  %v1200 = vpop.trf.xlu0
  %v1201 = vpop.trf.xlu0
  %v1202 = vpop.trf.xlu0
  %v1203 = vpop.trf.xlu0
  %v1204 = vpop.trf.xlu0
  %v1205 = vpop.trf.xlu0
  %v1206 = vpop.trf.xlu0
  %v1207 = vpop.trf.xlu0
  %v1208 = vpop.trf.xlu0
  %v1209 = vpop.trf.xlu0
  %v1210 = vpop.trf.xlu0
  %v1211 = vpop.trf.xlu0
  %v1212 = vpop.trf.xlu0
  %v1213 = vpop.trf.xlu0
  %v1214 = vpop.trf.xlu0
  %1215 = vxpose.xlu0.b32.start [1/16] %v620, 128
  %1216 = vxpose.xlu0.b32.cont [2/16] %v622, 128
  %1217 = vxpose.xlu0.b32.cont [3/16] 0.0, 128
  %1218 = vxpose.xlu0.b32.cont [4/16] 0.0, 128
  %1219 = vxpose.xlu0.b32.cont [5/16] 0.0, 128
  %1220 = vxpose.xlu0.b32.cont [6/16] 0.0, 128
  %1221 = vxpose.xlu0.b32.cont [7/16] 0.0, 128
  %1222 = vxpose.xlu0.b32.cont [8/16] 0.0, 128
  %1223 = vxpose.xlu0.b32.cont [9/16] 0.0, 128
  %1224 = vxpose.xlu0.b32.cont [10/16] 0.0, 128
  %1225 = vxpose.xlu0.b32.cont [11/16] 0.0, 128
  %1226 = vxpose.xlu0.b32.cont [12/16] 0.0, 128
  %1227 = vxpose.xlu0.b32.cont [13/16] 0.0, 128
  %1228 = vxpose.xlu0.b32.cont [14/16] 0.0, 128
  %1229 = vxpose.xlu0.b32.cont [15/16] 0.0, 128
  %1230 = vxpose.xlu0.b32.end [16/16] 0.0, 128
  %v1231 = vpop.trf.xlu0
  %v1232 = vpop.trf.xlu0
  %v1233 = vpop.trf.xlu0
  %v1234 = vpop.trf.xlu0
  %v1235 = vpop.trf.xlu0
  %v1236 = vpop.trf.xlu0
  %v1237 = vpop.trf.xlu0
  %v1238 = vpop.trf.xlu0
  %v1239 = vpop.trf.xlu0
  %v1240 = vpop.trf.xlu0
  %v1241 = vpop.trf.xlu0
  %v1242 = vpop.trf.xlu0
  %v1243 = vpop.trf.xlu0
  %v1244 = vpop.trf.xlu0
  %v1245 = vpop.trf.xlu0
  %v1246 = vpop.trf.xlu0
  %1247 = vxpose.xlu0.b32.start [1/16] %v624, 128
  %1248 = vxpose.xlu0.b32.cont [2/16] %v626, 128
  %1249 = vxpose.xlu0.b32.cont [3/16] 0.0, 128
  %1250 = vxpose.xlu0.b32.cont [4/16] 0.0, 128
  %1251 = vxpose.xlu0.b32.cont [5/16] 0.0, 128
  %1252 = vxpose.xlu0.b32.cont [6/16] 0.0, 128
  %1253 = vxpose.xlu0.b32.cont [7/16] 0.0, 128
  %1254 = vxpose.xlu0.b32.cont [8/16] 0.0, 128
  %1255 = vxpose.xlu0.b32.cont [9/16] 0.0, 128
  %1256 = vxpose.xlu0.b32.cont [10/16] 0.0, 128
  %1257 = vxpose.xlu0.b32.cont [11/16] 0.0, 128
  %1258 = vxpose.xlu0.b32.cont [12/16] 0.0, 128
  %1259 = vxpose.xlu0.b32.cont [13/16] 0.0, 128
  %1260 = vxpose.xlu0.b32.cont [14/16] 0.0, 128
  %1261 = vxpose.xlu0.b32.cont [15/16] 0.0, 128
  %1262 = vxpose.xlu0.b32.end [16/16] 0.0, 128
  %v1263 = vpop.trf.xlu0
  %v1264 = vpop.trf.xlu0
  %v1265 = vpop.trf.xlu0
  %v1266 = vpop.trf.xlu0
  %v1267 = vpop.trf.xlu0
  %v1268 = vpop.trf.xlu0
  %v1269 = vpop.trf.xlu0
  %v1270 = vpop.trf.xlu0
  %v1271 = vpop.trf.xlu0
  %v1272 = vpop.trf.xlu0
  %v1273 = vpop.trf.xlu0
  %v1274 = vpop.trf.xlu0
  %v1275 = vpop.trf.xlu0
  %v1276 = vpop.trf.xlu0
  %v1277 = vpop.trf.xlu0
  %v1278 = vpop.trf.xlu0
  %1279 = vxpose.xlu0.b32.start [1/16] %v628, 128
  %1280 = vxpose.xlu0.b32.cont [2/16] %v630, 128
  %1281 = vxpose.xlu0.b32.cont [3/16] 0.0, 128
  %1282 = vxpose.xlu0.b32.cont [4/16] 0.0, 128
  %1283 = vxpose.xlu0.b32.cont [5/16] 0.0, 128
  %1284 = vxpose.xlu0.b32.cont [6/16] 0.0, 128
  %1285 = vxpose.xlu0.b32.cont [7/16] 0.0, 128
  %1286 = vxpose.xlu0.b32.cont [8/16] 0.0, 128
  %1287 = vxpose.xlu0.b32.cont [9/16] 0.0, 128
  %1288 = vxpose.xlu0.b32.cont [10/16] 0.0, 128
  %1289 = vxpose.xlu0.b32.cont [11/16] 0.0, 128
  %1290 = vxpose.xlu0.b32.cont [12/16] 0.0, 128
  %1291 = vxpose.xlu0.b32.cont [13/16] 0.0, 128
  %1292 = vxpose.xlu0.b32.cont [14/16] 0.0, 128
  %1293 = vxpose.xlu0.b32.cont [15/16] 0.0, 128
  %1294 = vxpose.xlu0.b32.end [16/16] 0.0, 128
  %v1295 = vpop.trf.xlu0
  %v1296 = vpop.trf.xlu0
  %v1297 = vpop.trf.xlu0
  %v1298 = vpop.trf.xlu0
  %v1299 = vpop.trf.xlu0
  %v1300 = vpop.trf.xlu0
  %v1301 = vpop.trf.xlu0
  %v1302 = vpop.trf.xlu0
  %v1303 = vpop.trf.xlu0
  %v1304 = vpop.trf.xlu0
  %v1305 = vpop.trf.xlu0
  %v1306 = vpop.trf.xlu0
  %v1307 = vpop.trf.xlu0
  %v1308 = vpop.trf.xlu0
  %v1309 = vpop.trf.xlu0
  %v1310 = vpop.trf.xlu0
  %1351 = vrot.lane.b32.xlu0 %v261, 120
  %v1352 = vpop.permute.xlu0 %1351
  %1353 = vrot.lane.b32.xlu0 %v266, 120
  %v1354 = vpop.permute.xlu0 %1353
  %1355 = vrot.lane.b32.xlu0 %v271, 120
  %v1356 = vpop.permute.xlu0 %1355
  %1357 = vrot.lane.b32.xlu0 %v276, 120
  %v1358 = vpop.permute.xlu0 %1357
  %1359 = vrot.lane.b32.xlu0 %v281, 120
  %v1360 = vpop.permute.xlu0 %1359
  %1361 = vrot.lane.b32.xlu0 %v286, 120
  %v1362 = vpop.permute.xlu0 %1361
  %1363 = vrot.lane.b32.xlu0 %v291, 120
  %v1364 = vpop.permute.xlu0 %1363
  %1365 = vrot.lane.b32.xlu0 %v296, 120
  %v1366 = vpop.permute.xlu0 %1365
  %1367 = vrot.lane.b32.xlu0 %v301, 120
  %v1368 = vpop.permute.xlu0 %1367
  %1369 = vrot.lane.b32.xlu0 %v306, 120
  %v1370 = vpop.permute.xlu0 %1369
  %1371 = vrot.lane.b32.xlu0 %v311, 120
  %v1372 = vpop.permute.xlu0 %1371
  %1373 = vrot.lane.b32.xlu0 %v316, 120
  %v1374 = vpop.permute.xlu0 %1373
  %1375 = vrot.lane.b32.xlu0 %v321, 120
  %v1376 = vpop.permute.xlu0 %1375
  %1377 = vrot.lane.b32.xlu0 %v326, 120
  %v1378 = vpop.permute.xlu0 %1377
  %1379 = vrot.lane.b32.xlu0 %v331, 120
  %v1380 = vpop.permute.xlu0 %1379
  %1381 = vrot.lane.b32.xlu0 %v336, 120
  %v1382 = vpop.permute.xlu0 %1381
  %1383 = vrot.lane.b32.xlu0 %v341, 120
  %v1384 = vpop.permute.xlu0 %1383
  %1385 = vrot.lane.b32.xlu0 %v346, 120
  %v1386 = vpop.permute.xlu0 %1385
  %1387 = vrot.lane.b32.xlu0 %v351, 120
  %v1388 = vpop.permute.xlu0 %1387
  %1389 = vrot.lane.b32.xlu0 %v356, 120
  %v1390 = vpop.permute.xlu0 %1389
  %1391 = vrot.lane.b32.xlu0 %v361, 120
  %v1392 = vpop.permute.xlu0 %1391
  %1393 = vrot.lane.b32.xlu0 %v366, 120
  %v1394 = vpop.permute.xlu0 %1393
  %1395 = vrot.lane.b32.xlu0 %v371, 120
  %v1396 = vpop.permute.xlu0 %1395
  %1397 = vrot.lane.b32.xlu0 %v376, 120
  %v1398 = vpop.permute.xlu0 %1397
  %1399 = vrot.lane.b32.xlu0 %v381, 120
  %v1400 = vpop.permute.xlu0 %1399
  %1401 = vrot.lane.b32.xlu0 %v386, 120
  %v1402 = vpop.permute.xlu0 %1401
  %1403 = vrot.lane.b32.xlu0 %v391, 120
  %v1404 = vpop.permute.xlu0 %1403
  %1405 = vrot.lane.b32.xlu0 %v396, 120
  %v1406 = vpop.permute.xlu0 %1405
  %1407 = vrot.lane.b32.xlu0 %v401, 120
  %v1408 = vpop.permute.xlu0 %1407
  %1409 = vrot.lane.b32.xlu0 %v406, 120
  %v1410 = vpop.permute.xlu0 %1409
  %1411 = vrot.lane.b32.xlu0 %v411, 120
  %v1412 = vpop.permute.xlu0 %1411
  %1413 = vrot.lane.b32.xlu0 %v416, 120
  %v1414 = vpop.permute.xlu0 %1413
  %1415 = vrot.lane.b32.xlu0 %v421, 120
  %v1416 = vpop.permute.xlu0 %1415
  %1417 = vrot.lane.b32.xlu0 %v426, 120
  %v1418 = vpop.permute.xlu0 %1417
  %1419 = vrot.lane.b32.xlu0 %v431, 120
  %v1420 = vpop.permute.xlu0 %1419
  %1421 = vrot.lane.b32.xlu0 %v436, 120
  %v1422 = vpop.permute.xlu0 %1421
  %1423 = vrot.lane.b32.xlu0 %v441, 120
  %v1424 = vpop.permute.xlu0 %1423
  %1425 = vrot.lane.b32.xlu0 %v446, 120
  %v1426 = vpop.permute.xlu0 %1425
  %1427 = vrot.lane.b32.xlu0 %v451, 120
  %v1428 = vpop.permute.xlu0 %1427
  %1429 = vrot.lane.b32.xlu0 %v456, 120
  %v1430 = vpop.permute.xlu0 %1429
  %1471 = vxpose.xlu0.b32.start [1/16] %v1352, 128
  %1472 = vxpose.xlu0.b32.cont [2/16] %v1354, 128
  %1473 = vxpose.xlu0.b32.cont [3/16] 0.0, 128
  %1474 = vxpose.xlu0.b32.cont [4/16] 0.0, 128
  %1475 = vxpose.xlu0.b32.cont [5/16] 0.0, 128
  %1476 = vxpose.xlu0.b32.cont [6/16] 0.0, 128
  %1477 = vxpose.xlu0.b32.cont [7/16] 0.0, 128
  %1478 = vxpose.xlu0.b32.cont [8/16] 0.0, 128
  %1479 = vxpose.xlu0.b32.cont [9/16] 0.0, 128
  %1480 = vxpose.xlu0.b32.cont [10/16] 0.0, 128
  %1481 = vxpose.xlu0.b32.cont [11/16] 0.0, 128
  %1482 = vxpose.xlu0.b32.cont [12/16] 0.0, 128
  %1483 = vxpose.xlu0.b32.cont [13/16] 0.0, 128
  %1484 = vxpose.xlu0.b32.cont [14/16] 0.0, 128
  %1485 = vxpose.xlu0.b32.cont [15/16] 0.0, 128
  %1486 = vxpose.xlu0.b32.end [16/16] 0.0, 128
  %v1487 = vpop.trf.xlu0
  %v1488 = vpop.trf.xlu0
  %v1489 = vpop.trf.xlu0
  %v1490 = vpop.trf.xlu0
  %v1491 = vpop.trf.xlu0
  %v1492 = vpop.trf.xlu0
  %v1493 = vpop.trf.xlu0
  %v1494 = vpop.trf.xlu0
  %v1495 = vpop.trf.xlu0
  %v1496 = vpop.trf.xlu0
  %v1497 = vpop.trf.xlu0
  %v1498 = vpop.trf.xlu0
  %v1499 = vpop.trf.xlu0
  %v1500 = vpop.trf.xlu0
  %v1501 = vpop.trf.xlu0
  %v1502 = vpop.trf.xlu0
  %1503 = vxpose.xlu0.b32.start [1/16] %v1356, 128
  %1504 = vxpose.xlu0.b32.cont [2/16] %v1358, 128
  %1505 = vxpose.xlu0.b32.cont [3/16] 0.0, 128
  %1506 = vxpose.xlu0.b32.cont [4/16] 0.0, 128
  %1507 = vxpose.xlu0.b32.cont [5/16] 0.0, 128
  %1508 = vxpose.xlu0.b32.cont [6/16] 0.0, 128
  %1509 = vxpose.xlu0.b32.cont [7/16] 0.0, 128
  %1510 = vxpose.xlu0.b32.cont [8/16] 0.0, 128
  %1511 = vxpose.xlu0.b32.cont [9/16] 0.0, 128
  %1512 = vxpose.xlu0.b32.cont [10/16] 0.0, 128
  %1513 = vxpose.xlu0.b32.cont [11/16] 0.0, 128
  %1514 = vxpose.xlu0.b32.cont [12/16] 0.0, 128
  %1515 = vxpose.xlu0.b32.cont [13/16] 0.0, 128
  %1516 = vxpose.xlu0.b32.cont [14/16] 0.0, 128
  %1517 = vxpose.xlu0.b32.cont [15/16] 0.0, 128
  %1518 = vxpose.xlu0.b32.end [16/16] 0.0, 128
  %v1519 = vpop.trf.xlu0
  %v1520 = vpop.trf.xlu0
  %v1521 = vpop.trf.xlu0
  %v1522 = vpop.trf.xlu0
  %v1523 = vpop.trf.xlu0
  %v1524 = vpop.trf.xlu0
  %v1525 = vpop.trf.xlu0
  %v1526 = vpop.trf.xlu0
  %v1527 = vpop.trf.xlu0
  %v1528 = vpop.trf.xlu0
  %v1529 = vpop.trf.xlu0
  %v1530 = vpop.trf.xlu0
  %v1531 = vpop.trf.xlu0
  %v1532 = vpop.trf.xlu0
  %v1533 = vpop.trf.xlu0
  %v1534 = vpop.trf.xlu0
  %1535 = vxpose.xlu0.b32.start [1/16] %v1360, 128
  %1536 = vxpose.xlu0.b32.cont [2/16] %v1362, 128
  %1537 = vxpose.xlu0.b32.cont [3/16] 0.0, 128
  %1538 = vxpose.xlu0.b32.cont [4/16] 0.0, 128
  %1539 = vxpose.xlu0.b32.cont [5/16] 0.0, 128
  %1540 = vxpose.xlu0.b32.cont [6/16] 0.0, 128
  %1541 = vxpose.xlu0.b32.cont [7/16] 0.0, 128
  %1542 = vxpose.xlu0.b32.cont [8/16] 0.0, 128
  %1543 = vxpose.xlu0.b32.cont [9/16] 0.0, 128
  %1544 = vxpose.xlu0.b32.cont [10/16] 0.0, 128
  %1545 = vxpose.xlu0.b32.cont [11/16] 0.0, 128
  %1546 = vxpose.xlu0.b32.cont [12/16] 0.0, 128
  %1547 = vxpose.xlu0.b32.cont [13/16] 0.0, 128
  %1548 = vxpose.xlu0.b32.cont [14/16] 0.0, 128
  %1549 = vxpose.xlu0.b32.cont [15/16] 0.0, 128
  %1550 = vxpose.xlu0.b32.end [16/16] 0.0, 128
  %v1551 = vpop.trf.xlu0
  %v1552 = vpop.trf.xlu0
  %v1553 = vpop.trf.xlu0
  %v1554 = vpop.trf.xlu0
  %v1555 = vpop.trf.xlu0
  %v1556 = vpop.trf.xlu0
  %v1557 = vpop.trf.xlu0
  %v1558 = vpop.trf.xlu0
  %v1559 = vpop.trf.xlu0
  %v1560 = vpop.trf.xlu0
  %v1561 = vpop.trf.xlu0
  %v1562 = vpop.trf.xlu0
  %v1563 = vpop.trf.xlu0
  %v1564 = vpop.trf.xlu0
  %v1565 = vpop.trf.xlu0
  %v1566 = vpop.trf.xlu0
  %1567 = vxpose.xlu0.b32.start [1/16] %v1364, 128
  %1568 = vxpose.xlu0.b32.cont [2/16] %v1366, 128
  %1569 = vxpose.xlu0.b32.cont [3/16] 0.0, 128
  %1570 = vxpose.xlu0.b32.cont [4/16] 0.0, 128
  %1571 = vxpose.xlu0.b32.cont [5/16] 0.0, 128
  %1572 = vxpose.xlu0.b32.cont [6/16] 0.0, 128
  %1573 = vxpose.xlu0.b32.cont [7/16] 0.0, 128
  %1574 = vxpose.xlu0.b32.cont [8/16] 0.0, 128
  %1575 = vxpose.xlu0.b32.cont [9/16] 0.0, 128
  %1576 = vxpose.xlu0.b32.cont [10/16] 0.0, 128
  %1577 = vxpose.xlu0.b32.cont [11/16] 0.0, 128
  %1578 = vxpose.xlu0.b32.cont [12/16] 0.0, 128
  %1579 = vxpose.xlu0.b32.cont [13/16] 0.0, 128
  %1580 = vxpose.xlu0.b32.cont [14/16] 0.0, 128
  %1581 = vxpose.xlu0.b32.cont [15/16] 0.0, 128
  %1582 = vxpose.xlu0.b32.end [16/16] 0.0, 128
  %v1583 = vpop.trf.xlu0
  %v1584 = vpop.trf.xlu0
  %v1585 = vpop.trf.xlu0
  %v1586 = vpop.trf.xlu0
  %v1587 = vpop.trf.xlu0
  %v1588 = vpop.trf.xlu0
  %v1589 = vpop.trf.xlu0
  %v1590 = vpop.trf.xlu0
  %v1591 = vpop.trf.xlu0
  %v1592 = vpop.trf.xlu0
  %v1593 = vpop.trf.xlu0
  %v1594 = vpop.trf.xlu0
  %v1595 = vpop.trf.xlu0
  %v1596 = vpop.trf.xlu0
  %v1597 = vpop.trf.xlu0
  %v1598 = vpop.trf.xlu0
  %1599 = vxpose.xlu0.b32.start [1/16] %v1368, 128
  %1600 = vxpose.xlu0.b32.cont [2/16] %v1370, 128
  %1601 = vxpose.xlu0.b32.cont [3/16] 0.0, 128
  %1602 = vxpose.xlu0.b32.cont [4/16] 0.0, 128
  %1603 = vxpose.xlu0.b32.cont [5/16] 0.0, 128
  %1604 = vxpose.xlu0.b32.cont [6/16] 0.0, 128
  %1605 = vxpose.xlu0.b32.cont [7/16] 0.0, 128
  %1606 = vxpose.xlu0.b32.cont [8/16] 0.0, 128
  %1607 = vxpose.xlu0.b32.cont [9/16] 0.0, 128
  %1608 = vxpose.xlu0.b32.cont [10/16] 0.0, 128
  %1609 = vxpose.xlu0.b32.cont [11/16] 0.0, 128
  %1610 = vxpose.xlu0.b32.cont [12/16] 0.0, 128
  %1611 = vxpose.xlu0.b32.cont [13/16] 0.0, 128
  %1612 = vxpose.xlu0.b32.cont [14/16] 0.0, 128
  %1613 = vxpose.xlu0.b32.cont [15/16] 0.0, 128
  %1614 = vxpose.xlu0.b32.end [16/16] 0.0, 128
  %v1615 = vpop.trf.xlu0
  %v1616 = vpop.trf.xlu0
  %v1617 = vpop.trf.xlu0
  %v1618 = vpop.trf.xlu0
  %v1619 = vpop.trf.xlu0
  %v1620 = vpop.trf.xlu0
  %v1621 = vpop.trf.xlu0
  %v1622 = vpop.trf.xlu0
  %v1623 = vpop.trf.xlu0
  %v1624 = vpop.trf.xlu0
  %v1625 = vpop.trf.xlu0
  %v1626 = vpop.trf.xlu0
  %v1627 = vpop.trf.xlu0
  %v1628 = vpop.trf.xlu0
  %v1629 = vpop.trf.xlu0
  %v1630 = vpop.trf.xlu0
  %1631 = vxpose.xlu0.b32.start [1/16] %v1372, 128
  %1632 = vxpose.xlu0.b32.cont [2/16] %v1374, 128
  %1633 = vxpose.xlu0.b32.cont [3/16] 0.0, 128
  %1634 = vxpose.xlu0.b32.cont [4/16] 0.0, 128
  %1635 = vxpose.xlu0.b32.cont [5/16] 0.0, 128
  %1636 = vxpose.xlu0.b32.cont [6/16] 0.0, 128
  %1637 = vxpose.xlu0.b32.cont [7/16] 0.0, 128
  %1638 = vxpose.xlu0.b32.cont [8/16] 0.0, 128
  %1639 = vxpose.xlu0.b32.cont [9/16] 0.0, 128
  %1640 = vxpose.xlu0.b32.cont [10/16] 0.0, 128
  %1641 = vxpose.xlu0.b32.cont [11/16] 0.0, 128
  %1642 = vxpose.xlu0.b32.cont [12/16] 0.0, 128
  %1643 = vxpose.xlu0.b32.cont [13/16] 0.0, 128
  %1644 = vxpose.xlu0.b32.cont [14/16] 0.0, 128
  %1645 = vxpose.xlu0.b32.cont [15/16] 0.0, 128
  %1646 = vxpose.xlu0.b32.end [16/16] 0.0, 128
  %v1647 = vpop.trf.xlu0
  %v1648 = vpop.trf.xlu0
  %v1649 = vpop.trf.xlu0
  %v1650 = vpop.trf.xlu0
  %v1651 = vpop.trf.xlu0
  %v1652 = vpop.trf.xlu0
  %v1653 = vpop.trf.xlu0
  %v1654 = vpop.trf.xlu0
  %v1655 = vpop.trf.xlu0
  %v1656 = vpop.trf.xlu0
  %v1657 = vpop.trf.xlu0
  %v1658 = vpop.trf.xlu0
  %v1659 = vpop.trf.xlu0
  %v1660 = vpop.trf.xlu0
  %v1661 = vpop.trf.xlu0
  %v1662 = vpop.trf.xlu0
  %1663 = vxpose.xlu0.b32.start [1/16] %v1376, 128
  %1664 = vxpose.xlu0.b32.cont [2/16] %v1378, 128
  %1665 = vxpose.xlu0.b32.cont [3/16] 0.0, 128
  %1666 = vxpose.xlu0.b32.cont [4/16] 0.0, 128
  %1667 = vxpose.xlu0.b32.cont [5/16] 0.0, 128
  %1668 = vxpose.xlu0.b32.cont [6/16] 0.0, 128
  %1669 = vxpose.xlu0.b32.cont [7/16] 0.0, 128
  %1670 = vxpose.xlu0.b32.cont [8/16] 0.0, 128
  %1671 = vxpose.xlu0.b32.cont [9/16] 0.0, 128
  %1672 = vxpose.xlu0.b32.cont [10/16] 0.0, 128
  %1673 = vxpose.xlu0.b32.cont [11/16] 0.0, 128
  %1674 = vxpose.xlu0.b32.cont [12/16] 0.0, 128
  %1675 = vxpose.xlu0.b32.cont [13/16] 0.0, 128
  %1676 = vxpose.xlu0.b32.cont [14/16] 0.0, 128
  %1677 = vxpose.xlu0.b32.cont [15/16] 0.0, 128
  %1678 = vxpose.xlu0.b32.end [16/16] 0.0, 128
  %v1679 = vpop.trf.xlu0
  %v1680 = vpop.trf.xlu0
  %v1681 = vpop.trf.xlu0
  %v1682 = vpop.trf.xlu0
  %v1683 = vpop.trf.xlu0
  %v1684 = vpop.trf.xlu0
  %v1685 = vpop.trf.xlu0
  %v1686 = vpop.trf.xlu0
  %v1687 = vpop.trf.xlu0
  %v1688 = vpop.trf.xlu0
  %v1689 = vpop.trf.xlu0
  %v1690 = vpop.trf.xlu0
  %v1691 = vpop.trf.xlu0
  %v1692 = vpop.trf.xlu0
  %v1693 = vpop.trf.xlu0
  %v1694 = vpop.trf.xlu0
  %1695 = vxpose.xlu0.b32.start [1/16] %v1380, 128
  %1696 = vxpose.xlu0.b32.cont [2/16] %v1382, 128
  %1697 = vxpose.xlu0.b32.cont [3/16] 0.0, 128
  %1698 = vxpose.xlu0.b32.cont [4/16] 0.0, 128
  %1699 = vxpose.xlu0.b32.cont [5/16] 0.0, 128
  %1700 = vxpose.xlu0.b32.cont [6/16] 0.0, 128
  %1701 = vxpose.xlu0.b32.cont [7/16] 0.0, 128
  %1702 = vxpose.xlu0.b32.cont [8/16] 0.0, 128
  %1703 = vxpose.xlu0.b32.cont [9/16] 0.0, 128
  %1704 = vxpose.xlu0.b32.cont [10/16] 0.0, 128
  %1705 = vxpose.xlu0.b32.cont [11/16] 0.0, 128
  %1706 = vxpose.xlu0.b32.cont [12/16] 0.0, 128
  %1707 = vxpose.xlu0.b32.cont [13/16] 0.0, 128
  %1708 = vxpose.xlu0.b32.cont [14/16] 0.0, 128
  %1709 = vxpose.xlu0.b32.cont [15/16] 0.0, 128
  %1710 = vxpose.xlu0.b32.end [16/16] 0.0, 128
  %v1711 = vpop.trf.xlu0
  %v1712 = vpop.trf.xlu0
  %v1713 = vpop.trf.xlu0
  %v1714 = vpop.trf.xlu0
  %v1715 = vpop.trf.xlu0
  %v1716 = vpop.trf.xlu0
  %v1717 = vpop.trf.xlu0
  %v1718 = vpop.trf.xlu0
  %v1719 = vpop.trf.xlu0
  %v1720 = vpop.trf.xlu0
  %v1721 = vpop.trf.xlu0
  %v1722 = vpop.trf.xlu0
  %v1723 = vpop.trf.xlu0
  %v1724 = vpop.trf.xlu0
  %v1725 = vpop.trf.xlu0
  %v1726 = vpop.trf.xlu0
  %1727 = vxpose.xlu0.b32.start [1/16] %v1384, 128
  %1728 = vxpose.xlu0.b32.cont [2/16] %v1386, 128
  %1729 = vxpose.xlu0.b32.cont [3/16] 0.0, 128
  %1730 = vxpose.xlu0.b32.cont [4/16] 0.0, 128
  %1731 = vxpose.xlu0.b32.cont [5/16] 0.0, 128
  %1732 = vxpose.xlu0.b32.cont [6/16] 0.0, 128
  %1733 = vxpose.xlu0.b32.cont [7/16] 0.0, 128
  %1734 = vxpose.xlu0.b32.cont [8/16] 0.0, 128
  %1735 = vxpose.xlu0.b32.cont [9/16] 0.0, 128
  %1736 = vxpose.xlu0.b32.cont [10/16] 0.0, 128
  %1737 = vxpose.xlu0.b32.cont [11/16] 0.0, 128
  %1738 = vxpose.xlu0.b32.cont [12/16] 0.0, 128
  %1739 = vxpose.xlu0.b32.cont [13/16] 0.0, 128
  %1740 = vxpose.xlu0.b32.cont [14/16] 0.0, 128
  %1741 = vxpose.xlu0.b32.cont [15/16] 0.0, 128
  %1742 = vxpose.xlu0.b32.end [16/16] 0.0, 128
  %v1743 = vpop.trf.xlu0
  %v1744 = vpop.trf.xlu0
  %v1745 = vpop.trf.xlu0
  %v1746 = vpop.trf.xlu0
  %v1747 = vpop.trf.xlu0
  %v1748 = vpop.trf.xlu0
  %v1749 = vpop.trf.xlu0
  %v1750 = vpop.trf.xlu0
  %v1751 = vpop.trf.xlu0
  %v1752 = vpop.trf.xlu0
  %v1753 = vpop.trf.xlu0
  %v1754 = vpop.trf.xlu0
  %v1755 = vpop.trf.xlu0
  %v1756 = vpop.trf.xlu0
  %v1757 = vpop.trf.xlu0
  %v1758 = vpop.trf.xlu0
  %1759 = vxpose.xlu0.b32.start [1/16] %v1388, 128
  %1760 = vxpose.xlu0.b32.cont [2/16] %v1390, 128
  %1761 = vxpose.xlu0.b32.cont [3/16] 0.0, 128
  %1762 = vxpose.xlu0.b32.cont [4/16] 0.0, 128
  %1763 = vxpose.xlu0.b32.cont [5/16] 0.0, 128
  %1764 = vxpose.xlu0.b32.cont [6/16] 0.0, 128
  %1765 = vxpose.xlu0.b32.cont [7/16] 0.0, 128
  %1766 = vxpose.xlu0.b32.cont [8/16] 0.0, 128
  %1767 = vxpose.xlu0.b32.cont [9/16] 0.0, 128
  %1768 = vxpose.xlu0.b32.cont [10/16] 0.0, 128
  %1769 = vxpose.xlu0.b32.cont [11/16] 0.0, 128
  %1770 = vxpose.xlu0.b32.cont [12/16] 0.0, 128
  %1771 = vxpose.xlu0.b32.cont [13/16] 0.0, 128
  %1772 = vxpose.xlu0.b32.cont [14/16] 0.0, 128
  %1773 = vxpose.xlu0.b32.cont [15/16] 0.0, 128
  %1774 = vxpose.xlu0.b32.end [16/16] 0.0, 128
  %v1775 = vpop.trf.xlu0
  %v1776 = vpop.trf.xlu0
  %v1777 = vpop.trf.xlu0
  %v1778 = vpop.trf.xlu0
  %v1779 = vpop.trf.xlu0
  %v1780 = vpop.trf.xlu0
  %v1781 = vpop.trf.xlu0
  %v1782 = vpop.trf.xlu0
  %v1783 = vpop.trf.xlu0
  %v1784 = vpop.trf.xlu0
  %v1785 = vpop.trf.xlu0
  %v1786 = vpop.trf.xlu0
  %v1787 = vpop.trf.xlu0
  %v1788 = vpop.trf.xlu0
  %v1789 = vpop.trf.xlu0
  %v1790 = vpop.trf.xlu0
  %1791 = vxpose.xlu0.b32.start [1/16] %v1392, 128
  %1792 = vxpose.xlu0.b32.cont [2/16] %v1394, 128
  %1793 = vxpose.xlu0.b32.cont [3/16] 0.0, 128
  %1794 = vxpose.xlu0.b32.cont [4/16] 0.0, 128
  %1795 = vxpose.xlu0.b32.cont [5/16] 0.0, 128
  %1796 = vxpose.xlu0.b32.cont [6/16] 0.0, 128
  %1797 = vxpose.xlu0.b32.cont [7/16] 0.0, 128
  %1798 = vxpose.xlu0.b32.cont [8/16] 0.0, 128
  %1799 = vxpose.xlu0.b32.cont [9/16] 0.0, 128
  %1800 = vxpose.xlu0.b32.cont [10/16] 0.0, 128
  %1801 = vxpose.xlu0.b32.cont [11/16] 0.0, 128
  %1802 = vxpose.xlu0.b32.cont [12/16] 0.0, 128
  %1803 = vxpose.xlu0.b32.cont [13/16] 0.0, 128
  %1804 = vxpose.xlu0.b32.cont [14/16] 0.0, 128
  %1805 = vxpose.xlu0.b32.cont [15/16] 0.0, 128
  %1806 = vxpose.xlu0.b32.end [16/16] 0.0, 128
  %v1807 = vpop.trf.xlu0
  %v1808 = vpop.trf.xlu0
  %v1809 = vpop.trf.xlu0
  %v1810 = vpop.trf.xlu0
  %v1811 = vpop.trf.xlu0
  %v1812 = vpop.trf.xlu0
  %v1813 = vpop.trf.xlu0
  %v1814 = vpop.trf.xlu0
  %v1815 = vpop.trf.xlu0
  %v1816 = vpop.trf.xlu0
  %v1817 = vpop.trf.xlu0
  %v1818 = vpop.trf.xlu0
  %v1819 = vpop.trf.xlu0
  %v1820 = vpop.trf.xlu0
  %v1821 = vpop.trf.xlu0
  %v1822 = vpop.trf.xlu0
  %1823 = vxpose.xlu0.b32.start [1/16] %v1396, 128
  %1824 = vxpose.xlu0.b32.cont [2/16] %v1398, 128
  %1825 = vxpose.xlu0.b32.cont [3/16] 0.0, 128
  %1826 = vxpose.xlu0.b32.cont [4/16] 0.0, 128
  %1827 = vxpose.xlu0.b32.cont [5/16] 0.0, 128
  %1828 = vxpose.xlu0.b32.cont [6/16] 0.0, 128
  %1829 = vxpose.xlu0.b32.cont [7/16] 0.0, 128
  %1830 = vxpose.xlu0.b32.cont [8/16] 0.0, 128
  %1831 = vxpose.xlu0.b32.cont [9/16] 0.0, 128
  %1832 = vxpose.xlu0.b32.cont [10/16] 0.0, 128
  %1833 = vxpose.xlu0.b32.cont [11/16] 0.0, 128
  %1834 = vxpose.xlu0.b32.cont [12/16] 0.0, 128
  %1835 = vxpose.xlu0.b32.cont [13/16] 0.0, 128
  %1836 = vxpose.xlu0.b32.cont [14/16] 0.0, 128
  %1837 = vxpose.xlu0.b32.cont [15/16] 0.0, 128
  %1838 = vxpose.xlu0.b32.end [16/16] 0.0, 128
  %v1839 = vpop.trf.xlu0
  %v1840 = vpop.trf.xlu0
  %v1841 = vpop.trf.xlu0
  %v1842 = vpop.trf.xlu0
  %v1843 = vpop.trf.xlu0
  %v1844 = vpop.trf.xlu0
  %v1845 = vpop.trf.xlu0
  %v1846 = vpop.trf.xlu0
  %v1847 = vpop.trf.xlu0
  %v1848 = vpop.trf.xlu0
  %v1849 = vpop.trf.xlu0
  %v1850 = vpop.trf.xlu0
  %v1851 = vpop.trf.xlu0
  %v1852 = vpop.trf.xlu0
  %v1853 = vpop.trf.xlu0
  %v1854 = vpop.trf.xlu0
  %1855 = vxpose.xlu0.b32.start [1/16] %v1400, 128
  %1856 = vxpose.xlu0.b32.cont [2/16] %v1402, 128
  %1857 = vxpose.xlu0.b32.cont [3/16] 0.0, 128
  %1858 = vxpose.xlu0.b32.cont [4/16] 0.0, 128
  %1859 = vxpose.xlu0.b32.cont [5/16] 0.0, 128
  %1860 = vxpose.xlu0.b32.cont [6/16] 0.0, 128
  %1861 = vxpose.xlu0.b32.cont [7/16] 0.0, 128
  %1862 = vxpose.xlu0.b32.cont [8/16] 0.0, 128
  %1863 = vxpose.xlu0.b32.cont [9/16] 0.0, 128
  %1864 = vxpose.xlu0.b32.cont [10/16] 0.0, 128
  %1865 = vxpose.xlu0.b32.cont [11/16] 0.0, 128
  %1866 = vxpose.xlu0.b32.cont [12/16] 0.0, 128
  %1867 = vxpose.xlu0.b32.cont [13/16] 0.0, 128
  %1868 = vxpose.xlu0.b32.cont [14/16] 0.0, 128
  %1869 = vxpose.xlu0.b32.cont [15/16] 0.0, 128
  %1870 = vxpose.xlu0.b32.end [16/16] 0.0, 128
  %v1871 = vpop.trf.xlu0
  %v1872 = vpop.trf.xlu0
  %v1873 = vpop.trf.xlu0
  %v1874 = vpop.trf.xlu0
  %v1875 = vpop.trf.xlu0
  %v1876 = vpop.trf.xlu0
  %v1877 = vpop.trf.xlu0
  %v1878 = vpop.trf.xlu0
  %v1879 = vpop.trf.xlu0
  %v1880 = vpop.trf.xlu0
  %v1881 = vpop.trf.xlu0
  %v1882 = vpop.trf.xlu0
  %v1883 = vpop.trf.xlu0
  %v1884 = vpop.trf.xlu0
  %v1885 = vpop.trf.xlu0
  %v1886 = vpop.trf.xlu0
  %1887 = vxpose.xlu0.b32.start [1/16] %v1404, 128
  %1888 = vxpose.xlu0.b32.cont [2/16] %v1406, 128
  %1889 = vxpose.xlu0.b32.cont [3/16] 0.0, 128
  %1890 = vxpose.xlu0.b32.cont [4/16] 0.0, 128
  %1891 = vxpose.xlu0.b32.cont [5/16] 0.0, 128
  %1892 = vxpose.xlu0.b32.cont [6/16] 0.0, 128
  %1893 = vxpose.xlu0.b32.cont [7/16] 0.0, 128
  %1894 = vxpose.xlu0.b32.cont [8/16] 0.0, 128
  %1895 = vxpose.xlu0.b32.cont [9/16] 0.0, 128
  %1896 = vxpose.xlu0.b32.cont [10/16] 0.0, 128
  %1897 = vxpose.xlu0.b32.cont [11/16] 0.0, 128
  %1898 = vxpose.xlu0.b32.cont [12/16] 0.0, 128
  %1899 = vxpose.xlu0.b32.cont [13/16] 0.0, 128
  %1900 = vxpose.xlu0.b32.cont [14/16] 0.0, 128
  %1901 = vxpose.xlu0.b32.cont [15/16] 0.0, 128
  %1902 = vxpose.xlu0.b32.end [16/16] 0.0, 128
  %v1903 = vpop.trf.xlu0
  %v1904 = vpop.trf.xlu0
  %v1905 = vpop.trf.xlu0
  %v1906 = vpop.trf.xlu0
  %v1907 = vpop.trf.xlu0
  %v1908 = vpop.trf.xlu0
  %v1909 = vpop.trf.xlu0
  %v1910 = vpop.trf.xlu0
  %v1911 = vpop.trf.xlu0
  %v1912 = vpop.trf.xlu0
  %v1913 = vpop.trf.xlu0
  %v1914 = vpop.trf.xlu0
  %v1915 = vpop.trf.xlu0
  %v1916 = vpop.trf.xlu0
  %v1917 = vpop.trf.xlu0
  %v1918 = vpop.trf.xlu0
  %1919 = vxpose.xlu0.b32.start [1/16] %v1408, 128
  %1920 = vxpose.xlu0.b32.cont [2/16] %v1410, 128
  %1921 = vxpose.xlu0.b32.cont [3/16] 0.0, 128
  %1922 = vxpose.xlu0.b32.cont [4/16] 0.0, 128
  %1923 = vxpose.xlu0.b32.cont [5/16] 0.0, 128
  %1924 = vxpose.xlu0.b32.cont [6/16] 0.0, 128
  %1925 = vxpose.xlu0.b32.cont [7/16] 0.0, 128
  %1926 = vxpose.xlu0.b32.cont [8/16] 0.0, 128
  %1927 = vxpose.xlu0.b32.cont [9/16] 0.0, 128
  %1928 = vxpose.xlu0.b32.cont [10/16] 0.0, 128
  %1929 = vxpose.xlu0.b32.cont [11/16] 0.0, 128
  %1930 = vxpose.xlu0.b32.cont [12/16] 0.0, 128
  %1931 = vxpose.xlu0.b32.cont [13/16] 0.0, 128
  %1932 = vxpose.xlu0.b32.cont [14/16] 0.0, 128
  %1933 = vxpose.xlu0.b32.cont [15/16] 0.0, 128
  %1934 = vxpose.xlu0.b32.end [16/16] 0.0, 128
  %v1935 = vpop.trf.xlu0
  %v1936 = vpop.trf.xlu0
  %v1937 = vpop.trf.xlu0
  %v1938 = vpop.trf.xlu0
  %v1939 = vpop.trf.xlu0
  %v1940 = vpop.trf.xlu0
  %v1941 = vpop.trf.xlu0
  %v1942 = vpop.trf.xlu0
  %v1943 = vpop.trf.xlu0
  %v1944 = vpop.trf.xlu0
  %v1945 = vpop.trf.xlu0
  %v1946 = vpop.trf.xlu0
  %v1947 = vpop.trf.xlu0
  %v1948 = vpop.trf.xlu0
  %v1949 = vpop.trf.xlu0
  %v1950 = vpop.trf.xlu0
  %1951 = vxpose.xlu0.b32.start [1/16] %v1412, 128
  %1952 = vxpose.xlu0.b32.cont [2/16] %v1414, 128
  %1953 = vxpose.xlu0.b32.cont [3/16] 0.0, 128
  %1954 = vxpose.xlu0.b32.cont [4/16] 0.0, 128
  %1955 = vxpose.xlu0.b32.cont [5/16] 0.0, 128
  %1956 = vxpose.xlu0.b32.cont [6/16] 0.0, 128
  %1957 = vxpose.xlu0.b32.cont [7/16] 0.0, 128
  %1958 = vxpose.xlu0.b32.cont [8/16] 0.0, 128
  %1959 = vxpose.xlu0.b32.cont [9/16] 0.0, 128
  %1960 = vxpose.xlu0.b32.cont [10/16] 0.0, 128
  %1961 = vxpose.xlu0.b32.cont [11/16] 0.0, 128
  %1962 = vxpose.xlu0.b32.cont [12/16] 0.0, 128
  %1963 = vxpose.xlu0.b32.cont [13/16] 0.0, 128
  %1964 = vxpose.xlu0.b32.cont [14/16] 0.0, 128
  %1965 = vxpose.xlu0.b32.cont [15/16] 0.0, 128
  %1966 = vxpose.xlu0.b32.end [16/16] 0.0, 128
  %v1967 = vpop.trf.xlu0
  %v1968 = vpop.trf.xlu0
  %v1969 = vpop.trf.xlu0
  %v1970 = vpop.trf.xlu0
  %v1971 = vpop.trf.xlu0
  %v1972 = vpop.trf.xlu0
  %v1973 = vpop.trf.xlu0
  %v1974 = vpop.trf.xlu0
  %v1975 = vpop.trf.xlu0
  %v1976 = vpop.trf.xlu0
  %v1977 = vpop.trf.xlu0
  %v1978 = vpop.trf.xlu0
  %v1979 = vpop.trf.xlu0
  %v1980 = vpop.trf.xlu0
  %v1981 = vpop.trf.xlu0
  %v1982 = vpop.trf.xlu0
  %1983 = vxpose.xlu0.b32.start [1/16] %v1416, 128
  %1984 = vxpose.xlu0.b32.cont [2/16] %v1418, 128
  %1985 = vxpose.xlu0.b32.cont [3/16] 0.0, 128
  %1986 = vxpose.xlu0.b32.cont [4/16] 0.0, 128
  %1987 = vxpose.xlu0.b32.cont [5/16] 0.0, 128
  %1988 = vxpose.xlu0.b32.cont [6/16] 0.0, 128
  %1989 = vxpose.xlu0.b32.cont [7/16] 0.0, 128
  %1990 = vxpose.xlu0.b32.cont [8/16] 0.0, 128
  %1991 = vxpose.xlu0.b32.cont [9/16] 0.0, 128
  %1992 = vxpose.xlu0.b32.cont [10/16] 0.0, 128
  %1993 = vxpose.xlu0.b32.cont [11/16] 0.0, 128
  %1994 = vxpose.xlu0.b32.cont [12/16] 0.0, 128
  %1995 = vxpose.xlu0.b32.cont [13/16] 0.0, 128
  %1996 = vxpose.xlu0.b32.cont [14/16] 0.0, 128
  %1997 = vxpose.xlu0.b32.cont [15/16] 0.0, 128
  %1998 = vxpose.xlu0.b32.end [16/16] 0.0, 128
  %v1999 = vpop.trf.xlu0
  %v2000 = vpop.trf.xlu0
  %v2001 = vpop.trf.xlu0
  %v2002 = vpop.trf.xlu0
  %v2003 = vpop.trf.xlu0
  %v2004 = vpop.trf.xlu0
  %v2005 = vpop.trf.xlu0
  %v2006 = vpop.trf.xlu0
  %v2007 = vpop.trf.xlu0
  %v2008 = vpop.trf.xlu0
  %v2009 = vpop.trf.xlu0
  %v2010 = vpop.trf.xlu0
  %v2011 = vpop.trf.xlu0
  %v2012 = vpop.trf.xlu0
  %v2013 = vpop.trf.xlu0
  %v2014 = vpop.trf.xlu0
  %2015 = vxpose.xlu0.b32.start [1/16] %v1420, 128
  %2016 = vxpose.xlu0.b32.cont [2/16] %v1422, 128
  %2017 = vxpose.xlu0.b32.cont [3/16] 0.0, 128
  %2018 = vxpose.xlu0.b32.cont [4/16] 0.0, 128
  %2019 = vxpose.xlu0.b32.cont [5/16] 0.0, 128
  %2020 = vxpose.xlu0.b32.cont [6/16] 0.0, 128
  %2021 = vxpose.xlu0.b32.cont [7/16] 0.0, 128
  %2022 = vxpose.xlu0.b32.cont [8/16] 0.0, 128
  %2023 = vxpose.xlu0.b32.cont [9/16] 0.0, 128
  %2024 = vxpose.xlu0.b32.cont [10/16] 0.0, 128
  %2025 = vxpose.xlu0.b32.cont [11/16] 0.0, 128
  %2026 = vxpose.xlu0.b32.cont [12/16] 0.0, 128
  %2027 = vxpose.xlu0.b32.cont [13/16] 0.0, 128
  %2028 = vxpose.xlu0.b32.cont [14/16] 0.0, 128
  %2029 = vxpose.xlu0.b32.cont [15/16] 0.0, 128
  %2030 = vxpose.xlu0.b32.end [16/16] 0.0, 128
  %v2031 = vpop.trf.xlu0
  %v2032 = vpop.trf.xlu0
  %v2033 = vpop.trf.xlu0
  %v2034 = vpop.trf.xlu0
  %v2035 = vpop.trf.xlu0
  %v2036 = vpop.trf.xlu0
  %v2037 = vpop.trf.xlu0
  %v2038 = vpop.trf.xlu0
  %v2039 = vpop.trf.xlu0
  %v2040 = vpop.trf.xlu0
  %v2041 = vpop.trf.xlu0
  %v2042 = vpop.trf.xlu0
  %v2043 = vpop.trf.xlu0
  %v2044 = vpop.trf.xlu0
  %v2045 = vpop.trf.xlu0
  %v2046 = vpop.trf.xlu0
  %2047 = vxpose.xlu0.b32.start [1/16] %v1424, 128
  %2048 = vxpose.xlu0.b32.cont [2/16] %v1426, 128
  %2049 = vxpose.xlu0.b32.cont [3/16] 0.0, 128
  %2050 = vxpose.xlu0.b32.cont [4/16] 0.0, 128
  %2051 = vxpose.xlu0.b32.cont [5/16] 0.0, 128
  %2052 = vxpose.xlu0.b32.cont [6/16] 0.0, 128
  %2053 = vxpose.xlu0.b32.cont [7/16] 0.0, 128
  %2054 = vxpose.xlu0.b32.cont [8/16] 0.0, 128
  %2055 = vxpose.xlu0.b32.cont [9/16] 0.0, 128
  %2056 = vxpose.xlu0.b32.cont [10/16] 0.0, 128
  %2057 = vxpose.xlu0.b32.cont [11/16] 0.0, 128
  %2058 = vxpose.xlu0.b32.cont [12/16] 0.0, 128
  %2059 = vxpose.xlu0.b32.cont [13/16] 0.0, 128
  %2060 = vxpose.xlu0.b32.cont [14/16] 0.0, 128
  %2061 = vxpose.xlu0.b32.cont [15/16] 0.0, 128
  %2062 = vxpose.xlu0.b32.end [16/16] 0.0, 128
  %v2063 = vpop.trf.xlu0
  %v2064 = vpop.trf.xlu0
  %v2065 = vpop.trf.xlu0
  %v2066 = vpop.trf.xlu0
  %v2067 = vpop.trf.xlu0
  %v2068 = vpop.trf.xlu0
  %v2069 = vpop.trf.xlu0
  %v2070 = vpop.trf.xlu0
  %v2071 = vpop.trf.xlu0
  %v2072 = vpop.trf.xlu0
  %v2073 = vpop.trf.xlu0
  %v2074 = vpop.trf.xlu0
  %v2075 = vpop.trf.xlu0
  %v2076 = vpop.trf.xlu0
  %v2077 = vpop.trf.xlu0
  %v2078 = vpop.trf.xlu0
  %2079 = vxpose.xlu0.b32.start [1/16] %v1428, 128
  %2080 = vxpose.xlu0.b32.cont [2/16] %v1430, 128
  %2081 = vxpose.xlu0.b32.cont [3/16] 0.0, 128
  %2082 = vxpose.xlu0.b32.cont [4/16] 0.0, 128
  %2083 = vxpose.xlu0.b32.cont [5/16] 0.0, 128
  %2084 = vxpose.xlu0.b32.cont [6/16] 0.0, 128
  %2085 = vxpose.xlu0.b32.cont [7/16] 0.0, 128
  %2086 = vxpose.xlu0.b32.cont [8/16] 0.0, 128
  %2087 = vxpose.xlu0.b32.cont [9/16] 0.0, 128
  %2088 = vxpose.xlu0.b32.cont [10/16] 0.0, 128
  %2089 = vxpose.xlu0.b32.cont [11/16] 0.0, 128
  %2090 = vxpose.xlu0.b32.cont [12/16] 0.0, 128
  %2091 = vxpose.xlu0.b32.cont [13/16] 0.0, 128
  %2092 = vxpose.xlu0.b32.cont [14/16] 0.0, 128
  %2093 = vxpose.xlu0.b32.cont [15/16] 0.0, 128
  %2094 = vxpose.xlu0.b32.end [16/16] 0.0, 128
  %v2095 = vpop.trf.xlu0
  %v2096 = vpop.trf.xlu0
  %v2097 = vpop.trf.xlu0
  %v2098 = vpop.trf.xlu0
  %v2099 = vpop.trf.xlu0
  %v2100 = vpop.trf.xlu0
  %v2101 = vpop.trf.xlu0
  %v2102 = vpop.trf.xlu0
  %v2103 = vpop.trf.xlu0
  %v2104 = vpop.trf.xlu0
  %v2105 = vpop.trf.xlu0
  %v2106 = vpop.trf.xlu0
  %v2107 = vpop.trf.xlu0
  %v2108 = vpop.trf.xlu0
  %v2109 = vpop.trf.xlu0
  %v2110 = vpop.trf.xlu0
  %2111 = vset.pattern.permute.xlu0 0
  %2112 = vperm.xlu0 %2111, %v261
  %v2113 = vpop.permute.xlu0 %2112
  %2115 = vset.pattern.permute.xlu0 0
  %2116 = vperm.xlu0 %2115, %v266
  %v2117 = vpop.permute.xlu0 %2116
  %2119 = vset.pattern.permute.xlu0 0
  %2120 = vperm.xlu0 %2119, %v271
  %v2121 = vpop.permute.xlu0 %2120
  %2123 = vset.pattern.permute.xlu0 0
  %2124 = vperm.xlu0 %2123, %v276
  %v2125 = vpop.permute.xlu0 %2124
  %2127 = vset.pattern.permute.xlu0 0
  %2128 = vperm.xlu0 %2127, %v281
  %v2129 = vpop.permute.xlu0 %2128
  %2131 = vset.pattern.permute.xlu0 0
  %2132 = vperm.xlu0 %2131, %v286
  %v2133 = vpop.permute.xlu0 %2132
  %2135 = vset.pattern.permute.xlu0 0
  %2136 = vperm.xlu0 %2135, %v291
  %v2137 = vpop.permute.xlu0 %2136
  %2139 = vset.pattern.permute.xlu0 0
  %2140 = vperm.xlu0 %2139, %v296
  %v2141 = vpop.permute.xlu0 %2140
  %2143 = vset.pattern.permute.xlu0 0
  %2144 = vperm.xlu0 %2143, %v301
  %v2145 = vpop.permute.xlu0 %2144
  %2147 = vset.pattern.permute.xlu0 0
  %2148 = vperm.xlu0 %2147, %v306
  %v2149 = vpop.permute.xlu0 %2148
  %2151 = vset.pattern.permute.xlu0 0
  %2152 = vperm.xlu0 %2151, %v311
  %v2153 = vpop.permute.xlu0 %2152
  %2155 = vset.pattern.permute.xlu0 0
  %2156 = vperm.xlu0 %2155, %v316
  %v2157 = vpop.permute.xlu0 %2156
  %2159 = vset.pattern.permute.xlu0 0
  %2160 = vperm.xlu0 %2159, %v321
  %v2161 = vpop.permute.xlu0 %2160
  %2163 = vset.pattern.permute.xlu0 0
  %2164 = vperm.xlu0 %2163, %v326
  %v2165 = vpop.permute.xlu0 %2164
  %2167 = vset.pattern.permute.xlu0 0
  %2168 = vperm.xlu0 %2167, %v331
  %v2169 = vpop.permute.xlu0 %2168
  %2171 = vset.pattern.permute.xlu0 0
  %2172 = vperm.xlu0 %2171, %v336
  %v2173 = vpop.permute.xlu0 %2172
  %2175 = vset.pattern.permute.xlu0 0
  %2176 = vperm.xlu0 %2175, %v341
  %v2177 = vpop.permute.xlu0 %2176
  %2179 = vset.pattern.permute.xlu0 0
  %2180 = vperm.xlu0 %2179, %v346
  %v2181 = vpop.permute.xlu0 %2180
  %2183 = vset.pattern.permute.xlu0 0
  %2184 = vperm.xlu0 %2183, %v351
  %v2185 = vpop.permute.xlu0 %2184
  %2187 = vset.pattern.permute.xlu0 0
  %2188 = vperm.xlu0 %2187, %v356
  %v2189 = vpop.permute.xlu0 %2188
  %2191 = vset.pattern.permute.xlu0 0
  %2192 = vperm.xlu0 %2191, %v361
  %v2193 = vpop.permute.xlu0 %2192
  %2195 = vset.pattern.permute.xlu0 0
  %2196 = vperm.xlu0 %2195, %v366
  %v2197 = vpop.permute.xlu0 %2196
  %2199 = vset.pattern.permute.xlu0 0
  %2200 = vperm.xlu0 %2199, %v371
  %v2201 = vpop.permute.xlu0 %2200
  %2203 = vset.pattern.permute.xlu0 0
  %2204 = vperm.xlu0 %2203, %v376
  %v2205 = vpop.permute.xlu0 %2204
  %2207 = vset.pattern.permute.xlu0 0
  %2208 = vperm.xlu0 %2207, %v381
  %v2209 = vpop.permute.xlu0 %2208
  %2211 = vset.pattern.permute.xlu0 0
  %2212 = vperm.xlu0 %2211, %v386
  %v2213 = vpop.permute.xlu0 %2212
  %2215 = vset.pattern.permute.xlu0 0
  %2216 = vperm.xlu0 %2215, %v391
  %v2217 = vpop.permute.xlu0 %2216
  %2219 = vset.pattern.permute.xlu0 0
  %2220 = vperm.xlu0 %2219, %v396
  %v2221 = vpop.permute.xlu0 %2220
  %2223 = vset.pattern.permute.xlu0 0
  %2224 = vperm.xlu0 %2223, %v401
  %v2225 = vpop.permute.xlu0 %2224
  %2227 = vset.pattern.permute.xlu0 0
  %2228 = vperm.xlu0 %2227, %v406
  %v2229 = vpop.permute.xlu0 %2228
  %2231 = vset.pattern.permute.xlu0 0
  %2232 = vperm.xlu0 %2231, %v411
  %v2233 = vpop.permute.xlu0 %2232
  %2235 = vset.pattern.permute.xlu0 0
  %2236 = vperm.xlu0 %2235, %v416
  %v2237 = vpop.permute.xlu0 %2236
  %2239 = vset.pattern.permute.xlu0 0
  %2240 = vperm.xlu0 %2239, %v421
  %v2241 = vpop.permute.xlu0 %2240
  %2243 = vset.pattern.permute.xlu0 0
  %2244 = vperm.xlu0 %2243, %v426
  %v2245 = vpop.permute.xlu0 %2244
  %2247 = vset.pattern.permute.xlu0 0
  %2248 = vperm.xlu0 %2247, %v431
  %v2249 = vpop.permute.xlu0 %2248
  %2251 = vset.pattern.permute.xlu0 0
  %2252 = vperm.xlu0 %2251, %v436
  %v2253 = vpop.permute.xlu0 %2252
  %2255 = vset.pattern.permute.xlu0 0
  %2256 = vperm.xlu0 %2255, %v441
  %v2257 = vpop.permute.xlu0 %2256
  %2259 = vset.pattern.permute.xlu0 0
  %2260 = vperm.xlu0 %2259, %v446
  %v2261 = vpop.permute.xlu0 %2260
  %2263 = vset.pattern.permute.xlu0 0
  %2264 = vperm.xlu0 %2263, %v451
  %v2265 = vpop.permute.xlu0 %2264
  %2267 = vset.pattern.permute.xlu0 0
  %2268 = vperm.xlu0 %2267, %v456
  %v2269 = vpop.permute.xlu0 %2268
  %v2271 = vlaneseq
  %v2272 = vshrl.u32 %v2271, 7
  %v2273 = vsub.s32 0, %v2272
  %v2274 = vrot.slane %v687, %v2273
  %v2275 = vlaneseq
  %v2276 = vshrl.u32 %v2275, 7
  %v2277 = vsub.s32 0, %v2276
  %v2278 = vrot.slane %v719, %v2277
  %v2279 = vlaneseq
  %v2280 = vshrl.u32 %v2279, 7
  %v2281 = vsub.s32 0, %v2280
  %v2282 = vrot.slane %v751, %v2281
  %v2283 = vlaneseq
  %v2284 = vshrl.u32 %v2283, 7
  %v2285 = vsub.s32 0, %v2284
  %v2286 = vrot.slane %v783, %v2285
  %v2287 = vlaneseq
  %v2288 = vshrl.u32 %v2287, 7
  %v2289 = vsub.s32 0, %v2288
  %v2290 = vrot.slane %v815, %v2289
  %v2291 = vlaneseq
  %v2292 = vshrl.u32 %v2291, 7
  %v2293 = vsub.s32 0, %v2292
  %v2294 = vrot.slane %v847, %v2293
  %v2295 = vlaneseq
  %v2296 = vshrl.u32 %v2295, 7
  %v2297 = vsub.s32 0, %v2296
  %v2298 = vrot.slane %v879, %v2297
  %v2299 = vlaneseq
  %v2300 = vshrl.u32 %v2299, 7
  %v2301 = vsub.s32 0, %v2300
  %v2302 = vrot.slane %v911, %v2301
  %v2303 = vlaneseq
  %v2304 = vshrl.u32 %v2303, 7
  %v2305 = vsub.s32 0, %v2304
  %v2306 = vrot.slane %v943, %v2305
  %v2307 = vlaneseq
  %v2308 = vshrl.u32 %v2307, 7
  %v2309 = vsub.s32 0, %v2308
  %v2310 = vrot.slane %v975, %v2309
  %v2311 = vlaneseq
  %v2312 = vshrl.u32 %v2311, 7
  %v2313 = vsub.s32 0, %v2312
  %v2314 = vrot.slane %v1007, %v2313
  %v2315 = vlaneseq
  %v2316 = vshrl.u32 %v2315, 7
  %v2317 = vsub.s32 0, %v2316
  %v2318 = vrot.slane %v1039, %v2317
  %v2319 = vlaneseq
  %v2320 = vshrl.u32 %v2319, 7
  %v2321 = vsub.s32 0, %v2320
  %v2322 = vrot.slane %v1071, %v2321
  %v2323 = vlaneseq
  %v2324 = vshrl.u32 %v2323, 7
  %v2325 = vsub.s32 0, %v2324
  %v2326 = vrot.slane %v1103, %v2325
  %v2327 = vlaneseq
  %v2328 = vshrl.u32 %v2327, 7
  %v2329 = vsub.s32 0, %v2328
  %v2330 = vrot.slane %v1135, %v2329
  %v2331 = vlaneseq
  %v2332 = vshrl.u32 %v2331, 7
  %v2333 = vsub.s32 0, %v2332
  %v2334 = vrot.slane %v1167, %v2333
  %v2335 = vlaneseq
  %v2336 = vshrl.u32 %v2335, 7
  %v2337 = vsub.s32 0, %v2336
  %v2338 = vrot.slane %v1199, %v2337
  %v2339 = vlaneseq
  %v2340 = vshrl.u32 %v2339, 7
  %v2341 = vsub.s32 0, %v2340
  %v2342 = vrot.slane %v1231, %v2341
  %v2343 = vlaneseq
  %v2344 = vshrl.u32 %v2343, 7
  %v2345 = vsub.s32 0, %v2344
  %v2346 = vrot.slane %v1263, %v2345
  %v2347 = vlaneseq
  %v2348 = vshrl.u32 %v2347, 7
  %v2349 = vsub.s32 0, %v2348
  %v2350 = vrot.slane %v1295, %v2349
  %v2351 = vmul.f32 %v2113, %v2274
  %v2352 = vmul.f32 %v2117, %v2274
  %v2353 = vmul.f32 %v2121, %v2278
  %v2354 = vmul.f32 %v2125, %v2278
  %v2355 = vmul.f32 %v2129, %v2282
  %v2356 = vmul.f32 %v2133, %v2282
  %v2357 = vmul.f32 %v2137, %v2286
  %v2358 = vmul.f32 %v2141, %v2286
  %v2359 = vmul.f32 %v2145, %v2290
  %v2360 = vmul.f32 %v2149, %v2290
  %v2361 = vmul.f32 %v2153, %v2294
  %v2362 = vmul.f32 %v2157, %v2294
  %v2363 = vmul.f32 %v2161, %v2298
  %v2364 = vmul.f32 %v2165, %v2298
  %v2365 = vmul.f32 %v2169, %v2302
  %v2366 = vmul.f32 %v2173, %v2302
  %v2367 = vmul.f32 %v2177, %v2306
  %v2368 = vmul.f32 %v2181, %v2306
  %v2369 = vmul.f32 %v2185, %v2310
  %v2370 = vmul.f32 %v2189, %v2310
  %v2371 = vmul.f32 %v2193, %v2314
  %v2372 = vmul.f32 %v2197, %v2314
  %v2373 = vmul.f32 %v2201, %v2318
  %v2374 = vmul.f32 %v2205, %v2318
  %v2375 = vmul.f32 %v2209, %v2322
  %v2376 = vmul.f32 %v2213, %v2322
  %v2377 = vmul.f32 %v2217, %v2326
  %v2378 = vmul.f32 %v2221, %v2326
  %v2379 = vmul.f32 %v2225, %v2330
  %v2380 = vmul.f32 %v2229, %v2330
  %v2381 = vmul.f32 %v2233, %v2334
  %v2382 = vmul.f32 %v2237, %v2334
  %v2383 = vmul.f32 %v2241, %v2338
  %v2384 = vmul.f32 %v2245, %v2338
  %v2385 = vmul.f32 %v2249, %v2342
  %v2386 = vmul.f32 %v2253, %v2342
  %v2387 = vmul.f32 %v2257, %v2346
  %v2388 = vmul.f32 %v2261, %v2346
  %v2389 = vmul.f32 %v2265, %v2350
  %v2390 = vmul.f32 %v2269, %v2350
  %2391 = vset.pattern.permute.xlu0 1
  %2392 = vperm.xlu0 %2391, %v261
  %v2393 = vpop.permute.xlu0 %2392
  %2395 = vset.pattern.permute.xlu0 1
  %2396 = vperm.xlu0 %2395, %v266
  %v2397 = vpop.permute.xlu0 %2396
  %2399 = vset.pattern.permute.xlu0 1
  %2400 = vperm.xlu0 %2399, %v271
  %v2401 = vpop.permute.xlu0 %2400
  %2403 = vset.pattern.permute.xlu0 1
  %2404 = vperm.xlu0 %2403, %v276
  %v2405 = vpop.permute.xlu0 %2404
  %2407 = vset.pattern.permute.xlu0 1
  %2408 = vperm.xlu0 %2407, %v281
  %v2409 = vpop.permute.xlu0 %2408
  %2411 = vset.pattern.permute.xlu0 1
  %2412 = vperm.xlu0 %2411, %v286
  %v2413 = vpop.permute.xlu0 %2412
  %2415 = vset.pattern.permute.xlu0 1
  %2416 = vperm.xlu0 %2415, %v291
  %v2417 = vpop.permute.xlu0 %2416
  %2419 = vset.pattern.permute.xlu0 1
  %2420 = vperm.xlu0 %2419, %v296
  %v2421 = vpop.permute.xlu0 %2420
  %2423 = vset.pattern.permute.xlu0 1
  %2424 = vperm.xlu0 %2423, %v301
  %v2425 = vpop.permute.xlu0 %2424
  %2427 = vset.pattern.permute.xlu0 1
  %2428 = vperm.xlu0 %2427, %v306
  %v2429 = vpop.permute.xlu0 %2428
  %2431 = vset.pattern.permute.xlu0 1
  %2432 = vperm.xlu0 %2431, %v311
  %v2433 = vpop.permute.xlu0 %2432
  %2435 = vset.pattern.permute.xlu0 1
  %2436 = vperm.xlu0 %2435, %v316
  %v2437 = vpop.permute.xlu0 %2436
  %2439 = vset.pattern.permute.xlu0 1
  %2440 = vperm.xlu0 %2439, %v321
  %v2441 = vpop.permute.xlu0 %2440
  %2443 = vset.pattern.permute.xlu0 1
  %2444 = vperm.xlu0 %2443, %v326
  %v2445 = vpop.permute.xlu0 %2444
  %2447 = vset.pattern.permute.xlu0 1
  %2448 = vperm.xlu0 %2447, %v331
  %v2449 = vpop.permute.xlu0 %2448
  %2451 = vset.pattern.permute.xlu0 1
  %2452 = vperm.xlu0 %2451, %v336
  %v2453 = vpop.permute.xlu0 %2452
  %2455 = vset.pattern.permute.xlu0 1
  %2456 = vperm.xlu0 %2455, %v341
  %v2457 = vpop.permute.xlu0 %2456
  %2459 = vset.pattern.permute.xlu0 1
  %2460 = vperm.xlu0 %2459, %v346
  %v2461 = vpop.permute.xlu0 %2460
  %2463 = vset.pattern.permute.xlu0 1
  %2464 = vperm.xlu0 %2463, %v351
  %v2465 = vpop.permute.xlu0 %2464
  %2467 = vset.pattern.permute.xlu0 1
  %2468 = vperm.xlu0 %2467, %v356
  %v2469 = vpop.permute.xlu0 %2468
  %2471 = vset.pattern.permute.xlu0 1
  %2472 = vperm.xlu0 %2471, %v361
  %v2473 = vpop.permute.xlu0 %2472
  %2475 = vset.pattern.permute.xlu0 1
  %2476 = vperm.xlu0 %2475, %v366
  %v2477 = vpop.permute.xlu0 %2476
  %2479 = vset.pattern.permute.xlu0 1
  %2480 = vperm.xlu0 %2479, %v371
  %v2481 = vpop.permute.xlu0 %2480
  %2483 = vset.pattern.permute.xlu0 1
  %2484 = vperm.xlu0 %2483, %v376
  %v2485 = vpop.permute.xlu0 %2484
  %2487 = vset.pattern.permute.xlu0 1
  %2488 = vperm.xlu0 %2487, %v381
  %v2489 = vpop.permute.xlu0 %2488
  %2491 = vset.pattern.permute.xlu0 1
  %2492 = vperm.xlu0 %2491, %v386
  %v2493 = vpop.permute.xlu0 %2492
  %2495 = vset.pattern.permute.xlu0 1
  %2496 = vperm.xlu0 %2495, %v391
  %v2497 = vpop.permute.xlu0 %2496
  %2499 = vset.pattern.permute.xlu0 1
  %2500 = vperm.xlu0 %2499, %v396
  %v2501 = vpop.permute.xlu0 %2500
  %2503 = vset.pattern.permute.xlu0 1
  %2504 = vperm.xlu0 %2503, %v401
  %v2505 = vpop.permute.xlu0 %2504
  %2507 = vset.pattern.permute.xlu0 1
  %2508 = vperm.xlu0 %2507, %v406
  %v2509 = vpop.permute.xlu0 %2508
  %2511 = vset.pattern.permute.xlu0 1
  %2512 = vperm.xlu0 %2511, %v411
  %v2513 = vpop.permute.xlu0 %2512
  %2515 = vset.pattern.permute.xlu0 1
  %2516 = vperm.xlu0 %2515, %v416
  %v2517 = vpop.permute.xlu0 %2516
  %2519 = vset.pattern.permute.xlu0 1
  %2520 = vperm.xlu0 %2519, %v421
  %v2521 = vpop.permute.xlu0 %2520
  %2523 = vset.pattern.permute.xlu0 1
  %2524 = vperm.xlu0 %2523, %v426
  %v2525 = vpop.permute.xlu0 %2524
  %2527 = vset.pattern.permute.xlu0 1
  %2528 = vperm.xlu0 %2527, %v431
  %v2529 = vpop.permute.xlu0 %2528
  %2531 = vset.pattern.permute.xlu0 1
  %2532 = vperm.xlu0 %2531, %v436
  %v2533 = vpop.permute.xlu0 %2532
  %2535 = vset.pattern.permute.xlu0 1
  %2536 = vperm.xlu0 %2535, %v441
  %v2537 = vpop.permute.xlu0 %2536
  %2539 = vset.pattern.permute.xlu0 1
  %2540 = vperm.xlu0 %2539, %v446
  %v2541 = vpop.permute.xlu0 %2540
  %2543 = vset.pattern.permute.xlu0 1
  %2544 = vperm.xlu0 %2543, %v451
  %v2545 = vpop.permute.xlu0 %2544
  %2547 = vset.pattern.permute.xlu0 1
  %2548 = vperm.xlu0 %2547, %v456
  %v2549 = vpop.permute.xlu0 %2548
  %v2551 = vlaneseq
  %v2552 = vshrl.u32 %v2551, 7
  %v2553 = vsub.s32 1, %v2552
  %v2554 = vrot.slane %v687, %v2553
  %v2555 = vlaneseq
  %v2556 = vshrl.u32 %v2555, 7
  %v2557 = vsub.s32 1, %v2556
  %v2558 = vrot.slane %v719, %v2557
  %v2559 = vlaneseq
  %v2560 = vshrl.u32 %v2559, 7
  %v2561 = vsub.s32 1, %v2560
  %v2562 = vrot.slane %v751, %v2561
  %v2563 = vlaneseq
  %v2564 = vshrl.u32 %v2563, 7
  %v2565 = vsub.s32 1, %v2564
  %v2566 = vrot.slane %v783, %v2565
  %v2567 = vlaneseq
  %v2568 = vshrl.u32 %v2567, 7
  %v2569 = vsub.s32 1, %v2568
  %v2570 = vrot.slane %v815, %v2569
  %v2571 = vlaneseq
  %v2572 = vshrl.u32 %v2571, 7
  %v2573 = vsub.s32 1, %v2572
  %v2574 = vrot.slane %v847, %v2573
  %v2575 = vlaneseq
  %v2576 = vshrl.u32 %v2575, 7
  %v2577 = vsub.s32 1, %v2576
  %v2578 = vrot.slane %v879, %v2577
  %v2579 = vlaneseq
  %v2580 = vshrl.u32 %v2579, 7
  %v2581 = vsub.s32 1, %v2580
  %v2582 = vrot.slane %v911, %v2581
  %v2583 = vlaneseq
  %v2584 = vshrl.u32 %v2583, 7
  %v2585 = vsub.s32 1, %v2584
  %v2586 = vrot.slane %v943, %v2585
  %v2587 = vlaneseq
  %v2588 = vshrl.u32 %v2587, 7
  %v2589 = vsub.s32 1, %v2588
  %v2590 = vrot.slane %v975, %v2589
  %v2591 = vlaneseq
  %v2592 = vshrl.u32 %v2591, 7
  %v2593 = vsub.s32 1, %v2592
  %v2594 = vrot.slane %v1007, %v2593
  %v2595 = vlaneseq
  %v2596 = vshrl.u32 %v2595, 7
  %v2597 = vsub.s32 1, %v2596
  %v2598 = vrot.slane %v1039, %v2597
  %v2599 = vlaneseq
  %v2600 = vshrl.u32 %v2599, 7
  %v2601 = vsub.s32 1, %v2600
  %v2602 = vrot.slane %v1071, %v2601
  %v2603 = vlaneseq
  %v2604 = vshrl.u32 %v2603, 7
  %v2605 = vsub.s32 1, %v2604
  %v2606 = vrot.slane %v1103, %v2605
  %v2607 = vlaneseq
  %v2608 = vshrl.u32 %v2607, 7
  %v2609 = vsub.s32 1, %v2608
  %v2610 = vrot.slane %v1135, %v2609
  %v2611 = vlaneseq
  %v2612 = vshrl.u32 %v2611, 7
  %v2613 = vsub.s32 1, %v2612
  %v2614 = vrot.slane %v1167, %v2613
  %v2615 = vlaneseq
  %v2616 = vshrl.u32 %v2615, 7
  %v2617 = vsub.s32 1, %v2616
  %v2618 = vrot.slane %v1199, %v2617
  %v2619 = vlaneseq
  %v2620 = vshrl.u32 %v2619, 7
  %v2621 = vsub.s32 1, %v2620
  %v2622 = vrot.slane %v1231, %v2621
  %v2623 = vlaneseq
  %v2624 = vshrl.u32 %v2623, 7
  %v2625 = vsub.s32 1, %v2624
  %v2626 = vrot.slane %v1263, %v2625
  %v2627 = vlaneseq
  %v2628 = vshrl.u32 %v2627, 7
  %v2629 = vsub.s32 1, %v2628
  %v2630 = vrot.slane %v1295, %v2629
  %v2631 = vmul.f32 %v2393, %v2554
  %v2632 = vmul.f32 %v2397, %v2554
  %v2633 = vmul.f32 %v2401, %v2558
  %v2634 = vmul.f32 %v2405, %v2558
  %v2635 = vmul.f32 %v2409, %v2562
  %v2636 = vmul.f32 %v2413, %v2562
  %v2637 = vmul.f32 %v2417, %v2566
  %v2638 = vmul.f32 %v2421, %v2566
  %v2639 = vmul.f32 %v2425, %v2570
  %v2640 = vmul.f32 %v2429, %v2570
  %v2641 = vmul.f32 %v2433, %v2574
  %v2642 = vmul.f32 %v2437, %v2574
  %v2643 = vmul.f32 %v2441, %v2578
  %v2644 = vmul.f32 %v2445, %v2578
  %v2645 = vmul.f32 %v2449, %v2582
  %v2646 = vmul.f32 %v2453, %v2582
  %v2647 = vmul.f32 %v2457, %v2586
  %v2648 = vmul.f32 %v2461, %v2586
  %v2649 = vmul.f32 %v2465, %v2590
  %v2650 = vmul.f32 %v2469, %v2590
  %v2651 = vmul.f32 %v2473, %v2594
  %v2652 = vmul.f32 %v2477, %v2594
  %v2653 = vmul.f32 %v2481, %v2598
  %v2654 = vmul.f32 %v2485, %v2598
  %v2655 = vmul.f32 %v2489, %v2602
  %v2656 = vmul.f32 %v2493, %v2602
  %v2657 = vmul.f32 %v2497, %v2606
  %v2658 = vmul.f32 %v2501, %v2606
  %v2659 = vmul.f32 %v2505, %v2610
  %v2660 = vmul.f32 %v2509, %v2610
  %v2661 = vmul.f32 %v2513, %v2614
  %v2662 = vmul.f32 %v2517, %v2614
  %v2663 = vmul.f32 %v2521, %v2618
  %v2664 = vmul.f32 %v2525, %v2618
  %v2665 = vmul.f32 %v2529, %v2622
  %v2666 = vmul.f32 %v2533, %v2622
  %v2667 = vmul.f32 %v2537, %v2626
  %v2668 = vmul.f32 %v2541, %v2626
  %v2669 = vmul.f32 %v2545, %v2630
  %v2670 = vmul.f32 %v2549, %v2630
  %v2671 = vadd.f32 %v2351, %v2631
  %v2672 = vadd.f32 %v2352, %v2632
  %v2673 = vadd.f32 %v2353, %v2633
  %v2674 = vadd.f32 %v2354, %v2634
  %v2675 = vadd.f32 %v2355, %v2635
  %v2676 = vadd.f32 %v2356, %v2636
  %v2677 = vadd.f32 %v2357, %v2637
  %v2678 = vadd.f32 %v2358, %v2638
  %v2679 = vadd.f32 %v2359, %v2639
  %v2680 = vadd.f32 %v2360, %v2640
  %v2681 = vadd.f32 %v2361, %v2641
  %v2682 = vadd.f32 %v2362, %v2642
  %v2683 = vadd.f32 %v2363, %v2643
  %v2684 = vadd.f32 %v2364, %v2644
  %v2685 = vadd.f32 %v2365, %v2645
  %v2686 = vadd.f32 %v2366, %v2646
  %v2687 = vadd.f32 %v2367, %v2647
  %v2688 = vadd.f32 %v2368, %v2648
  %v2689 = vadd.f32 %v2369, %v2649
  %v2690 = vadd.f32 %v2370, %v2650
  %v2691 = vadd.f32 %v2371, %v2651
  %v2692 = vadd.f32 %v2372, %v2652
  %v2693 = vadd.f32 %v2373, %v2653
  %v2694 = vadd.f32 %v2374, %v2654
  %v2695 = vadd.f32 %v2375, %v2655
  %v2696 = vadd.f32 %v2376, %v2656
  %v2697 = vadd.f32 %v2377, %v2657
  %v2698 = vadd.f32 %v2378, %v2658
  %v2699 = vadd.f32 %v2379, %v2659
  %v2700 = vadd.f32 %v2380, %v2660
  %v2701 = vadd.f32 %v2381, %v2661
  %v2702 = vadd.f32 %v2382, %v2662
  %v2703 = vadd.f32 %v2383, %v2663
  %v2704 = vadd.f32 %v2384, %v2664
  %v2705 = vadd.f32 %v2385, %v2665
  %v2706 = vadd.f32 %v2386, %v2666
  %v2707 = vadd.f32 %v2387, %v2667
  %v2708 = vadd.f32 %v2388, %v2668
  %v2709 = vadd.f32 %v2389, %v2669
  %v2710 = vadd.f32 %v2390, %v2670
  %vm2711 = vcmask 130048
  %v2712 = vsel %vm2711, %v2671, -inf
  %2713 = vmax.xlane.f32.xlu0 %v2712
  %v2714 = vpop.xlane.xlu0 %2713
  %v2715 = vsel %vm2711, %v2672, -inf
  %2716 = vmax.xlane.f32.xlu0 %v2715
  %v2717 = vpop.xlane.xlu0 %2716
  %v2718 = vsel %vm2711, %v2673, -inf
  %2719 = vmax.xlane.f32.xlu0 %v2718
  %v2720 = vpop.xlane.xlu0 %2719
  %v2721 = vsel %vm2711, %v2674, -inf
  %2722 = vmax.xlane.f32.xlu0 %v2721
  %v2723 = vpop.xlane.xlu0 %2722
  %v2724 = vsel %vm2711, %v2675, -inf
  %2725 = vmax.xlane.f32.xlu0 %v2724
  %v2726 = vpop.xlane.xlu0 %2725
  %v2727 = vsel %vm2711, %v2676, -inf
  %2728 = vmax.xlane.f32.xlu0 %v2727
  %v2729 = vpop.xlane.xlu0 %2728
  %v2730 = vsel %vm2711, %v2677, -inf
  %2731 = vmax.xlane.f32.xlu0 %v2730
  %v2732 = vpop.xlane.xlu0 %2731
  %v2733 = vsel %vm2711, %v2678, -inf
  %2734 = vmax.xlane.f32.xlu0 %v2733
  %v2735 = vpop.xlane.xlu0 %2734
  %v2736 = vsel %vm2711, %v2679, -inf
  %2737 = vmax.xlane.f32.xlu0 %v2736
  %v2738 = vpop.xlane.xlu0 %2737
  %v2739 = vsel %vm2711, %v2680, -inf
  %2740 = vmax.xlane.f32.xlu0 %v2739
  %v2741 = vpop.xlane.xlu0 %2740
  %v2742 = vsel %vm2711, %v2681, -inf
  %2743 = vmax.xlane.f32.xlu0 %v2742
  %v2744 = vpop.xlane.xlu0 %2743
  %v2745 = vsel %vm2711, %v2682, -inf
  %2746 = vmax.xlane.f32.xlu0 %v2745
  %v2747 = vpop.xlane.xlu0 %2746
  %v2748 = vsel %vm2711, %v2683, -inf
  %2749 = vmax.xlane.f32.xlu0 %v2748
  %v2750 = vpop.xlane.xlu0 %2749
  %v2751 = vsel %vm2711, %v2684, -inf
  %2752 = vmax.xlane.f32.xlu0 %v2751
  %v2753 = vpop.xlane.xlu0 %2752
  %v2754 = vsel %vm2711, %v2685, -inf
  %2755 = vmax.xlane.f32.xlu0 %v2754
  %v2756 = vpop.xlane.xlu0 %2755
  %v2757 = vsel %vm2711, %v2686, -inf
  %2758 = vmax.xlane.f32.xlu0 %v2757
  %v2759 = vpop.xlane.xlu0 %2758
  %v2760 = vsel %vm2711, %v2687, -inf
  %2761 = vmax.xlane.f32.xlu0 %v2760
  %v2762 = vpop.xlane.xlu0 %2761
  %v2763 = vsel %vm2711, %v2688, -inf
  %2764 = vmax.xlane.f32.xlu0 %v2763
  %v2765 = vpop.xlane.xlu0 %2764
  %v2766 = vsel %vm2711, %v2689, -inf
  %2767 = vmax.xlane.f32.xlu0 %v2766
  %v2768 = vpop.xlane.xlu0 %2767
  %v2769 = vsel %vm2711, %v2690, -inf
  %2770 = vmax.xlane.f32.xlu0 %v2769
  %v2771 = vpop.xlane.xlu0 %2770
  %v2772 = vsel %vm2711, %v2691, -inf
  %2773 = vmax.xlane.f32.xlu0 %v2772
  %v2774 = vpop.xlane.xlu0 %2773
  %v2775 = vsel %vm2711, %v2692, -inf
  %2776 = vmax.xlane.f32.xlu0 %v2775
  %v2777 = vpop.xlane.xlu0 %2776
  %v2778 = vsel %vm2711, %v2693, -inf
  %2779 = vmax.xlane.f32.xlu0 %v2778
  %v2780 = vpop.xlane.xlu0 %2779
  %v2781 = vsel %vm2711, %v2694, -inf
  %2782 = vmax.xlane.f32.xlu0 %v2781
  %v2783 = vpop.xlane.xlu0 %2782
  %v2784 = vsel %vm2711, %v2695, -inf
  %2785 = vmax.xlane.f32.xlu0 %v2784
  %v2786 = vpop.xlane.xlu0 %2785
  %v2787 = vsel %vm2711, %v2696, -inf
  %2788 = vmax.xlane.f32.xlu0 %v2787
  %v2789 = vpop.xlane.xlu0 %2788
  %v2790 = vsel %vm2711, %v2697, -inf
  %2791 = vmax.xlane.f32.xlu0 %v2790
  %v2792 = vpop.xlane.xlu0 %2791
  %v2793 = vsel %vm2711, %v2698, -inf
  %2794 = vmax.xlane.f32.xlu0 %v2793
  %v2795 = vpop.xlane.xlu0 %2794
  %v2796 = vsel %vm2711, %v2699, -inf
  %2797 = vmax.xlane.f32.xlu0 %v2796
  %v2798 = vpop.xlane.xlu0 %2797
  %v2799 = vsel %vm2711, %v2700, -inf
  %2800 = vmax.xlane.f32.xlu0 %v2799
  %v2801 = vpop.xlane.xlu0 %2800
  %v2802 = vsel %vm2711, %v2701, -inf
  %2803 = vmax.xlane.f32.xlu0 %v2802
  %v2804 = vpop.xlane.xlu0 %2803
  %v2805 = vsel %vm2711, %v2702, -inf
  %2806 = vmax.xlane.f32.xlu0 %v2805
  %v2807 = vpop.xlane.xlu0 %2806
  %v2808 = vsel %vm2711, %v2703, -inf
  %2809 = vmax.xlane.f32.xlu0 %v2808
  %v2810 = vpop.xlane.xlu0 %2809
  %v2811 = vsel %vm2711, %v2704, -inf
  %2812 = vmax.xlane.f32.xlu0 %v2811
  %v2813 = vpop.xlane.xlu0 %2812
  %v2814 = vsel %vm2711, %v2705, -inf
  %2815 = vmax.xlane.f32.xlu0 %v2814
  %v2816 = vpop.xlane.xlu0 %2815
  %v2817 = vsel %vm2711, %v2706, -inf
  %2818 = vmax.xlane.f32.xlu0 %v2817
  %v2819 = vpop.xlane.xlu0 %2818
  %v2820 = vsel %vm2711, %v2707, -inf
  %2821 = vmax.xlane.f32.xlu0 %v2820
  %v2822 = vpop.xlane.xlu0 %2821
  %v2823 = vsel %vm2711, %v2708, -inf
  %2824 = vmax.xlane.f32.xlu0 %v2823
  %v2825 = vpop.xlane.xlu0 %2824
  %v2826 = vsel %vm2711, %v2709, -inf
  %2827 = vmax.xlane.f32.xlu0 %v2826
  %v2828 = vpop.xlane.xlu0 %2827
  %v2829 = vsel %vm2711, %v2710, -inf
  %2830 = vmax.xlane.f32.xlu0 %v2829
  %v2831 = vpop.xlane.xlu0 %2830
  %v2832 = vsub.f32 %v2671, %v2714
  %v2833 = vsub.f32 %v2672, %v2717
  %v2834 = vsub.f32 %v2673, %v2720
  %v2835 = vsub.f32 %v2674, %v2723
  %v2836 = vsub.f32 %v2675, %v2726
  %v2837 = vsub.f32 %v2676, %v2729
  %v2838 = vsub.f32 %v2677, %v2732
  %v2839 = vsub.f32 %v2678, %v2735
  %v2840 = vsub.f32 %v2679, %v2738
  %v2841 = vsub.f32 %v2680, %v2741
  %v2842 = vsub.f32 %v2681, %v2744
  %v2843 = vsub.f32 %v2682, %v2747
  %v2844 = vsub.f32 %v2683, %v2750
  %v2845 = vsub.f32 %v2684, %v2753
  %v2846 = vsub.f32 %v2685, %v2756
  %v2847 = vsub.f32 %v2686, %v2759
  %v2848 = vsub.f32 %v2687, %v2762
  %v2849 = vsub.f32 %v2688, %v2765
  %v2850 = vsub.f32 %v2689, %v2768
  %v2851 = vsub.f32 %v2690, %v2771
  %v2852 = vsub.f32 %v2691, %v2774
  %v2853 = vsub.f32 %v2692, %v2777
  %v2854 = vsub.f32 %v2693, %v2780
  %v2855 = vsub.f32 %v2694, %v2783
  %v2856 = vsub.f32 %v2695, %v2786
  %v2857 = vsub.f32 %v2696, %v2789
  %v2858 = vsub.f32 %v2697, %v2792
  %v2859 = vsub.f32 %v2698, %v2795
  %v2860 = vsub.f32 %v2699, %v2798
  %v2861 = vsub.f32 %v2700, %v2801
  %v2862 = vsub.f32 %v2701, %v2804
  %v2863 = vsub.f32 %v2702, %v2807
  %v2864 = vsub.f32 %v2703, %v2810
  %v2865 = vsub.f32 %v2704, %v2813
  %v2866 = vsub.f32 %v2705, %v2816
  %v2867 = vsub.f32 %v2706, %v2819
  %v2868 = vsub.f32 %v2707, %v2822
  %v2869 = vsub.f32 %v2708, %v2825
  %v2870 = vsub.f32 %v2709, %v2828
  %v2871 = vsub.f32 %v2710, %v2831
  %v2872 = vmul.f32 %v2832, 1.442695
  %v2873 = vpow.pop %v2872
  %v2874 = vmul.f32 %v2833, 1.442695
  %v2875 = vpow.pop %v2874
  %v2876 = vmul.f32 %v2834, 1.442695
  %v2877 = vpow.pop %v2876
  %v2878 = vmul.f32 %v2835, 1.442695
  %v2879 = vpow.pop %v2878
  %v2880 = vmul.f32 %v2836, 1.442695
  %v2881 = vpow.pop %v2880
  %v2882 = vmul.f32 %v2837, 1.442695
  %v2883 = vpow.pop %v2882
  %v2884 = vmul.f32 %v2838, 1.442695
  %v2885 = vpow.pop %v2884
  %v2886 = vmul.f32 %v2839, 1.442695
  %v2887 = vpow.pop %v2886
  %v2888 = vmul.f32 %v2840, 1.442695
  %v2889 = vpow.pop %v2888
  %v2890 = vmul.f32 %v2841, 1.442695
  %v2891 = vpow.pop %v2890
  %v2892 = vmul.f32 %v2842, 1.442695
  %v2893 = vpow.pop %v2892
  %v2894 = vmul.f32 %v2843, 1.442695
  %v2895 = vpow.pop %v2894
  %v2896 = vmul.f32 %v2844, 1.442695
  %v2897 = vpow.pop %v2896
  %v2898 = vmul.f32 %v2845, 1.442695
  %v2899 = vpow.pop %v2898
  %v2900 = vmul.f32 %v2846, 1.442695
  %v2901 = vpow.pop %v2900
  %v2902 = vmul.f32 %v2847, 1.442695
  %v2903 = vpow.pop %v2902
  %v2904 = vmul.f32 %v2848, 1.442695
  %v2905 = vpow.pop %v2904
  %v2906 = vmul.f32 %v2849, 1.442695
  %v2907 = vpow.pop %v2906
  %v2908 = vmul.f32 %v2850, 1.442695
  %v2909 = vpow.pop %v2908
  %v2910 = vmul.f32 %v2851, 1.442695
  %v2911 = vpow.pop %v2910
  %v2912 = vmul.f32 %v2852, 1.442695
  %v2913 = vpow.pop %v2912
  %v2914 = vmul.f32 %v2853, 1.442695
  %v2915 = vpow.pop %v2914
  %v2916 = vmul.f32 %v2854, 1.442695
  %v2917 = vpow.pop %v2916
  %v2918 = vmul.f32 %v2855, 1.442695
  %v2919 = vpow.pop %v2918
  %v2920 = vmul.f32 %v2856, 1.442695
  %v2921 = vpow.pop %v2920
  %v2922 = vmul.f32 %v2857, 1.442695
  %v2923 = vpow.pop %v2922
  %v2924 = vmul.f32 %v2858, 1.442695
  %v2925 = vpow.pop %v2924
  %v2926 = vmul.f32 %v2859, 1.442695
  %v2927 = vpow.pop %v2926
  %v2928 = vmul.f32 %v2860, 1.442695
  %v2929 = vpow.pop %v2928
  %v2930 = vmul.f32 %v2861, 1.442695
  %v2931 = vpow.pop %v2930
  %v2932 = vmul.f32 %v2862, 1.442695
  %v2933 = vpow.pop %v2932
  %v2934 = vmul.f32 %v2863, 1.442695
  %v2935 = vpow.pop %v2934
  %v2936 = vmul.f32 %v2864, 1.442695
  %v2937 = vpow.pop %v2936
  %v2938 = vmul.f32 %v2865, 1.442695
  %v2939 = vpow.pop %v2938
  %v2940 = vmul.f32 %v2866, 1.442695
  %v2941 = vpow.pop %v2940
  %v2942 = vmul.f32 %v2867, 1.442695
  %v2943 = vpow.pop %v2942
  %v2944 = vmul.f32 %v2868, 1.442695
  %v2945 = vpow.pop %v2944
  %v2946 = vmul.f32 %v2869, 1.442695
  %v2947 = vpow.pop %v2946
  %v2948 = vmul.f32 %v2870, 1.442695
  %v2949 = vpow.pop %v2948
  %v2950 = vmul.f32 %v2871, 1.442695
  %v2951 = vpow.pop %v2950
  %v2952 = vsel %vm2711, %v2873, 0.0
  %2953 = vadd.xlane.f32.xlu0 %v2952
  %v2954 = vpop.xlane.xlu0 %2953
  %v2955 = vsel %vm2711, %v2875, 0.0
  %2956 = vadd.xlane.f32.xlu0 %v2955
  %v2957 = vpop.xlane.xlu0 %2956
  %v2958 = vsel %vm2711, %v2877, 0.0
  %2959 = vadd.xlane.f32.xlu0 %v2958
  %v2960 = vpop.xlane.xlu0 %2959
  %v2961 = vsel %vm2711, %v2879, 0.0
  %2962 = vadd.xlane.f32.xlu0 %v2961
  %v2963 = vpop.xlane.xlu0 %2962
  %v2964 = vsel %vm2711, %v2881, 0.0
  %2965 = vadd.xlane.f32.xlu0 %v2964
  %v2966 = vpop.xlane.xlu0 %2965
  %v2967 = vsel %vm2711, %v2883, 0.0
  %2968 = vadd.xlane.f32.xlu0 %v2967
  %v2969 = vpop.xlane.xlu0 %2968
  %v2970 = vsel %vm2711, %v2885, 0.0
  %2971 = vadd.xlane.f32.xlu0 %v2970
  %v2972 = vpop.xlane.xlu0 %2971
  %v2973 = vsel %vm2711, %v2887, 0.0
  %2974 = vadd.xlane.f32.xlu0 %v2973
  %v2975 = vpop.xlane.xlu0 %2974
  %v2976 = vsel %vm2711, %v2889, 0.0
  %2977 = vadd.xlane.f32.xlu0 %v2976
  %v2978 = vpop.xlane.xlu0 %2977
  %v2979 = vsel %vm2711, %v2891, 0.0
  %2980 = vadd.xlane.f32.xlu0 %v2979
  %v2981 = vpop.xlane.xlu0 %2980
  %v2982 = vsel %vm2711, %v2893, 0.0
  %2983 = vadd.xlane.f32.xlu0 %v2982
  %v2984 = vpop.xlane.xlu0 %2983
  %v2985 = vsel %vm2711, %v2895, 0.0
  %2986 = vadd.xlane.f32.xlu0 %v2985
  %v2987 = vpop.xlane.xlu0 %2986
  %v2988 = vsel %vm2711, %v2897, 0.0
  %2989 = vadd.xlane.f32.xlu0 %v2988
  %v2990 = vpop.xlane.xlu0 %2989
  %v2991 = vsel %vm2711, %v2899, 0.0
  %2992 = vadd.xlane.f32.xlu0 %v2991
  %v2993 = vpop.xlane.xlu0 %2992
  %v2994 = vsel %vm2711, %v2901, 0.0
  %2995 = vadd.xlane.f32.xlu0 %v2994
  %v2996 = vpop.xlane.xlu0 %2995
  %v2997 = vsel %vm2711, %v2903, 0.0
  %2998 = vadd.xlane.f32.xlu0 %v2997
  %v2999 = vpop.xlane.xlu0 %2998
  %v3000 = vsel %vm2711, %v2905, 0.0
  %3001 = vadd.xlane.f32.xlu0 %v3000
  %v3002 = vpop.xlane.xlu0 %3001
  %v3003 = vsel %vm2711, %v2907, 0.0
  %3004 = vadd.xlane.f32.xlu0 %v3003
  %v3005 = vpop.xlane.xlu0 %3004
  %v3006 = vsel %vm2711, %v2909, 0.0
  %3007 = vadd.xlane.f32.xlu0 %v3006
  %v3008 = vpop.xlane.xlu0 %3007
  %v3009 = vsel %vm2711, %v2911, 0.0
  %3010 = vadd.xlane.f32.xlu0 %v3009
  %v3011 = vpop.xlane.xlu0 %3010
  %v3012 = vsel %vm2711, %v2913, 0.0
  %3013 = vadd.xlane.f32.xlu0 %v3012
  %v3014 = vpop.xlane.xlu0 %3013
  %v3015 = vsel %vm2711, %v2915, 0.0
  %3016 = vadd.xlane.f32.xlu0 %v3015
  %v3017 = vpop.xlane.xlu0 %3016
  %v3018 = vsel %vm2711, %v2917, 0.0
  %3019 = vadd.xlane.f32.xlu0 %v3018
  %v3020 = vpop.xlane.xlu0 %3019
  %v3021 = vsel %vm2711, %v2919, 0.0
  %3022 = vadd.xlane.f32.xlu0 %v3021
  %v3023 = vpop.xlane.xlu0 %3022
  %v3024 = vsel %vm2711, %v2921, 0.0
  %3025 = vadd.xlane.f32.xlu0 %v3024
  %v3026 = vpop.xlane.xlu0 %3025
  %v3027 = vsel %vm2711, %v2923, 0.0
  %3028 = vadd.xlane.f32.xlu0 %v3027
  %v3029 = vpop.xlane.xlu0 %3028
  %v3030 = vsel %vm2711, %v2925, 0.0
  %3031 = vadd.xlane.f32.xlu0 %v3030
  %v3032 = vpop.xlane.xlu0 %3031
  %v3033 = vsel %vm2711, %v2927, 0.0
  %3034 = vadd.xlane.f32.xlu0 %v3033
  %v3035 = vpop.xlane.xlu0 %3034
  %v3036 = vsel %vm2711, %v2929, 0.0
  %3037 = vadd.xlane.f32.xlu0 %v3036
  %v3038 = vpop.xlane.xlu0 %3037
  %v3039 = vsel %vm2711, %v2931, 0.0
  %3040 = vadd.xlane.f32.xlu0 %v3039
  %v3041 = vpop.xlane.xlu0 %3040
  %v3042 = vsel %vm2711, %v2933, 0.0
  %3043 = vadd.xlane.f32.xlu0 %v3042
  %v3044 = vpop.xlane.xlu0 %3043
  %v3045 = vsel %vm2711, %v2935, 0.0
  %3046 = vadd.xlane.f32.xlu0 %v3045
  %v3047 = vpop.xlane.xlu0 %3046
  %v3048 = vsel %vm2711, %v2937, 0.0
  %3049 = vadd.xlane.f32.xlu0 %v3048
  %v3050 = vpop.xlane.xlu0 %3049
  %v3051 = vsel %vm2711, %v2939, 0.0
  %3052 = vadd.xlane.f32.xlu0 %v3051
  %v3053 = vpop.xlane.xlu0 %3052
  %v3054 = vsel %vm2711, %v2941, 0.0
  %3055 = vadd.xlane.f32.xlu0 %v3054
  %v3056 = vpop.xlane.xlu0 %3055
  %v3057 = vsel %vm2711, %v2943, 0.0
  %3058 = vadd.xlane.f32.xlu0 %v3057
  %v3059 = vpop.xlane.xlu0 %3058
  %v3060 = vsel %vm2711, %v2945, 0.0
  %3061 = vadd.xlane.f32.xlu0 %v3060
  %v3062 = vpop.xlane.xlu0 %3061
  %v3063 = vsel %vm2711, %v2947, 0.0
  %3064 = vadd.xlane.f32.xlu0 %v3063
  %v3065 = vpop.xlane.xlu0 %3064
  %v3066 = vsel %vm2711, %v2949, 0.0
  %3067 = vadd.xlane.f32.xlu0 %v3066
  %v3068 = vpop.xlane.xlu0 %3067
  %v3069 = vsel %vm2711, %v2951, 0.0
  %3070 = vadd.xlane.f32.xlu0 %v3069
  %v3071 = vpop.xlane.xlu0 %3070
  %v3072 = vrcp.pop %v2954
  %v3073 = vrcp.pop %v2957
  %v3074 = vrcp.pop %v2960
  %v3075 = vrcp.pop %v2963
  %v3076 = vrcp.pop %v2966
  %v3077 = vrcp.pop %v2969
  %v3078 = vrcp.pop %v2972
  %v3079 = vrcp.pop %v2975
  %v3080 = vrcp.pop %v2978
  %v3081 = vrcp.pop %v2981
  %v3082 = vrcp.pop %v2984
  %v3083 = vrcp.pop %v2987
  %v3084 = vrcp.pop %v2990
  %v3085 = vrcp.pop %v2993
  %v3086 = vrcp.pop %v2996
  %v3087 = vrcp.pop %v2999
  %v3088 = vrcp.pop %v3002
  %v3089 = vrcp.pop %v3005
  %v3090 = vrcp.pop %v3008
  %v3091 = vrcp.pop %v3011
  %v3092 = vrcp.pop %v3014
  %v3093 = vrcp.pop %v3017
  %v3094 = vrcp.pop %v3020
  %v3095 = vrcp.pop %v3023
  %v3096 = vrcp.pop %v3026
  %v3097 = vrcp.pop %v3029
  %v3098 = vrcp.pop %v3032
  %v3099 = vrcp.pop %v3035
  %v3100 = vrcp.pop %v3038
  %v3101 = vrcp.pop %v3041
  %v3102 = vrcp.pop %v3044
  %v3103 = vrcp.pop %v3047
  %v3104 = vrcp.pop %v3050
  %v3105 = vrcp.pop %v3053
  %v3106 = vrcp.pop %v3056
  %v3107 = vrcp.pop %v3059
  %v3108 = vrcp.pop %v3062
  %v3109 = vrcp.pop %v3065
  %v3110 = vrcp.pop %v3068
  %v3111 = vrcp.pop %v3071
  %v3112 = vmul.f32 %v2873, %v3072
  %v3113 = vmul.f32 %v2875, %v3073
  %v3114 = vmul.f32 %v2877, %v3074
  %v3115 = vmul.f32 %v2879, %v3075
  %v3116 = vmul.f32 %v2881, %v3076
  %v3117 = vmul.f32 %v2883, %v3077
  %v3118 = vmul.f32 %v2885, %v3078
  %v3119 = vmul.f32 %v2887, %v3079
  %v3120 = vmul.f32 %v2889, %v3080
  %v3121 = vmul.f32 %v2891, %v3081
  %v3122 = vmul.f32 %v2893, %v3082
  %v3123 = vmul.f32 %v2895, %v3083
  %v3124 = vmul.f32 %v2897, %v3084
  %v3125 = vmul.f32 %v2899, %v3085
  %v3126 = vmul.f32 %v2901, %v3086
  %v3127 = vmul.f32 %v2903, %v3087
  %v3128 = vmul.f32 %v2905, %v3088
  %v3129 = vmul.f32 %v2907, %v3089
  %v3130 = vmul.f32 %v2909, %v3090
  %v3131 = vmul.f32 %v2911, %v3091
  %v3132 = vmul.f32 %v2913, %v3092
  %v3133 = vmul.f32 %v2915, %v3093
  %v3134 = vmul.f32 %v2917, %v3094
  %v3135 = vmul.f32 %v2919, %v3095
  %v3136 = vmul.f32 %v2921, %v3096
  %v3137 = vmul.f32 %v2923, %v3097
  %v3138 = vmul.f32 %v2925, %v3098
  %v3139 = vmul.f32 %v2927, %v3099
  %v3140 = vmul.f32 %v2929, %v3100
  %v3141 = vmul.f32 %v2931, %v3101
  %v3142 = vmul.f32 %v2933, %v3102
  %v3143 = vmul.f32 %v2935, %v3103
  %v3144 = vmul.f32 %v2937, %v3104
  %v3145 = vmul.f32 %v2939, %v3105
  %v3146 = vmul.f32 %v2941, %v3106
  %v3147 = vmul.f32 %v2943, %v3107
  %v3148 = vmul.f32 %v2945, %v3108
  %v3149 = vmul.f32 %v2947, %v3109
  %v3150 = vmul.f32 %v2949, %v3110
  %v3151 = vmul.f32 %v2951, %v3111
  %v3152 = vlaneseq
  %v3153 = vshrl.u32 %v3152, 7
  %v3154 = vsub.s32 0, %v3153
  %v3155 = vrot.slane %v1487, %v3154
  %v3156 = vlaneseq
  %v3157 = vshrl.u32 %v3156, 7
  %v3158 = vsub.s32 0, %v3157
  %v3159 = vrot.slane %v1519, %v3158
  %v3160 = vlaneseq
  %v3161 = vshrl.u32 %v3160, 7
  %v3162 = vsub.s32 0, %v3161
  %v3163 = vrot.slane %v1551, %v3162
  %v3164 = vlaneseq
  %v3165 = vshrl.u32 %v3164, 7
  %v3166 = vsub.s32 0, %v3165
  %v3167 = vrot.slane %v1583, %v3166
  %v3168 = vlaneseq
  %v3169 = vshrl.u32 %v3168, 7
  %v3170 = vsub.s32 0, %v3169
  %v3171 = vrot.slane %v1615, %v3170
  %v3172 = vlaneseq
  %v3173 = vshrl.u32 %v3172, 7
  %v3174 = vsub.s32 0, %v3173
  %v3175 = vrot.slane %v1647, %v3174
  %v3176 = vlaneseq
  %v3177 = vshrl.u32 %v3176, 7
  %v3178 = vsub.s32 0, %v3177
  %v3179 = vrot.slane %v1679, %v3178
  %v3180 = vlaneseq
  %v3181 = vshrl.u32 %v3180, 7
  %v3182 = vsub.s32 0, %v3181
  %v3183 = vrot.slane %v1711, %v3182
  %v3184 = vlaneseq
  %v3185 = vshrl.u32 %v3184, 7
  %v3186 = vsub.s32 0, %v3185
  %v3187 = vrot.slane %v1743, %v3186
  %v3188 = vlaneseq
  %v3189 = vshrl.u32 %v3188, 7
  %v3190 = vsub.s32 0, %v3189
  %v3191 = vrot.slane %v1775, %v3190
  %v3192 = vlaneseq
  %v3193 = vshrl.u32 %v3192, 7
  %v3194 = vsub.s32 0, %v3193
  %v3195 = vrot.slane %v1807, %v3194
  %v3196 = vlaneseq
  %v3197 = vshrl.u32 %v3196, 7
  %v3198 = vsub.s32 0, %v3197
  %v3199 = vrot.slane %v1839, %v3198
  %v3200 = vlaneseq
  %v3201 = vshrl.u32 %v3200, 7
  %v3202 = vsub.s32 0, %v3201
  %v3203 = vrot.slane %v1871, %v3202
  %v3204 = vlaneseq
  %v3205 = vshrl.u32 %v3204, 7
  %v3206 = vsub.s32 0, %v3205
  %v3207 = vrot.slane %v1903, %v3206
  %v3208 = vlaneseq
  %v3209 = vshrl.u32 %v3208, 7
  %v3210 = vsub.s32 0, %v3209
  %v3211 = vrot.slane %v1935, %v3210
  %v3212 = vlaneseq
  %v3213 = vshrl.u32 %v3212, 7
  %v3214 = vsub.s32 0, %v3213
  %v3215 = vrot.slane %v1967, %v3214
  %v3216 = vlaneseq
  %v3217 = vshrl.u32 %v3216, 7
  %v3218 = vsub.s32 0, %v3217
  %v3219 = vrot.slane %v1999, %v3218
  %v3220 = vlaneseq
  %v3221 = vshrl.u32 %v3220, 7
  %v3222 = vsub.s32 0, %v3221
  %v3223 = vrot.slane %v2031, %v3222
  %v3224 = vlaneseq
  %v3225 = vshrl.u32 %v3224, 7
  %v3226 = vsub.s32 0, %v3225
  %v3227 = vrot.slane %v2063, %v3226
  %v3228 = vlaneseq
  %v3229 = vshrl.u32 %v3228, 7
  %v3230 = vsub.s32 0, %v3229
  %v3231 = vrot.slane %v2095, %v3230
  %v3232 = vmul.f32 %v3112, %v3155
  %v3233 = vmul.f32 %v3113, %v3155
  %v3234 = vmul.f32 %v3114, %v3159
  %v3235 = vmul.f32 %v3115, %v3159
  %v3236 = vmul.f32 %v3116, %v3163
  %v3237 = vmul.f32 %v3117, %v3163
  %v3238 = vmul.f32 %v3118, %v3167
  %v3239 = vmul.f32 %v3119, %v3167
  %v3240 = vmul.f32 %v3120, %v3171
  %v3241 = vmul.f32 %v3121, %v3171
  %v3242 = vmul.f32 %v3122, %v3175
  %v3243 = vmul.f32 %v3123, %v3175
  %v3244 = vmul.f32 %v3124, %v3179
  %v3245 = vmul.f32 %v3125, %v3179
  %v3246 = vmul.f32 %v3126, %v3183
  %v3247 = vmul.f32 %v3127, %v3183
  %v3248 = vmul.f32 %v3128, %v3187
  %v3249 = vmul.f32 %v3129, %v3187
  %v3250 = vmul.f32 %v3130, %v3191
  %v3251 = vmul.f32 %v3131, %v3191
  %v3252 = vmul.f32 %v3132, %v3195
  %v3253 = vmul.f32 %v3133, %v3195
  %v3254 = vmul.f32 %v3134, %v3199
  %v3255 = vmul.f32 %v3135, %v3199
  %v3256 = vmul.f32 %v3136, %v3203
  %v3257 = vmul.f32 %v3137, %v3203
  %v3258 = vmul.f32 %v3138, %v3207
  %v3259 = vmul.f32 %v3139, %v3207
  %v3260 = vmul.f32 %v3140, %v3211
  %v3261 = vmul.f32 %v3141, %v3211
  %v3262 = vmul.f32 %v3142, %v3215
  %v3263 = vmul.f32 %v3143, %v3215
  %v3264 = vmul.f32 %v3144, %v3219
  %v3265 = vmul.f32 %v3145, %v3219
  %v3266 = vmul.f32 %v3146, %v3223
  %v3267 = vmul.f32 %v3147, %v3223
  %v3268 = vmul.f32 %v3148, %v3227
  %v3269 = vmul.f32 %v3149, %v3227
  %v3270 = vmul.f32 %v3150, %v3231
  %v3271 = vmul.f32 %v3151, %v3231
  %v3272 = vsel %vm2711, %v3232, 0.0
  %3273 = vadd.xlane.f32.xlu0 %v3272
  %v3274 = vpop.xlane.xlu0 %3273
  %v3275 = vsel %vm2711, %v3233, 0.0
  %3276 = vadd.xlane.f32.xlu0 %v3275
  %v3277 = vpop.xlane.xlu0 %3276
  %v3278 = vsel %vm2711, %v3234, 0.0
  %3279 = vadd.xlane.f32.xlu0 %v3278
  %v3280 = vpop.xlane.xlu0 %3279
  %v3281 = vsel %vm2711, %v3235, 0.0
  %3282 = vadd.xlane.f32.xlu0 %v3281
  %v3283 = vpop.xlane.xlu0 %3282
  %v3284 = vsel %vm2711, %v3236, 0.0
  %3285 = vadd.xlane.f32.xlu0 %v3284
  %v3286 = vpop.xlane.xlu0 %3285
  %v3287 = vsel %vm2711, %v3237, 0.0
  %3288 = vadd.xlane.f32.xlu0 %v3287
  %v3289 = vpop.xlane.xlu0 %3288
  %v3290 = vsel %vm2711, %v3238, 0.0
  %3291 = vadd.xlane.f32.xlu0 %v3290
  %v3292 = vpop.xlane.xlu0 %3291
  %v3293 = vsel %vm2711, %v3239, 0.0
  %3294 = vadd.xlane.f32.xlu0 %v3293
  %v3295 = vpop.xlane.xlu0 %3294
  %v3296 = vsel %vm2711, %v3240, 0.0
  %3297 = vadd.xlane.f32.xlu0 %v3296
  %v3298 = vpop.xlane.xlu0 %3297
  %v3299 = vsel %vm2711, %v3241, 0.0
  %3300 = vadd.xlane.f32.xlu0 %v3299
  %v3301 = vpop.xlane.xlu0 %3300
  %v3302 = vsel %vm2711, %v3242, 0.0
  %3303 = vadd.xlane.f32.xlu0 %v3302
  %v3304 = vpop.xlane.xlu0 %3303
  %v3305 = vsel %vm2711, %v3243, 0.0
  %3306 = vadd.xlane.f32.xlu0 %v3305
  %v3307 = vpop.xlane.xlu0 %3306
  %v3308 = vsel %vm2711, %v3244, 0.0
  %3309 = vadd.xlane.f32.xlu0 %v3308
  %v3310 = vpop.xlane.xlu0 %3309
  %v3311 = vsel %vm2711, %v3245, 0.0
  %3312 = vadd.xlane.f32.xlu0 %v3311
  %v3313 = vpop.xlane.xlu0 %3312
  %v3314 = vsel %vm2711, %v3246, 0.0
  %3315 = vadd.xlane.f32.xlu0 %v3314
  %v3316 = vpop.xlane.xlu0 %3315
  %v3317 = vsel %vm2711, %v3247, 0.0
  %3318 = vadd.xlane.f32.xlu0 %v3317
  %v3319 = vpop.xlane.xlu0 %3318
  %v3320 = vsel %vm2711, %v3248, 0.0
  %3321 = vadd.xlane.f32.xlu0 %v3320
  %v3322 = vpop.xlane.xlu0 %3321
  %v3323 = vsel %vm2711, %v3249, 0.0
  %3324 = vadd.xlane.f32.xlu0 %v3323
  %v3325 = vpop.xlane.xlu0 %3324
  %v3326 = vsel %vm2711, %v3250, 0.0
  %3327 = vadd.xlane.f32.xlu0 %v3326
  %v3328 = vpop.xlane.xlu0 %3327
  %v3329 = vsel %vm2711, %v3251, 0.0
  %3330 = vadd.xlane.f32.xlu0 %v3329
  %v3331 = vpop.xlane.xlu0 %3330
  %v3332 = vsel %vm2711, %v3252, 0.0
  %3333 = vadd.xlane.f32.xlu0 %v3332
  %v3334 = vpop.xlane.xlu0 %3333
  %v3335 = vsel %vm2711, %v3253, 0.0
  %3336 = vadd.xlane.f32.xlu0 %v3335
  %v3337 = vpop.xlane.xlu0 %3336
  %v3338 = vsel %vm2711, %v3254, 0.0
  %3339 = vadd.xlane.f32.xlu0 %v3338
  %v3340 = vpop.xlane.xlu0 %3339
  %v3341 = vsel %vm2711, %v3255, 0.0
  %3342 = vadd.xlane.f32.xlu0 %v3341
  %v3343 = vpop.xlane.xlu0 %3342
  %v3344 = vsel %vm2711, %v3256, 0.0
  %3345 = vadd.xlane.f32.xlu0 %v3344
  %v3346 = vpop.xlane.xlu0 %3345
  %v3347 = vsel %vm2711, %v3257, 0.0
  %3348 = vadd.xlane.f32.xlu0 %v3347
  %v3349 = vpop.xlane.xlu0 %3348
  %v3350 = vsel %vm2711, %v3258, 0.0
  %3351 = vadd.xlane.f32.xlu0 %v3350
  %v3352 = vpop.xlane.xlu0 %3351
  %v3353 = vsel %vm2711, %v3259, 0.0
  %3354 = vadd.xlane.f32.xlu0 %v3353
  %v3355 = vpop.xlane.xlu0 %3354
  %v3356 = vsel %vm2711, %v3260, 0.0
  %3357 = vadd.xlane.f32.xlu0 %v3356
  %v3358 = vpop.xlane.xlu0 %3357
  %v3359 = vsel %vm2711, %v3261, 0.0
  %3360 = vadd.xlane.f32.xlu0 %v3359
  %v3361 = vpop.xlane.xlu0 %3360
  %v3362 = vsel %vm2711, %v3262, 0.0
  %3363 = vadd.xlane.f32.xlu0 %v3362
  %v3364 = vpop.xlane.xlu0 %3363
  %v3365 = vsel %vm2711, %v3263, 0.0
  %3366 = vadd.xlane.f32.xlu0 %v3365
  %v3367 = vpop.xlane.xlu0 %3366
  %v3368 = vsel %vm2711, %v3264, 0.0
  %3369 = vadd.xlane.f32.xlu0 %v3368
  %v3370 = vpop.xlane.xlu0 %3369
  %v3371 = vsel %vm2711, %v3265, 0.0
  %3372 = vadd.xlane.f32.xlu0 %v3371
  %v3373 = vpop.xlane.xlu0 %3372
  %v3374 = vsel %vm2711, %v3266, 0.0
  %3375 = vadd.xlane.f32.xlu0 %v3374
  %v3376 = vpop.xlane.xlu0 %3375
  %v3377 = vsel %vm2711, %v3267, 0.0
  %3378 = vadd.xlane.f32.xlu0 %v3377
  %v3379 = vpop.xlane.xlu0 %3378
  %v3380 = vsel %vm2711, %v3268, 0.0
  %3381 = vadd.xlane.f32.xlu0 %v3380
  %v3382 = vpop.xlane.xlu0 %3381
  %v3383 = vsel %vm2711, %v3269, 0.0
  %3384 = vadd.xlane.f32.xlu0 %v3383
  %v3385 = vpop.xlane.xlu0 %3384
  %v3386 = vsel %vm2711, %v3270, 0.0
  %3387 = vadd.xlane.f32.xlu0 %v3386
  %v3388 = vpop.xlane.xlu0 %3387
  %v3389 = vsel %vm2711, %v3271, 0.0
  %3390 = vadd.xlane.f32.xlu0 %v3389
  %v3391 = vpop.xlane.xlu0 %3390
  %v3392 = vadd.f32 %v3274, 0.0
  %v3393 = vadd.f32 %v3277, 0.0
  %v3394 = vadd.f32 %v3280, 0.0
  %v3395 = vadd.f32 %v3283, 0.0
  %v3396 = vadd.f32 %v3286, 0.0
  %v3397 = vadd.f32 %v3289, 0.0
  %v3398 = vadd.f32 %v3292, 0.0
  %v3399 = vadd.f32 %v3295, 0.0
  %v3400 = vadd.f32 %v3298, 0.0
  %v3401 = vadd.f32 %v3301, 0.0
  %v3402 = vadd.f32 %v3304, 0.0
  %v3403 = vadd.f32 %v3307, 0.0
  %v3404 = vadd.f32 %v3310, 0.0
  %v3405 = vadd.f32 %v3313, 0.0
  %v3406 = vadd.f32 %v3316, 0.0
  %v3407 = vadd.f32 %v3319, 0.0
  %v3408 = vadd.f32 %v3322, 0.0
  %v3409 = vadd.f32 %v3325, 0.0
  %v3410 = vadd.f32 %v3328, 0.0
  %v3411 = vadd.f32 %v3331, 0.0
  %v3412 = vadd.f32 %v3334, 0.0
  %v3413 = vadd.f32 %v3337, 0.0
  %v3414 = vadd.f32 %v3340, 0.0
  %v3415 = vadd.f32 %v3343, 0.0
  %v3416 = vadd.f32 %v3346, 0.0
  %v3417 = vadd.f32 %v3349, 0.0
  %v3418 = vadd.f32 %v3352, 0.0
  %v3419 = vadd.f32 %v3355, 0.0
  %v3420 = vadd.f32 %v3358, 0.0
  %v3421 = vadd.f32 %v3361, 0.0
  %v3422 = vadd.f32 %v3364, 0.0
  %v3423 = vadd.f32 %v3367, 0.0
  %v3424 = vadd.f32 %v3370, 0.0
  %v3425 = vadd.f32 %v3373, 0.0
  %v3426 = vadd.f32 %v3376, 0.0
  %v3427 = vadd.f32 %v3379, 0.0
  %v3428 = vadd.f32 %v3382, 0.0
  %v3429 = vadd.f32 %v3385, 0.0
  %v3430 = vadd.f32 %v3388, 0.0
  %v3431 = vadd.f32 %v3391, 0.0
  %3432 = vrot.lane.b32.xlu0 %v471, 122
  %v3433 = vpop.permute.xlu0 %3432
  %3434 = vrot.lane.b32.xlu0 %v472, 122
  %v3435 = vpop.permute.xlu0 %3434
  %3436 = vrot.lane.b32.xlu0 %v473, 122
  %v3437 = vpop.permute.xlu0 %3436
  %3438 = vrot.lane.b32.xlu0 %v474, 122
  %v3439 = vpop.permute.xlu0 %3438
  %3440 = vrot.lane.b32.xlu0 %v475, 122
  %v3441 = vpop.permute.xlu0 %3440
  %3442 = vrot.lane.b32.xlu0 %v476, 122
  %v3443 = vpop.permute.xlu0 %3442
  %3444 = vrot.lane.b32.xlu0 %v477, 122
  %v3445 = vpop.permute.xlu0 %3444
  %3446 = vrot.lane.b32.xlu0 %v478, 122
  %v3447 = vpop.permute.xlu0 %3446
  %3448 = vrot.lane.b32.xlu0 %v479, 122
  %v3449 = vpop.permute.xlu0 %3448
  %3450 = vrot.lane.b32.xlu0 %v480, 122
  %v3451 = vpop.permute.xlu0 %3450
  %3452 = vrot.lane.b32.xlu0 %v481, 122
  %v3453 = vpop.permute.xlu0 %3452
  %3454 = vrot.lane.b32.xlu0 %v482, 122
  %v3455 = vpop.permute.xlu0 %3454
  %3456 = vrot.lane.b32.xlu0 %v483, 122
  %v3457 = vpop.permute.xlu0 %3456
  %3458 = vrot.lane.b32.xlu0 %v484, 122
  %v3459 = vpop.permute.xlu0 %3458
  %3460 = vrot.lane.b32.xlu0 %v485, 122
  %v3461 = vpop.permute.xlu0 %3460
  %3462 = vrot.lane.b32.xlu0 %v486, 122
  %v3463 = vpop.permute.xlu0 %3462
  %3464 = vrot.lane.b32.xlu0 %v487, 122
  %v3465 = vpop.permute.xlu0 %3464
  %3466 = vrot.lane.b32.xlu0 %v488, 122
  %v3467 = vpop.permute.xlu0 %3466
  %3468 = vrot.lane.b32.xlu0 %v489, 122
  %v3469 = vpop.permute.xlu0 %3468
  %3470 = vrot.lane.b32.xlu0 %v490, 122
  %v3471 = vpop.permute.xlu0 %3470
  %3472 = vrot.lane.b32.xlu0 %v491, 122
  %v3473 = vpop.permute.xlu0 %3472
  %3474 = vrot.lane.b32.xlu0 %v492, 122
  %v3475 = vpop.permute.xlu0 %3474
  %3476 = vrot.lane.b32.xlu0 %v493, 122
  %v3477 = vpop.permute.xlu0 %3476
  %3478 = vrot.lane.b32.xlu0 %v494, 122
  %v3479 = vpop.permute.xlu0 %3478
  %3480 = vrot.lane.b32.xlu0 %v495, 122
  %v3481 = vpop.permute.xlu0 %3480
  %3482 = vrot.lane.b32.xlu0 %v496, 122
  %v3483 = vpop.permute.xlu0 %3482
  %3484 = vrot.lane.b32.xlu0 %v497, 122
  %v3485 = vpop.permute.xlu0 %3484
  %3486 = vrot.lane.b32.xlu0 %v498, 122
  %v3487 = vpop.permute.xlu0 %3486
  %3488 = vrot.lane.b32.xlu0 %v499, 122
  %v3489 = vpop.permute.xlu0 %3488
  %3490 = vrot.lane.b32.xlu0 %v500, 122
  %v3491 = vpop.permute.xlu0 %3490
  %3492 = vrot.lane.b32.xlu0 %v501, 122
  %v3493 = vpop.permute.xlu0 %3492
  %3494 = vrot.lane.b32.xlu0 %v502, 122
  %v3495 = vpop.permute.xlu0 %3494
  %3496 = vrot.lane.b32.xlu0 %v503, 122
  %v3497 = vpop.permute.xlu0 %3496
  %3498 = vrot.lane.b32.xlu0 %v504, 122
  %v3499 = vpop.permute.xlu0 %3498
  %3500 = vrot.lane.b32.xlu0 %v505, 122
  %v3501 = vpop.permute.xlu0 %3500
  %3502 = vrot.lane.b32.xlu0 %v506, 122
  %v3503 = vpop.permute.xlu0 %3502
  %3504 = vrot.lane.b32.xlu0 %v507, 122
  %v3505 = vpop.permute.xlu0 %3504
  %3506 = vrot.lane.b32.xlu0 %v508, 122
  %v3507 = vpop.permute.xlu0 %3506
  %3508 = vrot.lane.b32.xlu0 %v509, 122
  %v3509 = vpop.permute.xlu0 %3508
  %3510 = vrot.lane.b32.xlu0 %v510, 122
  %v3511 = vpop.permute.xlu0 %3510
  %3552 = vxpose.xlu0.b32.start [1/16] %v3433, 128
  %3553 = vxpose.xlu0.b32.cont [2/16] %v3435, 128
  %3554 = vxpose.xlu0.b32.cont [3/16] 0.0, 128
  %3555 = vxpose.xlu0.b32.cont [4/16] 0.0, 128
  %3556 = vxpose.xlu0.b32.cont [5/16] 0.0, 128
  %3557 = vxpose.xlu0.b32.cont [6/16] 0.0, 128
  %3558 = vxpose.xlu0.b32.cont [7/16] 0.0, 128
  %3559 = vxpose.xlu0.b32.cont [8/16] 0.0, 128
  %3560 = vxpose.xlu0.b32.cont [9/16] 0.0, 128
  %3561 = vxpose.xlu0.b32.cont [10/16] 0.0, 128
  %3562 = vxpose.xlu0.b32.cont [11/16] 0.0, 128
  %3563 = vxpose.xlu0.b32.cont [12/16] 0.0, 128
  %3564 = vxpose.xlu0.b32.cont [13/16] 0.0, 128
  %3565 = vxpose.xlu0.b32.cont [14/16] 0.0, 128
  %3566 = vxpose.xlu0.b32.cont [15/16] 0.0, 128
  %3567 = vxpose.xlu0.b32.end [16/16] 0.0, 128
  %v3568 = vpop.trf.xlu0
  %v3569 = vpop.trf.xlu0
  %v3570 = vpop.trf.xlu0
  %v3571 = vpop.trf.xlu0
  %v3572 = vpop.trf.xlu0
  %v3573 = vpop.trf.xlu0
  %v3574 = vpop.trf.xlu0
  %v3575 = vpop.trf.xlu0
  %v3576 = vpop.trf.xlu0
  %v3577 = vpop.trf.xlu0
  %v3578 = vpop.trf.xlu0
  %v3579 = vpop.trf.xlu0
  %v3580 = vpop.trf.xlu0
  %v3581 = vpop.trf.xlu0
  %v3582 = vpop.trf.xlu0
  %v3583 = vpop.trf.xlu0
  %3584 = vxpose.xlu0.b32.start [1/16] %v3437, 128
  %3585 = vxpose.xlu0.b32.cont [2/16] %v3439, 128
  %3586 = vxpose.xlu0.b32.cont [3/16] 0.0, 128
  %3587 = vxpose.xlu0.b32.cont [4/16] 0.0, 128
  %3588 = vxpose.xlu0.b32.cont [5/16] 0.0, 128
  %3589 = vxpose.xlu0.b32.cont [6/16] 0.0, 128
  %3590 = vxpose.xlu0.b32.cont [7/16] 0.0, 128
  %3591 = vxpose.xlu0.b32.cont [8/16] 0.0, 128
  %3592 = vxpose.xlu0.b32.cont [9/16] 0.0, 128
  %3593 = vxpose.xlu0.b32.cont [10/16] 0.0, 128
  %3594 = vxpose.xlu0.b32.cont [11/16] 0.0, 128
  %3595 = vxpose.xlu0.b32.cont [12/16] 0.0, 128
  %3596 = vxpose.xlu0.b32.cont [13/16] 0.0, 128
  %3597 = vxpose.xlu0.b32.cont [14/16] 0.0, 128
  %3598 = vxpose.xlu0.b32.cont [15/16] 0.0, 128
  %3599 = vxpose.xlu0.b32.end [16/16] 0.0, 128
  %v3600 = vpop.trf.xlu0
  %v3601 = vpop.trf.xlu0
  %v3602 = vpop.trf.xlu0
  %v3603 = vpop.trf.xlu0
  %v3604 = vpop.trf.xlu0
  %v3605 = vpop.trf.xlu0
  %v3606 = vpop.trf.xlu0
  %v3607 = vpop.trf.xlu0
  %v3608 = vpop.trf.xlu0
  %v3609 = vpop.trf.xlu0
  %v3610 = vpop.trf.xlu0
  %v3611 = vpop.trf.xlu0
  %v3612 = vpop.trf.xlu0
  %v3613 = vpop.trf.xlu0
  %v3614 = vpop.trf.xlu0
  %v3615 = vpop.trf.xlu0
  %3616 = vxpose.xlu0.b32.start [1/16] %v3441, 128
  %3617 = vxpose.xlu0.b32.cont [2/16] %v3443, 128
  %3618 = vxpose.xlu0.b32.cont [3/16] 0.0, 128
  %3619 = vxpose.xlu0.b32.cont [4/16] 0.0, 128
  %3620 = vxpose.xlu0.b32.cont [5/16] 0.0, 128
  %3621 = vxpose.xlu0.b32.cont [6/16] 0.0, 128
  %3622 = vxpose.xlu0.b32.cont [7/16] 0.0, 128
  %3623 = vxpose.xlu0.b32.cont [8/16] 0.0, 128
  %3624 = vxpose.xlu0.b32.cont [9/16] 0.0, 128
  %3625 = vxpose.xlu0.b32.cont [10/16] 0.0, 128
  %3626 = vxpose.xlu0.b32.cont [11/16] 0.0, 128
  %3627 = vxpose.xlu0.b32.cont [12/16] 0.0, 128
  %3628 = vxpose.xlu0.b32.cont [13/16] 0.0, 128
  %3629 = vxpose.xlu0.b32.cont [14/16] 0.0, 128
  %3630 = vxpose.xlu0.b32.cont [15/16] 0.0, 128
  %3631 = vxpose.xlu0.b32.end [16/16] 0.0, 128
  %v3632 = vpop.trf.xlu0
  %v3633 = vpop.trf.xlu0
  %v3634 = vpop.trf.xlu0
  %v3635 = vpop.trf.xlu0
  %v3636 = vpop.trf.xlu0
  %v3637 = vpop.trf.xlu0
  %v3638 = vpop.trf.xlu0
  %v3639 = vpop.trf.xlu0
  %v3640 = vpop.trf.xlu0
  %v3641 = vpop.trf.xlu0
  %v3642 = vpop.trf.xlu0
  %v3643 = vpop.trf.xlu0
  %v3644 = vpop.trf.xlu0
  %v3645 = vpop.trf.xlu0
  %v3646 = vpop.trf.xlu0
  %v3647 = vpop.trf.xlu0
  %3648 = vxpose.xlu0.b32.start [1/16] %v3445, 128
  %3649 = vxpose.xlu0.b32.cont [2/16] %v3447, 128
  %3650 = vxpose.xlu0.b32.cont [3/16] 0.0, 128
  %3651 = vxpose.xlu0.b32.cont [4/16] 0.0, 128
  %3652 = vxpose.xlu0.b32.cont [5/16] 0.0, 128
  %3653 = vxpose.xlu0.b32.cont [6/16] 0.0, 128
  %3654 = vxpose.xlu0.b32.cont [7/16] 0.0, 128
  %3655 = vxpose.xlu0.b32.cont [8/16] 0.0, 128
  %3656 = vxpose.xlu0.b32.cont [9/16] 0.0, 128
  %3657 = vxpose.xlu0.b32.cont [10/16] 0.0, 128
  %3658 = vxpose.xlu0.b32.cont [11/16] 0.0, 128
  %3659 = vxpose.xlu0.b32.cont [12/16] 0.0, 128
  %3660 = vxpose.xlu0.b32.cont [13/16] 0.0, 128
  %3661 = vxpose.xlu0.b32.cont [14/16] 0.0, 128
  %3662 = vxpose.xlu0.b32.cont [15/16] 0.0, 128
  %3663 = vxpose.xlu0.b32.end [16/16] 0.0, 128
  %v3664 = vpop.trf.xlu0
  %v3665 = vpop.trf.xlu0
  %v3666 = vpop.trf.xlu0
  %v3667 = vpop.trf.xlu0
  %v3668 = vpop.trf.xlu0
  %v3669 = vpop.trf.xlu0
  %v3670 = vpop.trf.xlu0
  %v3671 = vpop.trf.xlu0
  %v3672 = vpop.trf.xlu0
  %v3673 = vpop.trf.xlu0
  %v3674 = vpop.trf.xlu0
  %v3675 = vpop.trf.xlu0
  %v3676 = vpop.trf.xlu0
  %v3677 = vpop.trf.xlu0
  %v3678 = vpop.trf.xlu0
  %v3679 = vpop.trf.xlu0
  %3680 = vxpose.xlu0.b32.start [1/16] %v3449, 128
  %3681 = vxpose.xlu0.b32.cont [2/16] %v3451, 128
  %3682 = vxpose.xlu0.b32.cont [3/16] 0.0, 128
  %3683 = vxpose.xlu0.b32.cont [4/16] 0.0, 128
  %3684 = vxpose.xlu0.b32.cont [5/16] 0.0, 128
  %3685 = vxpose.xlu0.b32.cont [6/16] 0.0, 128
  %3686 = vxpose.xlu0.b32.cont [7/16] 0.0, 128
  %3687 = vxpose.xlu0.b32.cont [8/16] 0.0, 128
  %3688 = vxpose.xlu0.b32.cont [9/16] 0.0, 128
  %3689 = vxpose.xlu0.b32.cont [10/16] 0.0, 128
  %3690 = vxpose.xlu0.b32.cont [11/16] 0.0, 128
  %3691 = vxpose.xlu0.b32.cont [12/16] 0.0, 128
  %3692 = vxpose.xlu0.b32.cont [13/16] 0.0, 128
  %3693 = vxpose.xlu0.b32.cont [14/16] 0.0, 128
  %3694 = vxpose.xlu0.b32.cont [15/16] 0.0, 128
  %3695 = vxpose.xlu0.b32.end [16/16] 0.0, 128
  %v3696 = vpop.trf.xlu0
  %v3697 = vpop.trf.xlu0
  %v3698 = vpop.trf.xlu0
  %v3699 = vpop.trf.xlu0
  %v3700 = vpop.trf.xlu0
  %v3701 = vpop.trf.xlu0
  %v3702 = vpop.trf.xlu0
  %v3703 = vpop.trf.xlu0
  %v3704 = vpop.trf.xlu0
  %v3705 = vpop.trf.xlu0
  %v3706 = vpop.trf.xlu0
  %v3707 = vpop.trf.xlu0
  %v3708 = vpop.trf.xlu0
  %v3709 = vpop.trf.xlu0
  %v3710 = vpop.trf.xlu0
  %v3711 = vpop.trf.xlu0
  %3712 = vxpose.xlu0.b32.start [1/16] %v3453, 128
  %3713 = vxpose.xlu0.b32.cont [2/16] %v3455, 128
  %3714 = vxpose.xlu0.b32.cont [3/16] 0.0, 128
  %3715 = vxpose.xlu0.b32.cont [4/16] 0.0, 128
  %3716 = vxpose.xlu0.b32.cont [5/16] 0.0, 128
  %3717 = vxpose.xlu0.b32.cont [6/16] 0.0, 128
  %3718 = vxpose.xlu0.b32.cont [7/16] 0.0, 128
  %3719 = vxpose.xlu0.b32.cont [8/16] 0.0, 128
  %3720 = vxpose.xlu0.b32.cont [9/16] 0.0, 128
  %3721 = vxpose.xlu0.b32.cont [10/16] 0.0, 128
  %3722 = vxpose.xlu0.b32.cont [11/16] 0.0, 128
  %3723 = vxpose.xlu0.b32.cont [12/16] 0.0, 128
  %3724 = vxpose.xlu0.b32.cont [13/16] 0.0, 128
  %3725 = vxpose.xlu0.b32.cont [14/16] 0.0, 128
  %3726 = vxpose.xlu0.b32.cont [15/16] 0.0, 128
  %3727 = vxpose.xlu0.b32.end [16/16] 0.0, 128
  %v3728 = vpop.trf.xlu0
  %v3729 = vpop.trf.xlu0
  %v3730 = vpop.trf.xlu0
  %v3731 = vpop.trf.xlu0
  %v3732 = vpop.trf.xlu0
  %v3733 = vpop.trf.xlu0
  %v3734 = vpop.trf.xlu0
  %v3735 = vpop.trf.xlu0
  %v3736 = vpop.trf.xlu0
  %v3737 = vpop.trf.xlu0
  %v3738 = vpop.trf.xlu0
  %v3739 = vpop.trf.xlu0
  %v3740 = vpop.trf.xlu0
  %v3741 = vpop.trf.xlu0
  %v3742 = vpop.trf.xlu0
  %v3743 = vpop.trf.xlu0
  %3744 = vxpose.xlu0.b32.start [1/16] %v3457, 128
  %3745 = vxpose.xlu0.b32.cont [2/16] %v3459, 128
  %3746 = vxpose.xlu0.b32.cont [3/16] 0.0, 128
  %3747 = vxpose.xlu0.b32.cont [4/16] 0.0, 128
  %3748 = vxpose.xlu0.b32.cont [5/16] 0.0, 128
  %3749 = vxpose.xlu0.b32.cont [6/16] 0.0, 128
  %3750 = vxpose.xlu0.b32.cont [7/16] 0.0, 128
  %3751 = vxpose.xlu0.b32.cont [8/16] 0.0, 128
  %3752 = vxpose.xlu0.b32.cont [9/16] 0.0, 128
  %3753 = vxpose.xlu0.b32.cont [10/16] 0.0, 128
  %3754 = vxpose.xlu0.b32.cont [11/16] 0.0, 128
  %3755 = vxpose.xlu0.b32.cont [12/16] 0.0, 128
  %3756 = vxpose.xlu0.b32.cont [13/16] 0.0, 128
  %3757 = vxpose.xlu0.b32.cont [14/16] 0.0, 128
  %3758 = vxpose.xlu0.b32.cont [15/16] 0.0, 128
  %3759 = vxpose.xlu0.b32.end [16/16] 0.0, 128
  %v3760 = vpop.trf.xlu0
  %v3761 = vpop.trf.xlu0
  %v3762 = vpop.trf.xlu0
  %v3763 = vpop.trf.xlu0
  %v3764 = vpop.trf.xlu0
  %v3765 = vpop.trf.xlu0
  %v3766 = vpop.trf.xlu0
  %v3767 = vpop.trf.xlu0
  %v3768 = vpop.trf.xlu0
  %v3769 = vpop.trf.xlu0
  %v3770 = vpop.trf.xlu0
  %v3771 = vpop.trf.xlu0
  %v3772 = vpop.trf.xlu0
  %v3773 = vpop.trf.xlu0
  %v3774 = vpop.trf.xlu0
  %v3775 = vpop.trf.xlu0
  %3776 = vxpose.xlu0.b32.start [1/16] %v3461, 128
  %3777 = vxpose.xlu0.b32.cont [2/16] %v3463, 128
  %3778 = vxpose.xlu0.b32.cont [3/16] 0.0, 128
  %3779 = vxpose.xlu0.b32.cont [4/16] 0.0, 128
  %3780 = vxpose.xlu0.b32.cont [5/16] 0.0, 128
  %3781 = vxpose.xlu0.b32.cont [6/16] 0.0, 128
  %3782 = vxpose.xlu0.b32.cont [7/16] 0.0, 128
  %3783 = vxpose.xlu0.b32.cont [8/16] 0.0, 128
  %3784 = vxpose.xlu0.b32.cont [9/16] 0.0, 128
  %3785 = vxpose.xlu0.b32.cont [10/16] 0.0, 128
  %3786 = vxpose.xlu0.b32.cont [11/16] 0.0, 128
  %3787 = vxpose.xlu0.b32.cont [12/16] 0.0, 128
  %3788 = vxpose.xlu0.b32.cont [13/16] 0.0, 128
  %3789 = vxpose.xlu0.b32.cont [14/16] 0.0, 128
  %3790 = vxpose.xlu0.b32.cont [15/16] 0.0, 128
  %3791 = vxpose.xlu0.b32.end [16/16] 0.0, 128
  %v3792 = vpop.trf.xlu0
  %v3793 = vpop.trf.xlu0
  %v3794 = vpop.trf.xlu0
  %v3795 = vpop.trf.xlu0
  %v3796 = vpop.trf.xlu0
  %v3797 = vpop.trf.xlu0
  %v3798 = vpop.trf.xlu0
  %v3799 = vpop.trf.xlu0
  %v3800 = vpop.trf.xlu0
  %v3801 = vpop.trf.xlu0
  %v3802 = vpop.trf.xlu0
  %v3803 = vpop.trf.xlu0
  %v3804 = vpop.trf.xlu0
  %v3805 = vpop.trf.xlu0
  %v3806 = vpop.trf.xlu0
  %v3807 = vpop.trf.xlu0
  %3808 = vxpose.xlu0.b32.start [1/16] %v3465, 128
  %3809 = vxpose.xlu0.b32.cont [2/16] %v3467, 128
  %3810 = vxpose.xlu0.b32.cont [3/16] 0.0, 128
  %3811 = vxpose.xlu0.b32.cont [4/16] 0.0, 128
  %3812 = vxpose.xlu0.b32.cont [5/16] 0.0, 128
  %3813 = vxpose.xlu0.b32.cont [6/16] 0.0, 128
  %3814 = vxpose.xlu0.b32.cont [7/16] 0.0, 128
  %3815 = vxpose.xlu0.b32.cont [8/16] 0.0, 128
  %3816 = vxpose.xlu0.b32.cont [9/16] 0.0, 128
  %3817 = vxpose.xlu0.b32.cont [10/16] 0.0, 128
  %3818 = vxpose.xlu0.b32.cont [11/16] 0.0, 128
  %3819 = vxpose.xlu0.b32.cont [12/16] 0.0, 128
  %3820 = vxpose.xlu0.b32.cont [13/16] 0.0, 128
  %3821 = vxpose.xlu0.b32.cont [14/16] 0.0, 128
  %3822 = vxpose.xlu0.b32.cont [15/16] 0.0, 128
  %3823 = vxpose.xlu0.b32.end [16/16] 0.0, 128
  %v3824 = vpop.trf.xlu0
  %v3825 = vpop.trf.xlu0
  %v3826 = vpop.trf.xlu0
  %v3827 = vpop.trf.xlu0
  %v3828 = vpop.trf.xlu0
  %v3829 = vpop.trf.xlu0
  %v3830 = vpop.trf.xlu0
  %v3831 = vpop.trf.xlu0
  %v3832 = vpop.trf.xlu0
  %v3833 = vpop.trf.xlu0
  %v3834 = vpop.trf.xlu0
  %v3835 = vpop.trf.xlu0
  %v3836 = vpop.trf.xlu0
  %v3837 = vpop.trf.xlu0
  %v3838 = vpop.trf.xlu0
  %v3839 = vpop.trf.xlu0
  %3840 = vxpose.xlu0.b32.start [1/16] %v3469, 128
  %3841 = vxpose.xlu0.b32.cont [2/16] %v3471, 128
  %3842 = vxpose.xlu0.b32.cont [3/16] 0.0, 128
  %3843 = vxpose.xlu0.b32.cont [4/16] 0.0, 128
  %3844 = vxpose.xlu0.b32.cont [5/16] 0.0, 128
  %3845 = vxpose.xlu0.b32.cont [6/16] 0.0, 128
  %3846 = vxpose.xlu0.b32.cont [7/16] 0.0, 128
  %3847 = vxpose.xlu0.b32.cont [8/16] 0.0, 128
  %3848 = vxpose.xlu0.b32.cont [9/16] 0.0, 128
  %3849 = vxpose.xlu0.b32.cont [10/16] 0.0, 128
  %3850 = vxpose.xlu0.b32.cont [11/16] 0.0, 128
  %3851 = vxpose.xlu0.b32.cont [12/16] 0.0, 128
  %3852 = vxpose.xlu0.b32.cont [13/16] 0.0, 128
  %3853 = vxpose.xlu0.b32.cont [14/16] 0.0, 128
  %3854 = vxpose.xlu0.b32.cont [15/16] 0.0, 128
  %3855 = vxpose.xlu0.b32.end [16/16] 0.0, 128
  %v3856 = vpop.trf.xlu0
  %v3857 = vpop.trf.xlu0
  %v3858 = vpop.trf.xlu0
  %v3859 = vpop.trf.xlu0
  %v3860 = vpop.trf.xlu0
  %v3861 = vpop.trf.xlu0
  %v3862 = vpop.trf.xlu0
  %v3863 = vpop.trf.xlu0
  %v3864 = vpop.trf.xlu0
  %v3865 = vpop.trf.xlu0
  %v3866 = vpop.trf.xlu0
  %v3867 = vpop.trf.xlu0
  %v3868 = vpop.trf.xlu0
  %v3869 = vpop.trf.xlu0
  %v3870 = vpop.trf.xlu0
  %v3871 = vpop.trf.xlu0
  %3872 = vxpose.xlu0.b32.start [1/16] %v3473, 128
  %3873 = vxpose.xlu0.b32.cont [2/16] %v3475, 128
  %3874 = vxpose.xlu0.b32.cont [3/16] 0.0, 128
  %3875 = vxpose.xlu0.b32.cont [4/16] 0.0, 128
  %3876 = vxpose.xlu0.b32.cont [5/16] 0.0, 128
  %3877 = vxpose.xlu0.b32.cont [6/16] 0.0, 128
  %3878 = vxpose.xlu0.b32.cont [7/16] 0.0, 128
  %3879 = vxpose.xlu0.b32.cont [8/16] 0.0, 128
  %3880 = vxpose.xlu0.b32.cont [9/16] 0.0, 128
  %3881 = vxpose.xlu0.b32.cont [10/16] 0.0, 128
  %3882 = vxpose.xlu0.b32.cont [11/16] 0.0, 128
  %3883 = vxpose.xlu0.b32.cont [12/16] 0.0, 128
  %3884 = vxpose.xlu0.b32.cont [13/16] 0.0, 128
  %3885 = vxpose.xlu0.b32.cont [14/16] 0.0, 128
  %3886 = vxpose.xlu0.b32.cont [15/16] 0.0, 128
  %3887 = vxpose.xlu0.b32.end [16/16] 0.0, 128
  %v3888 = vpop.trf.xlu0
  %v3889 = vpop.trf.xlu0
  %v3890 = vpop.trf.xlu0
  %v3891 = vpop.trf.xlu0
  %v3892 = vpop.trf.xlu0
  %v3893 = vpop.trf.xlu0
  %v3894 = vpop.trf.xlu0
  %v3895 = vpop.trf.xlu0
  %v3896 = vpop.trf.xlu0
  %v3897 = vpop.trf.xlu0
  %v3898 = vpop.trf.xlu0
  %v3899 = vpop.trf.xlu0
  %v3900 = vpop.trf.xlu0
  %v3901 = vpop.trf.xlu0
  %v3902 = vpop.trf.xlu0
  %v3903 = vpop.trf.xlu0
  %3904 = vxpose.xlu0.b32.start [1/16] %v3477, 128
  %3905 = vxpose.xlu0.b32.cont [2/16] %v3479, 128
  %3906 = vxpose.xlu0.b32.cont [3/16] 0.0, 128
  %3907 = vxpose.xlu0.b32.cont [4/16] 0.0, 128
  %3908 = vxpose.xlu0.b32.cont [5/16] 0.0, 128
  %3909 = vxpose.xlu0.b32.cont [6/16] 0.0, 128
  %3910 = vxpose.xlu0.b32.cont [7/16] 0.0, 128
  %3911 = vxpose.xlu0.b32.cont [8/16] 0.0, 128
  %3912 = vxpose.xlu0.b32.cont [9/16] 0.0, 128
  %3913 = vxpose.xlu0.b32.cont [10/16] 0.0, 128
  %3914 = vxpose.xlu0.b32.cont [11/16] 0.0, 128
  %3915 = vxpose.xlu0.b32.cont [12/16] 0.0, 128
  %3916 = vxpose.xlu0.b32.cont [13/16] 0.0, 128
  %3917 = vxpose.xlu0.b32.cont [14/16] 0.0, 128
  %3918 = vxpose.xlu0.b32.cont [15/16] 0.0, 128
  %3919 = vxpose.xlu0.b32.end [16/16] 0.0, 128
  %v3920 = vpop.trf.xlu0
  %v3921 = vpop.trf.xlu0
  %v3922 = vpop.trf.xlu0
  %v3923 = vpop.trf.xlu0
  %v3924 = vpop.trf.xlu0
  %v3925 = vpop.trf.xlu0
  %v3926 = vpop.trf.xlu0
  %v3927 = vpop.trf.xlu0
  %v3928 = vpop.trf.xlu0
  %v3929 = vpop.trf.xlu0
  %v3930 = vpop.trf.xlu0
  %v3931 = vpop.trf.xlu0
  %v3932 = vpop.trf.xlu0
  %v3933 = vpop.trf.xlu0
  %v3934 = vpop.trf.xlu0
  %v3935 = vpop.trf.xlu0
  %3936 = vxpose.xlu0.b32.start [1/16] %v3481, 128
  %3937 = vxpose.xlu0.b32.cont [2/16] %v3483, 128
  %3938 = vxpose.xlu0.b32.cont [3/16] 0.0, 128
  %3939 = vxpose.xlu0.b32.cont [4/16] 0.0, 128
  %3940 = vxpose.xlu0.b32.cont [5/16] 0.0, 128
  %3941 = vxpose.xlu0.b32.cont [6/16] 0.0, 128
  %3942 = vxpose.xlu0.b32.cont [7/16] 0.0, 128
  %3943 = vxpose.xlu0.b32.cont [8/16] 0.0, 128
  %3944 = vxpose.xlu0.b32.cont [9/16] 0.0, 128
  %3945 = vxpose.xlu0.b32.cont [10/16] 0.0, 128
  %3946 = vxpose.xlu0.b32.cont [11/16] 0.0, 128
  %3947 = vxpose.xlu0.b32.cont [12/16] 0.0, 128
  %3948 = vxpose.xlu0.b32.cont [13/16] 0.0, 128
  %3949 = vxpose.xlu0.b32.cont [14/16] 0.0, 128
  %3950 = vxpose.xlu0.b32.cont [15/16] 0.0, 128
  %3951 = vxpose.xlu0.b32.end [16/16] 0.0, 128
  %v3952 = vpop.trf.xlu0
  %v3953 = vpop.trf.xlu0
  %v3954 = vpop.trf.xlu0
  %v3955 = vpop.trf.xlu0
  %v3956 = vpop.trf.xlu0
  %v3957 = vpop.trf.xlu0
  %v3958 = vpop.trf.xlu0
  %v3959 = vpop.trf.xlu0
  %v3960 = vpop.trf.xlu0
  %v3961 = vpop.trf.xlu0
  %v3962 = vpop.trf.xlu0
  %v3963 = vpop.trf.xlu0
  %v3964 = vpop.trf.xlu0
  %v3965 = vpop.trf.xlu0
  %v3966 = vpop.trf.xlu0
  %v3967 = vpop.trf.xlu0
  %3968 = vxpose.xlu0.b32.start [1/16] %v3485, 128
  %3969 = vxpose.xlu0.b32.cont [2/16] %v3487, 128
  %3970 = vxpose.xlu0.b32.cont [3/16] 0.0, 128
  %3971 = vxpose.xlu0.b32.cont [4/16] 0.0, 128
  %3972 = vxpose.xlu0.b32.cont [5/16] 0.0, 128
  %3973 = vxpose.xlu0.b32.cont [6/16] 0.0, 128
  %3974 = vxpose.xlu0.b32.cont [7/16] 0.0, 128
  %3975 = vxpose.xlu0.b32.cont [8/16] 0.0, 128
  %3976 = vxpose.xlu0.b32.cont [9/16] 0.0, 128
  %3977 = vxpose.xlu0.b32.cont [10/16] 0.0, 128
  %3978 = vxpose.xlu0.b32.cont [11/16] 0.0, 128
  %3979 = vxpose.xlu0.b32.cont [12/16] 0.0, 128
  %3980 = vxpose.xlu0.b32.cont [13/16] 0.0, 128
  %3981 = vxpose.xlu0.b32.cont [14/16] 0.0, 128
  %3982 = vxpose.xlu0.b32.cont [15/16] 0.0, 128
  %3983 = vxpose.xlu0.b32.end [16/16] 0.0, 128
  %v3984 = vpop.trf.xlu0
  %v3985 = vpop.trf.xlu0
  %v3986 = vpop.trf.xlu0
  %v3987 = vpop.trf.xlu0
  %v3988 = vpop.trf.xlu0
  %v3989 = vpop.trf.xlu0
  %v3990 = vpop.trf.xlu0
  %v3991 = vpop.trf.xlu0
  %v3992 = vpop.trf.xlu0
  %v3993 = vpop.trf.xlu0
  %v3994 = vpop.trf.xlu0
  %v3995 = vpop.trf.xlu0
  %v3996 = vpop.trf.xlu0
  %v3997 = vpop.trf.xlu0
  %v3998 = vpop.trf.xlu0
  %v3999 = vpop.trf.xlu0
  %4000 = vxpose.xlu0.b32.start [1/16] %v3489, 128
  %4001 = vxpose.xlu0.b32.cont [2/16] %v3491, 128
  %4002 = vxpose.xlu0.b32.cont [3/16] 0.0, 128
  %4003 = vxpose.xlu0.b32.cont [4/16] 0.0, 128
  %4004 = vxpose.xlu0.b32.cont [5/16] 0.0, 128
  %4005 = vxpose.xlu0.b32.cont [6/16] 0.0, 128
  %4006 = vxpose.xlu0.b32.cont [7/16] 0.0, 128
  %4007 = vxpose.xlu0.b32.cont [8/16] 0.0, 128
  %4008 = vxpose.xlu0.b32.cont [9/16] 0.0, 128
  %4009 = vxpose.xlu0.b32.cont [10/16] 0.0, 128
  %4010 = vxpose.xlu0.b32.cont [11/16] 0.0, 128
  %4011 = vxpose.xlu0.b32.cont [12/16] 0.0, 128
  %4012 = vxpose.xlu0.b32.cont [13/16] 0.0, 128
  %4013 = vxpose.xlu0.b32.cont [14/16] 0.0, 128
  %4014 = vxpose.xlu0.b32.cont [15/16] 0.0, 128
  %4015 = vxpose.xlu0.b32.end [16/16] 0.0, 128
  %v4016 = vpop.trf.xlu0
  %v4017 = vpop.trf.xlu0
  %v4018 = vpop.trf.xlu0
  %v4019 = vpop.trf.xlu0
  %v4020 = vpop.trf.xlu0
  %v4021 = vpop.trf.xlu0
  %v4022 = vpop.trf.xlu0
  %v4023 = vpop.trf.xlu0
  %v4024 = vpop.trf.xlu0
  %v4025 = vpop.trf.xlu0
  %v4026 = vpop.trf.xlu0
  %v4027 = vpop.trf.xlu0
  %v4028 = vpop.trf.xlu0
  %v4029 = vpop.trf.xlu0
  %v4030 = vpop.trf.xlu0
  %v4031 = vpop.trf.xlu0
  %4032 = vxpose.xlu0.b32.start [1/16] %v3493, 128
  %4033 = vxpose.xlu0.b32.cont [2/16] %v3495, 128
  %4034 = vxpose.xlu0.b32.cont [3/16] 0.0, 128
  %4035 = vxpose.xlu0.b32.cont [4/16] 0.0, 128
  %4036 = vxpose.xlu0.b32.cont [5/16] 0.0, 128
  %4037 = vxpose.xlu0.b32.cont [6/16] 0.0, 128
  %4038 = vxpose.xlu0.b32.cont [7/16] 0.0, 128
  %4039 = vxpose.xlu0.b32.cont [8/16] 0.0, 128
  %4040 = vxpose.xlu0.b32.cont [9/16] 0.0, 128
  %4041 = vxpose.xlu0.b32.cont [10/16] 0.0, 128
  %4042 = vxpose.xlu0.b32.cont [11/16] 0.0, 128
  %4043 = vxpose.xlu0.b32.cont [12/16] 0.0, 128
  %4044 = vxpose.xlu0.b32.cont [13/16] 0.0, 128
  %4045 = vxpose.xlu0.b32.cont [14/16] 0.0, 128
  %4046 = vxpose.xlu0.b32.cont [15/16] 0.0, 128
  %4047 = vxpose.xlu0.b32.end [16/16] 0.0, 128
  %v4048 = vpop.trf.xlu0
  %v4049 = vpop.trf.xlu0
  %v4050 = vpop.trf.xlu0
  %v4051 = vpop.trf.xlu0
  %v4052 = vpop.trf.xlu0
  %v4053 = vpop.trf.xlu0
  %v4054 = vpop.trf.xlu0
  %v4055 = vpop.trf.xlu0
  %v4056 = vpop.trf.xlu0
  %v4057 = vpop.trf.xlu0
  %v4058 = vpop.trf.xlu0
  %v4059 = vpop.trf.xlu0
  %v4060 = vpop.trf.xlu0
  %v4061 = vpop.trf.xlu0
  %v4062 = vpop.trf.xlu0
  %v4063 = vpop.trf.xlu0
  %4064 = vxpose.xlu0.b32.start [1/16] %v3497, 128
  %4065 = vxpose.xlu0.b32.cont [2/16] %v3499, 128
  %4066 = vxpose.xlu0.b32.cont [3/16] 0.0, 128
  %4067 = vxpose.xlu0.b32.cont [4/16] 0.0, 128
  %4068 = vxpose.xlu0.b32.cont [5/16] 0.0, 128
  %4069 = vxpose.xlu0.b32.cont [6/16] 0.0, 128
  %4070 = vxpose.xlu0.b32.cont [7/16] 0.0, 128
  %4071 = vxpose.xlu0.b32.cont [8/16] 0.0, 128
  %4072 = vxpose.xlu0.b32.cont [9/16] 0.0, 128
  %4073 = vxpose.xlu0.b32.cont [10/16] 0.0, 128
  %4074 = vxpose.xlu0.b32.cont [11/16] 0.0, 128
  %4075 = vxpose.xlu0.b32.cont [12/16] 0.0, 128
  %4076 = vxpose.xlu0.b32.cont [13/16] 0.0, 128
  %4077 = vxpose.xlu0.b32.cont [14/16] 0.0, 128
  %4078 = vxpose.xlu0.b32.cont [15/16] 0.0, 128
  %4079 = vxpose.xlu0.b32.end [16/16] 0.0, 128
  %v4080 = vpop.trf.xlu0
  %v4081 = vpop.trf.xlu0
  %v4082 = vpop.trf.xlu0
  %v4083 = vpop.trf.xlu0
  %v4084 = vpop.trf.xlu0
  %v4085 = vpop.trf.xlu0
  %v4086 = vpop.trf.xlu0
  %v4087 = vpop.trf.xlu0
  %v4088 = vpop.trf.xlu0
  %v4089 = vpop.trf.xlu0
  %v4090 = vpop.trf.xlu0
  %v4091 = vpop.trf.xlu0
  %v4092 = vpop.trf.xlu0
  %v4093 = vpop.trf.xlu0
  %v4094 = vpop.trf.xlu0
  %v4095 = vpop.trf.xlu0
  %4096 = vxpose.xlu0.b32.start [1/16] %v3501, 128
  %4097 = vxpose.xlu0.b32.cont [2/16] %v3503, 128
  %4098 = vxpose.xlu0.b32.cont [3/16] 0.0, 128
  %4099 = vxpose.xlu0.b32.cont [4/16] 0.0, 128
  %4100 = vxpose.xlu0.b32.cont [5/16] 0.0, 128
  %4101 = vxpose.xlu0.b32.cont [6/16] 0.0, 128
  %4102 = vxpose.xlu0.b32.cont [7/16] 0.0, 128
  %4103 = vxpose.xlu0.b32.cont [8/16] 0.0, 128
  %4104 = vxpose.xlu0.b32.cont [9/16] 0.0, 128
  %4105 = vxpose.xlu0.b32.cont [10/16] 0.0, 128
  %4106 = vxpose.xlu0.b32.cont [11/16] 0.0, 128
  %4107 = vxpose.xlu0.b32.cont [12/16] 0.0, 128
  %4108 = vxpose.xlu0.b32.cont [13/16] 0.0, 128
  %4109 = vxpose.xlu0.b32.cont [14/16] 0.0, 128
  %4110 = vxpose.xlu0.b32.cont [15/16] 0.0, 128
  %4111 = vxpose.xlu0.b32.end [16/16] 0.0, 128
  %v4112 = vpop.trf.xlu0
  %v4113 = vpop.trf.xlu0
  %v4114 = vpop.trf.xlu0
  %v4115 = vpop.trf.xlu0
  %v4116 = vpop.trf.xlu0
  %v4117 = vpop.trf.xlu0
  %v4118 = vpop.trf.xlu0
  %v4119 = vpop.trf.xlu0
  %v4120 = vpop.trf.xlu0
  %v4121 = vpop.trf.xlu0
  %v4122 = vpop.trf.xlu0
  %v4123 = vpop.trf.xlu0
  %v4124 = vpop.trf.xlu0
  %v4125 = vpop.trf.xlu0
  %v4126 = vpop.trf.xlu0
  %v4127 = vpop.trf.xlu0
  %4128 = vxpose.xlu0.b32.start [1/16] %v3505, 128
  %4129 = vxpose.xlu0.b32.cont [2/16] %v3507, 128
  %4130 = vxpose.xlu0.b32.cont [3/16] 0.0, 128
  %4131 = vxpose.xlu0.b32.cont [4/16] 0.0, 128
  %4132 = vxpose.xlu0.b32.cont [5/16] 0.0, 128
  %4133 = vxpose.xlu0.b32.cont [6/16] 0.0, 128
  %4134 = vxpose.xlu0.b32.cont [7/16] 0.0, 128
  %4135 = vxpose.xlu0.b32.cont [8/16] 0.0, 128
  %4136 = vxpose.xlu0.b32.cont [9/16] 0.0, 128
  %4137 = vxpose.xlu0.b32.cont [10/16] 0.0, 128
  %4138 = vxpose.xlu0.b32.cont [11/16] 0.0, 128
  %4139 = vxpose.xlu0.b32.cont [12/16] 0.0, 128
  %4140 = vxpose.xlu0.b32.cont [13/16] 0.0, 128
  %4141 = vxpose.xlu0.b32.cont [14/16] 0.0, 128
  %4142 = vxpose.xlu0.b32.cont [15/16] 0.0, 128
  %4143 = vxpose.xlu0.b32.end [16/16] 0.0, 128
  %v4144 = vpop.trf.xlu0
  %v4145 = vpop.trf.xlu0
  %v4146 = vpop.trf.xlu0
  %v4147 = vpop.trf.xlu0
  %v4148 = vpop.trf.xlu0
  %v4149 = vpop.trf.xlu0
  %v4150 = vpop.trf.xlu0
  %v4151 = vpop.trf.xlu0
  %v4152 = vpop.trf.xlu0
  %v4153 = vpop.trf.xlu0
  %v4154 = vpop.trf.xlu0
  %v4155 = vpop.trf.xlu0
  %v4156 = vpop.trf.xlu0
  %v4157 = vpop.trf.xlu0
  %v4158 = vpop.trf.xlu0
  %v4159 = vpop.trf.xlu0
  %4160 = vxpose.xlu0.b32.start [1/16] %v3509, 128
  %4161 = vxpose.xlu0.b32.cont [2/16] %v3511, 128
  %4162 = vxpose.xlu0.b32.cont [3/16] 0.0, 128
  %4163 = vxpose.xlu0.b32.cont [4/16] 0.0, 128
  %4164 = vxpose.xlu0.b32.cont [5/16] 0.0, 128
  %4165 = vxpose.xlu0.b32.cont [6/16] 0.0, 128
  %4166 = vxpose.xlu0.b32.cont [7/16] 0.0, 128
  %4167 = vxpose.xlu0.b32.cont [8/16] 0.0, 128
  %4168 = vxpose.xlu0.b32.cont [9/16] 0.0, 128
  %4169 = vxpose.xlu0.b32.cont [10/16] 0.0, 128
  %4170 = vxpose.xlu0.b32.cont [11/16] 0.0, 128
  %4171 = vxpose.xlu0.b32.cont [12/16] 0.0, 128
  %4172 = vxpose.xlu0.b32.cont [13/16] 0.0, 128
  %4173 = vxpose.xlu0.b32.cont [14/16] 0.0, 128
  %4174 = vxpose.xlu0.b32.cont [15/16] 0.0, 128
  %4175 = vxpose.xlu0.b32.end [16/16] 0.0, 128
  %v4176 = vpop.trf.xlu0
  %v4177 = vpop.trf.xlu0
  %v4178 = vpop.trf.xlu0
  %v4179 = vpop.trf.xlu0
  %v4180 = vpop.trf.xlu0
  %v4181 = vpop.trf.xlu0
  %v4182 = vpop.trf.xlu0
  %v4183 = vpop.trf.xlu0
  %v4184 = vpop.trf.xlu0
  %v4185 = vpop.trf.xlu0
  %v4186 = vpop.trf.xlu0
  %v4187 = vpop.trf.xlu0
  %v4188 = vpop.trf.xlu0
  %v4189 = vpop.trf.xlu0
  %v4190 = vpop.trf.xlu0
  %v4191 = vpop.trf.xlu0
  %4192 = vrot.lane.b32.xlu0 %v261, 119
  %v4193 = vpop.permute.xlu0 %4192
  %4194 = vrot.lane.b32.xlu0 %v266, 119
  %v4195 = vpop.permute.xlu0 %4194
  %4196 = vrot.lane.b32.xlu0 %v271, 119
  %v4197 = vpop.permute.xlu0 %4196
  %4198 = vrot.lane.b32.xlu0 %v276, 119
  %v4199 = vpop.permute.xlu0 %4198
  %4200 = vrot.lane.b32.xlu0 %v281, 119
  %v4201 = vpop.permute.xlu0 %4200
  %4202 = vrot.lane.b32.xlu0 %v286, 119
  %v4203 = vpop.permute.xlu0 %4202
  %4204 = vrot.lane.b32.xlu0 %v291, 119
  %v4205 = vpop.permute.xlu0 %4204
  %4206 = vrot.lane.b32.xlu0 %v296, 119
  %v4207 = vpop.permute.xlu0 %4206
  %4208 = vrot.lane.b32.xlu0 %v301, 119
  %v4209 = vpop.permute.xlu0 %4208
  %4210 = vrot.lane.b32.xlu0 %v306, 119
  %v4211 = vpop.permute.xlu0 %4210
  %4212 = vrot.lane.b32.xlu0 %v311, 119
  %v4213 = vpop.permute.xlu0 %4212
  %4214 = vrot.lane.b32.xlu0 %v316, 119
  %v4215 = vpop.permute.xlu0 %4214
  %4216 = vrot.lane.b32.xlu0 %v321, 119
  %v4217 = vpop.permute.xlu0 %4216
  %4218 = vrot.lane.b32.xlu0 %v326, 119
  %v4219 = vpop.permute.xlu0 %4218
  %4220 = vrot.lane.b32.xlu0 %v331, 119
  %v4221 = vpop.permute.xlu0 %4220
  %4222 = vrot.lane.b32.xlu0 %v336, 119
  %v4223 = vpop.permute.xlu0 %4222
  %4224 = vrot.lane.b32.xlu0 %v341, 119
  %v4225 = vpop.permute.xlu0 %4224
  %4226 = vrot.lane.b32.xlu0 %v346, 119
  %v4227 = vpop.permute.xlu0 %4226
  %4228 = vrot.lane.b32.xlu0 %v351, 119
  %v4229 = vpop.permute.xlu0 %4228
  %4230 = vrot.lane.b32.xlu0 %v356, 119
  %v4231 = vpop.permute.xlu0 %4230
  %4232 = vrot.lane.b32.xlu0 %v361, 119
  %v4233 = vpop.permute.xlu0 %4232
  %4234 = vrot.lane.b32.xlu0 %v366, 119
  %v4235 = vpop.permute.xlu0 %4234
  %4236 = vrot.lane.b32.xlu0 %v371, 119
  %v4237 = vpop.permute.xlu0 %4236
  %4238 = vrot.lane.b32.xlu0 %v376, 119
  %v4239 = vpop.permute.xlu0 %4238
  %4240 = vrot.lane.b32.xlu0 %v381, 119
  %v4241 = vpop.permute.xlu0 %4240
  %4242 = vrot.lane.b32.xlu0 %v386, 119
  %v4243 = vpop.permute.xlu0 %4242
  %4244 = vrot.lane.b32.xlu0 %v391, 119
  %v4245 = vpop.permute.xlu0 %4244
  %4246 = vrot.lane.b32.xlu0 %v396, 119
  %v4247 = vpop.permute.xlu0 %4246
  %4248 = vrot.lane.b32.xlu0 %v401, 119
  %v4249 = vpop.permute.xlu0 %4248
  %4250 = vrot.lane.b32.xlu0 %v406, 119
  %v4251 = vpop.permute.xlu0 %4250
  %4252 = vrot.lane.b32.xlu0 %v411, 119
  %v4253 = vpop.permute.xlu0 %4252
  %4254 = vrot.lane.b32.xlu0 %v416, 119
  %v4255 = vpop.permute.xlu0 %4254
  %4256 = vrot.lane.b32.xlu0 %v421, 119
  %v4257 = vpop.permute.xlu0 %4256
  %4258 = vrot.lane.b32.xlu0 %v426, 119
  %v4259 = vpop.permute.xlu0 %4258
  %4260 = vrot.lane.b32.xlu0 %v431, 119
  %v4261 = vpop.permute.xlu0 %4260
  %4262 = vrot.lane.b32.xlu0 %v436, 119
  %v4263 = vpop.permute.xlu0 %4262
  %4264 = vrot.lane.b32.xlu0 %v441, 119
  %v4265 = vpop.permute.xlu0 %4264
  %4266 = vrot.lane.b32.xlu0 %v446, 119
  %v4267 = vpop.permute.xlu0 %4266
  %4268 = vrot.lane.b32.xlu0 %v451, 119
  %v4269 = vpop.permute.xlu0 %4268
  %4270 = vrot.lane.b32.xlu0 %v456, 119
  %v4271 = vpop.permute.xlu0 %4270
  %4312 = vxpose.xlu0.b32.start [1/16] %v4193, 128
  %4313 = vxpose.xlu0.b32.cont [2/16] %v4195, 128
  %4314 = vxpose.xlu0.b32.cont [3/16] 0.0, 128
  %4315 = vxpose.xlu0.b32.cont [4/16] 0.0, 128
  %4316 = vxpose.xlu0.b32.cont [5/16] 0.0, 128
  %4317 = vxpose.xlu0.b32.cont [6/16] 0.0, 128
  %4318 = vxpose.xlu0.b32.cont [7/16] 0.0, 128
  %4319 = vxpose.xlu0.b32.cont [8/16] 0.0, 128
  %4320 = vxpose.xlu0.b32.cont [9/16] 0.0, 128
  %4321 = vxpose.xlu0.b32.cont [10/16] 0.0, 128
  %4322 = vxpose.xlu0.b32.cont [11/16] 0.0, 128
  %4323 = vxpose.xlu0.b32.cont [12/16] 0.0, 128
  %4324 = vxpose.xlu0.b32.cont [13/16] 0.0, 128
  %4325 = vxpose.xlu0.b32.cont [14/16] 0.0, 128
  %4326 = vxpose.xlu0.b32.cont [15/16] 0.0, 128
  %4327 = vxpose.xlu0.b32.end [16/16] 0.0, 128
  %v4328 = vpop.trf.xlu0
  %v4329 = vpop.trf.xlu0
  %v4330 = vpop.trf.xlu0
  %v4331 = vpop.trf.xlu0
  %v4332 = vpop.trf.xlu0
  %v4333 = vpop.trf.xlu0
  %v4334 = vpop.trf.xlu0
  %v4335 = vpop.trf.xlu0
  %v4336 = vpop.trf.xlu0
  %v4337 = vpop.trf.xlu0
  %v4338 = vpop.trf.xlu0
  %v4339 = vpop.trf.xlu0
  %v4340 = vpop.trf.xlu0
  %v4341 = vpop.trf.xlu0
  %v4342 = vpop.trf.xlu0
  %v4343 = vpop.trf.xlu0
  %4344 = vxpose.xlu0.b32.start [1/16] %v4197, 128
  %4345 = vxpose.xlu0.b32.cont [2/16] %v4199, 128
  %4346 = vxpose.xlu0.b32.cont [3/16] 0.0, 128
  %4347 = vxpose.xlu0.b32.cont [4/16] 0.0, 128
  %4348 = vxpose.xlu0.b32.cont [5/16] 0.0, 128
  %4349 = vxpose.xlu0.b32.cont [6/16] 0.0, 128
  %4350 = vxpose.xlu0.b32.cont [7/16] 0.0, 128
  %4351 = vxpose.xlu0.b32.cont [8/16] 0.0, 128
  %4352 = vxpose.xlu0.b32.cont [9/16] 0.0, 128
  %4353 = vxpose.xlu0.b32.cont [10/16] 0.0, 128
  %4354 = vxpose.xlu0.b32.cont [11/16] 0.0, 128
  %4355 = vxpose.xlu0.b32.cont [12/16] 0.0, 128
  %4356 = vxpose.xlu0.b32.cont [13/16] 0.0, 128
  %4357 = vxpose.xlu0.b32.cont [14/16] 0.0, 128
  %4358 = vxpose.xlu0.b32.cont [15/16] 0.0, 128
  %4359 = vxpose.xlu0.b32.end [16/16] 0.0, 128
  %v4360 = vpop.trf.xlu0
  %v4361 = vpop.trf.xlu0
  %v4362 = vpop.trf.xlu0
  %v4363 = vpop.trf.xlu0
  %v4364 = vpop.trf.xlu0
  %v4365 = vpop.trf.xlu0
  %v4366 = vpop.trf.xlu0
  %v4367 = vpop.trf.xlu0
  %v4368 = vpop.trf.xlu0
  %v4369 = vpop.trf.xlu0
  %v4370 = vpop.trf.xlu0
  %v4371 = vpop.trf.xlu0
  %v4372 = vpop.trf.xlu0
  %v4373 = vpop.trf.xlu0
  %v4374 = vpop.trf.xlu0
  %v4375 = vpop.trf.xlu0
  %4376 = vxpose.xlu0.b32.start [1/16] %v4201, 128
  %4377 = vxpose.xlu0.b32.cont [2/16] %v4203, 128
  %4378 = vxpose.xlu0.b32.cont [3/16] 0.0, 128
  %4379 = vxpose.xlu0.b32.cont [4/16] 0.0, 128
  %4380 = vxpose.xlu0.b32.cont [5/16] 0.0, 128
  %4381 = vxpose.xlu0.b32.cont [6/16] 0.0, 128
  %4382 = vxpose.xlu0.b32.cont [7/16] 0.0, 128
  %4383 = vxpose.xlu0.b32.cont [8/16] 0.0, 128
  %4384 = vxpose.xlu0.b32.cont [9/16] 0.0, 128
  %4385 = vxpose.xlu0.b32.cont [10/16] 0.0, 128
  %4386 = vxpose.xlu0.b32.cont [11/16] 0.0, 128
  %4387 = vxpose.xlu0.b32.cont [12/16] 0.0, 128
  %4388 = vxpose.xlu0.b32.cont [13/16] 0.0, 128
  %4389 = vxpose.xlu0.b32.cont [14/16] 0.0, 128
  %4390 = vxpose.xlu0.b32.cont [15/16] 0.0, 128
  %4391 = vxpose.xlu0.b32.end [16/16] 0.0, 128
  %v4392 = vpop.trf.xlu0
  %v4393 = vpop.trf.xlu0
  %v4394 = vpop.trf.xlu0
  %v4395 = vpop.trf.xlu0
  %v4396 = vpop.trf.xlu0
  %v4397 = vpop.trf.xlu0
  %v4398 = vpop.trf.xlu0
  %v4399 = vpop.trf.xlu0
  %v4400 = vpop.trf.xlu0
  %v4401 = vpop.trf.xlu0
  %v4402 = vpop.trf.xlu0
  %v4403 = vpop.trf.xlu0
  %v4404 = vpop.trf.xlu0
  %v4405 = vpop.trf.xlu0
  %v4406 = vpop.trf.xlu0
  %v4407 = vpop.trf.xlu0
  %4408 = vxpose.xlu0.b32.start [1/16] %v4205, 128
  %4409 = vxpose.xlu0.b32.cont [2/16] %v4207, 128
  %4410 = vxpose.xlu0.b32.cont [3/16] 0.0, 128
  %4411 = vxpose.xlu0.b32.cont [4/16] 0.0, 128
  %4412 = vxpose.xlu0.b32.cont [5/16] 0.0, 128
  %4413 = vxpose.xlu0.b32.cont [6/16] 0.0, 128
  %4414 = vxpose.xlu0.b32.cont [7/16] 0.0, 128
  %4415 = vxpose.xlu0.b32.cont [8/16] 0.0, 128
  %4416 = vxpose.xlu0.b32.cont [9/16] 0.0, 128
  %4417 = vxpose.xlu0.b32.cont [10/16] 0.0, 128
  %4418 = vxpose.xlu0.b32.cont [11/16] 0.0, 128
  %4419 = vxpose.xlu0.b32.cont [12/16] 0.0, 128
  %4420 = vxpose.xlu0.b32.cont [13/16] 0.0, 128
  %4421 = vxpose.xlu0.b32.cont [14/16] 0.0, 128
  %4422 = vxpose.xlu0.b32.cont [15/16] 0.0, 128
  %4423 = vxpose.xlu0.b32.end [16/16] 0.0, 128
  %v4424 = vpop.trf.xlu0
  %v4425 = vpop.trf.xlu0
  %v4426 = vpop.trf.xlu0
  %v4427 = vpop.trf.xlu0
  %v4428 = vpop.trf.xlu0
  %v4429 = vpop.trf.xlu0
  %v4430 = vpop.trf.xlu0
  %v4431 = vpop.trf.xlu0
  %v4432 = vpop.trf.xlu0
  %v4433 = vpop.trf.xlu0
  %v4434 = vpop.trf.xlu0
  %v4435 = vpop.trf.xlu0
  %v4436 = vpop.trf.xlu0
  %v4437 = vpop.trf.xlu0
  %v4438 = vpop.trf.xlu0
  %v4439 = vpop.trf.xlu0
  %4440 = vxpose.xlu0.b32.start [1/16] %v4209, 128
  %4441 = vxpose.xlu0.b32.cont [2/16] %v4211, 128
  %4442 = vxpose.xlu0.b32.cont [3/16] 0.0, 128
  %4443 = vxpose.xlu0.b32.cont [4/16] 0.0, 128
  %4444 = vxpose.xlu0.b32.cont [5/16] 0.0, 128
  %4445 = vxpose.xlu0.b32.cont [6/16] 0.0, 128
  %4446 = vxpose.xlu0.b32.cont [7/16] 0.0, 128
  %4447 = vxpose.xlu0.b32.cont [8/16] 0.0, 128
  %4448 = vxpose.xlu0.b32.cont [9/16] 0.0, 128
  %4449 = vxpose.xlu0.b32.cont [10/16] 0.0, 128
  %4450 = vxpose.xlu0.b32.cont [11/16] 0.0, 128
  %4451 = vxpose.xlu0.b32.cont [12/16] 0.0, 128
  %4452 = vxpose.xlu0.b32.cont [13/16] 0.0, 128
  %4453 = vxpose.xlu0.b32.cont [14/16] 0.0, 128
  %4454 = vxpose.xlu0.b32.cont [15/16] 0.0, 128
  %4455 = vxpose.xlu0.b32.end [16/16] 0.0, 128
  %v4456 = vpop.trf.xlu0
  %v4457 = vpop.trf.xlu0
  %v4458 = vpop.trf.xlu0
  %v4459 = vpop.trf.xlu0
  %v4460 = vpop.trf.xlu0
  %v4461 = vpop.trf.xlu0
  %v4462 = vpop.trf.xlu0
  %v4463 = vpop.trf.xlu0
  %v4464 = vpop.trf.xlu0
  %v4465 = vpop.trf.xlu0
  %v4466 = vpop.trf.xlu0
  %v4467 = vpop.trf.xlu0
  %v4468 = vpop.trf.xlu0
  %v4469 = vpop.trf.xlu0
  %v4470 = vpop.trf.xlu0
  %v4471 = vpop.trf.xlu0
  %4472 = vxpose.xlu0.b32.start [1/16] %v4213, 128
  %4473 = vxpose.xlu0.b32.cont [2/16] %v4215, 128
  %4474 = vxpose.xlu0.b32.cont [3/16] 0.0, 128
  %4475 = vxpose.xlu0.b32.cont [4/16] 0.0, 128
  %4476 = vxpose.xlu0.b32.cont [5/16] 0.0, 128
  %4477 = vxpose.xlu0.b32.cont [6/16] 0.0, 128
  %4478 = vxpose.xlu0.b32.cont [7/16] 0.0, 128
  %4479 = vxpose.xlu0.b32.cont [8/16] 0.0, 128
  %4480 = vxpose.xlu0.b32.cont [9/16] 0.0, 128
  %4481 = vxpose.xlu0.b32.cont [10/16] 0.0, 128
  %4482 = vxpose.xlu0.b32.cont [11/16] 0.0, 128
  %4483 = vxpose.xlu0.b32.cont [12/16] 0.0, 128
  %4484 = vxpose.xlu0.b32.cont [13/16] 0.0, 128
  %4485 = vxpose.xlu0.b32.cont [14/16] 0.0, 128
  %4486 = vxpose.xlu0.b32.cont [15/16] 0.0, 128
  %4487 = vxpose.xlu0.b32.end [16/16] 0.0, 128
  %v4488 = vpop.trf.xlu0
  %v4489 = vpop.trf.xlu0
  %v4490 = vpop.trf.xlu0
  %v4491 = vpop.trf.xlu0
  %v4492 = vpop.trf.xlu0
  %v4493 = vpop.trf.xlu0
  %v4494 = vpop.trf.xlu0
  %v4495 = vpop.trf.xlu0
  %v4496 = vpop.trf.xlu0
  %v4497 = vpop.trf.xlu0
  %v4498 = vpop.trf.xlu0
  %v4499 = vpop.trf.xlu0
  %v4500 = vpop.trf.xlu0
  %v4501 = vpop.trf.xlu0
  %v4502 = vpop.trf.xlu0
  %v4503 = vpop.trf.xlu0
  %4504 = vxpose.xlu0.b32.start [1/16] %v4217, 128
  %4505 = vxpose.xlu0.b32.cont [2/16] %v4219, 128
  %4506 = vxpose.xlu0.b32.cont [3/16] 0.0, 128
  %4507 = vxpose.xlu0.b32.cont [4/16] 0.0, 128
  %4508 = vxpose.xlu0.b32.cont [5/16] 0.0, 128
  %4509 = vxpose.xlu0.b32.cont [6/16] 0.0, 128
  %4510 = vxpose.xlu0.b32.cont [7/16] 0.0, 128
  %4511 = vxpose.xlu0.b32.cont [8/16] 0.0, 128
  %4512 = vxpose.xlu0.b32.cont [9/16] 0.0, 128
  %4513 = vxpose.xlu0.b32.cont [10/16] 0.0, 128
  %4514 = vxpose.xlu0.b32.cont [11/16] 0.0, 128
  %4515 = vxpose.xlu0.b32.cont [12/16] 0.0, 128
  %4516 = vxpose.xlu0.b32.cont [13/16] 0.0, 128
  %4517 = vxpose.xlu0.b32.cont [14/16] 0.0, 128
  %4518 = vxpose.xlu0.b32.cont [15/16] 0.0, 128
  %4519 = vxpose.xlu0.b32.end [16/16] 0.0, 128
  %v4520 = vpop.trf.xlu0
  %v4521 = vpop.trf.xlu0
  %v4522 = vpop.trf.xlu0
  %v4523 = vpop.trf.xlu0
  %v4524 = vpop.trf.xlu0
  %v4525 = vpop.trf.xlu0
  %v4526 = vpop.trf.xlu0
  %v4527 = vpop.trf.xlu0
  %v4528 = vpop.trf.xlu0
  %v4529 = vpop.trf.xlu0
  %v4530 = vpop.trf.xlu0
  %v4531 = vpop.trf.xlu0
  %v4532 = vpop.trf.xlu0
  %v4533 = vpop.trf.xlu0
  %v4534 = vpop.trf.xlu0
  %v4535 = vpop.trf.xlu0
  %4536 = vxpose.xlu0.b32.start [1/16] %v4221, 128
  %4537 = vxpose.xlu0.b32.cont [2/16] %v4223, 128
  %4538 = vxpose.xlu0.b32.cont [3/16] 0.0, 128
  %4539 = vxpose.xlu0.b32.cont [4/16] 0.0, 128
  %4540 = vxpose.xlu0.b32.cont [5/16] 0.0, 128
  %4541 = vxpose.xlu0.b32.cont [6/16] 0.0, 128
  %4542 = vxpose.xlu0.b32.cont [7/16] 0.0, 128
  %4543 = vxpose.xlu0.b32.cont [8/16] 0.0, 128
  %4544 = vxpose.xlu0.b32.cont [9/16] 0.0, 128
  %4545 = vxpose.xlu0.b32.cont [10/16] 0.0, 128
  %4546 = vxpose.xlu0.b32.cont [11/16] 0.0, 128
  %4547 = vxpose.xlu0.b32.cont [12/16] 0.0, 128
  %4548 = vxpose.xlu0.b32.cont [13/16] 0.0, 128
  %4549 = vxpose.xlu0.b32.cont [14/16] 0.0, 128
  %4550 = vxpose.xlu0.b32.cont [15/16] 0.0, 128
  %4551 = vxpose.xlu0.b32.end [16/16] 0.0, 128
  %v4552 = vpop.trf.xlu0
  %v4553 = vpop.trf.xlu0
  %v4554 = vpop.trf.xlu0
  %v4555 = vpop.trf.xlu0
  %v4556 = vpop.trf.xlu0
  %v4557 = vpop.trf.xlu0
  %v4558 = vpop.trf.xlu0
  %v4559 = vpop.trf.xlu0
  %v4560 = vpop.trf.xlu0
  %v4561 = vpop.trf.xlu0
  %v4562 = vpop.trf.xlu0
  %v4563 = vpop.trf.xlu0
  %v4564 = vpop.trf.xlu0
  %v4565 = vpop.trf.xlu0
  %v4566 = vpop.trf.xlu0
  %v4567 = vpop.trf.xlu0
  %4568 = vxpose.xlu0.b32.start [1/16] %v4225, 128
  %4569 = vxpose.xlu0.b32.cont [2/16] %v4227, 128
  %4570 = vxpose.xlu0.b32.cont [3/16] 0.0, 128
  %4571 = vxpose.xlu0.b32.cont [4/16] 0.0, 128
  %4572 = vxpose.xlu0.b32.cont [5/16] 0.0, 128
  %4573 = vxpose.xlu0.b32.cont [6/16] 0.0, 128
  %4574 = vxpose.xlu0.b32.cont [7/16] 0.0, 128
  %4575 = vxpose.xlu0.b32.cont [8/16] 0.0, 128
  %4576 = vxpose.xlu0.b32.cont [9/16] 0.0, 128
  %4577 = vxpose.xlu0.b32.cont [10/16] 0.0, 128
  %4578 = vxpose.xlu0.b32.cont [11/16] 0.0, 128
  %4579 = vxpose.xlu0.b32.cont [12/16] 0.0, 128
  %4580 = vxpose.xlu0.b32.cont [13/16] 0.0, 128
  %4581 = vxpose.xlu0.b32.cont [14/16] 0.0, 128
  %4582 = vxpose.xlu0.b32.cont [15/16] 0.0, 128
  %4583 = vxpose.xlu0.b32.end [16/16] 0.0, 128
  %v4584 = vpop.trf.xlu0
  %v4585 = vpop.trf.xlu0
  %v4586 = vpop.trf.xlu0
  %v4587 = vpop.trf.xlu0
  %v4588 = vpop.trf.xlu0
  %v4589 = vpop.trf.xlu0
  %v4590 = vpop.trf.xlu0
  %v4591 = vpop.trf.xlu0
  %v4592 = vpop.trf.xlu0
  %v4593 = vpop.trf.xlu0
  %v4594 = vpop.trf.xlu0
  %v4595 = vpop.trf.xlu0
  %v4596 = vpop.trf.xlu0
  %v4597 = vpop.trf.xlu0
  %v4598 = vpop.trf.xlu0
  %v4599 = vpop.trf.xlu0
  %4600 = vxpose.xlu0.b32.start [1/16] %v4229, 128
  %4601 = vxpose.xlu0.b32.cont [2/16] %v4231, 128
  %4602 = vxpose.xlu0.b32.cont [3/16] 0.0, 128
  %4603 = vxpose.xlu0.b32.cont [4/16] 0.0, 128
  %4604 = vxpose.xlu0.b32.cont [5/16] 0.0, 128
  %4605 = vxpose.xlu0.b32.cont [6/16] 0.0, 128
  %4606 = vxpose.xlu0.b32.cont [7/16] 0.0, 128
  %4607 = vxpose.xlu0.b32.cont [8/16] 0.0, 128
  %4608 = vxpose.xlu0.b32.cont [9/16] 0.0, 128
  %4609 = vxpose.xlu0.b32.cont [10/16] 0.0, 128
  %4610 = vxpose.xlu0.b32.cont [11/16] 0.0, 128
  %4611 = vxpose.xlu0.b32.cont [12/16] 0.0, 128
  %4612 = vxpose.xlu0.b32.cont [13/16] 0.0, 128
  %4613 = vxpose.xlu0.b32.cont [14/16] 0.0, 128
  %4614 = vxpose.xlu0.b32.cont [15/16] 0.0, 128
  %4615 = vxpose.xlu0.b32.end [16/16] 0.0, 128
  %v4616 = vpop.trf.xlu0
  %v4617 = vpop.trf.xlu0
  %v4618 = vpop.trf.xlu0
  %v4619 = vpop.trf.xlu0
  %v4620 = vpop.trf.xlu0
  %v4621 = vpop.trf.xlu0
  %v4622 = vpop.trf.xlu0
  %v4623 = vpop.trf.xlu0
  %v4624 = vpop.trf.xlu0
  %v4625 = vpop.trf.xlu0
  %v4626 = vpop.trf.xlu0
  %v4627 = vpop.trf.xlu0
  %v4628 = vpop.trf.xlu0
  %v4629 = vpop.trf.xlu0
  %v4630 = vpop.trf.xlu0
  %v4631 = vpop.trf.xlu0
  %4632 = vxpose.xlu0.b32.start [1/16] %v4233, 128
  %4633 = vxpose.xlu0.b32.cont [2/16] %v4235, 128
  %4634 = vxpose.xlu0.b32.cont [3/16] 0.0, 128
  %4635 = vxpose.xlu0.b32.cont [4/16] 0.0, 128
  %4636 = vxpose.xlu0.b32.cont [5/16] 0.0, 128
  %4637 = vxpose.xlu0.b32.cont [6/16] 0.0, 128
  %4638 = vxpose.xlu0.b32.cont [7/16] 0.0, 128
  %4639 = vxpose.xlu0.b32.cont [8/16] 0.0, 128
  %4640 = vxpose.xlu0.b32.cont [9/16] 0.0, 128
  %4641 = vxpose.xlu0.b32.cont [10/16] 0.0, 128
  %4642 = vxpose.xlu0.b32.cont [11/16] 0.0, 128
  %4643 = vxpose.xlu0.b32.cont [12/16] 0.0, 128
  %4644 = vxpose.xlu0.b32.cont [13/16] 0.0, 128
  %4645 = vxpose.xlu0.b32.cont [14/16] 0.0, 128
  %4646 = vxpose.xlu0.b32.cont [15/16] 0.0, 128
  %4647 = vxpose.xlu0.b32.end [16/16] 0.0, 128
  %v4648 = vpop.trf.xlu0
  %v4649 = vpop.trf.xlu0
  %v4650 = vpop.trf.xlu0
  %v4651 = vpop.trf.xlu0
  %v4652 = vpop.trf.xlu0
  %v4653 = vpop.trf.xlu0
  %v4654 = vpop.trf.xlu0
  %v4655 = vpop.trf.xlu0
  %v4656 = vpop.trf.xlu0
  %v4657 = vpop.trf.xlu0
  %v4658 = vpop.trf.xlu0
  %v4659 = vpop.trf.xlu0
  %v4660 = vpop.trf.xlu0
  %v4661 = vpop.trf.xlu0
  %v4662 = vpop.trf.xlu0
  %v4663 = vpop.trf.xlu0
  %4664 = vxpose.xlu0.b32.start [1/16] %v4237, 128
  %4665 = vxpose.xlu0.b32.cont [2/16] %v4239, 128
  %4666 = vxpose.xlu0.b32.cont [3/16] 0.0, 128
  %4667 = vxpose.xlu0.b32.cont [4/16] 0.0, 128
  %4668 = vxpose.xlu0.b32.cont [5/16] 0.0, 128
  %4669 = vxpose.xlu0.b32.cont [6/16] 0.0, 128
  %4670 = vxpose.xlu0.b32.cont [7/16] 0.0, 128
  %4671 = vxpose.xlu0.b32.cont [8/16] 0.0, 128
  %4672 = vxpose.xlu0.b32.cont [9/16] 0.0, 128
  %4673 = vxpose.xlu0.b32.cont [10/16] 0.0, 128
  %4674 = vxpose.xlu0.b32.cont [11/16] 0.0, 128
  %4675 = vxpose.xlu0.b32.cont [12/16] 0.0, 128
  %4676 = vxpose.xlu0.b32.cont [13/16] 0.0, 128
  %4677 = vxpose.xlu0.b32.cont [14/16] 0.0, 128
  %4678 = vxpose.xlu0.b32.cont [15/16] 0.0, 128
  %4679 = vxpose.xlu0.b32.end [16/16] 0.0, 128
  %v4680 = vpop.trf.xlu0
  %v4681 = vpop.trf.xlu0
  %v4682 = vpop.trf.xlu0
  %v4683 = vpop.trf.xlu0
  %v4684 = vpop.trf.xlu0
  %v4685 = vpop.trf.xlu0
  %v4686 = vpop.trf.xlu0
  %v4687 = vpop.trf.xlu0
  %v4688 = vpop.trf.xlu0
  %v4689 = vpop.trf.xlu0
  %v4690 = vpop.trf.xlu0
  %v4691 = vpop.trf.xlu0
  %v4692 = vpop.trf.xlu0
  %v4693 = vpop.trf.xlu0
  %v4694 = vpop.trf.xlu0
  %v4695 = vpop.trf.xlu0
  %4696 = vxpose.xlu0.b32.start [1/16] %v4241, 128
  %4697 = vxpose.xlu0.b32.cont [2/16] %v4243, 128
  %4698 = vxpose.xlu0.b32.cont [3/16] 0.0, 128
  %4699 = vxpose.xlu0.b32.cont [4/16] 0.0, 128
  %4700 = vxpose.xlu0.b32.cont [5/16] 0.0, 128
  %4701 = vxpose.xlu0.b32.cont [6/16] 0.0, 128
  %4702 = vxpose.xlu0.b32.cont [7/16] 0.0, 128
  %4703 = vxpose.xlu0.b32.cont [8/16] 0.0, 128
  %4704 = vxpose.xlu0.b32.cont [9/16] 0.0, 128
  %4705 = vxpose.xlu0.b32.cont [10/16] 0.0, 128
  %4706 = vxpose.xlu0.b32.cont [11/16] 0.0, 128
  %4707 = vxpose.xlu0.b32.cont [12/16] 0.0, 128
  %4708 = vxpose.xlu0.b32.cont [13/16] 0.0, 128
  %4709 = vxpose.xlu0.b32.cont [14/16] 0.0, 128
  %4710 = vxpose.xlu0.b32.cont [15/16] 0.0, 128
  %4711 = vxpose.xlu0.b32.end [16/16] 0.0, 128
  %v4712 = vpop.trf.xlu0
  %v4713 = vpop.trf.xlu0
  %v4714 = vpop.trf.xlu0
  %v4715 = vpop.trf.xlu0
  %v4716 = vpop.trf.xlu0
  %v4717 = vpop.trf.xlu0
  %v4718 = vpop.trf.xlu0
  %v4719 = vpop.trf.xlu0
  %v4720 = vpop.trf.xlu0
  %v4721 = vpop.trf.xlu0
  %v4722 = vpop.trf.xlu0
  %v4723 = vpop.trf.xlu0
  %v4724 = vpop.trf.xlu0
  %v4725 = vpop.trf.xlu0
  %v4726 = vpop.trf.xlu0
  %v4727 = vpop.trf.xlu0
  %4728 = vxpose.xlu0.b32.start [1/16] %v4245, 128
  %4729 = vxpose.xlu0.b32.cont [2/16] %v4247, 128
  %4730 = vxpose.xlu0.b32.cont [3/16] 0.0, 128
  %4731 = vxpose.xlu0.b32.cont [4/16] 0.0, 128
  %4732 = vxpose.xlu0.b32.cont [5/16] 0.0, 128
  %4733 = vxpose.xlu0.b32.cont [6/16] 0.0, 128
  %4734 = vxpose.xlu0.b32.cont [7/16] 0.0, 128
  %4735 = vxpose.xlu0.b32.cont [8/16] 0.0, 128
  %4736 = vxpose.xlu0.b32.cont [9/16] 0.0, 128
  %4737 = vxpose.xlu0.b32.cont [10/16] 0.0, 128
  %4738 = vxpose.xlu0.b32.cont [11/16] 0.0, 128
  %4739 = vxpose.xlu0.b32.cont [12/16] 0.0, 128
  %4740 = vxpose.xlu0.b32.cont [13/16] 0.0, 128
  %4741 = vxpose.xlu0.b32.cont [14/16] 0.0, 128
  %4742 = vxpose.xlu0.b32.cont [15/16] 0.0, 128
  %4743 = vxpose.xlu0.b32.end [16/16] 0.0, 128
  %v4744 = vpop.trf.xlu0
  %v4745 = vpop.trf.xlu0
  %v4746 = vpop.trf.xlu0
  %v4747 = vpop.trf.xlu0
  %v4748 = vpop.trf.xlu0
  %v4749 = vpop.trf.xlu0
  %v4750 = vpop.trf.xlu0
  %v4751 = vpop.trf.xlu0
  %v4752 = vpop.trf.xlu0
  %v4753 = vpop.trf.xlu0
  %v4754 = vpop.trf.xlu0
  %v4755 = vpop.trf.xlu0
  %v4756 = vpop.trf.xlu0
  %v4757 = vpop.trf.xlu0
  %v4758 = vpop.trf.xlu0
  %v4759 = vpop.trf.xlu0
  %4760 = vxpose.xlu0.b32.start [1/16] %v4249, 128
  %4761 = vxpose.xlu0.b32.cont [2/16] %v4251, 128
  %4762 = vxpose.xlu0.b32.cont [3/16] 0.0, 128
  %4763 = vxpose.xlu0.b32.cont [4/16] 0.0, 128
  %4764 = vxpose.xlu0.b32.cont [5/16] 0.0, 128
  %4765 = vxpose.xlu0.b32.cont [6/16] 0.0, 128
  %4766 = vxpose.xlu0.b32.cont [7/16] 0.0, 128
  %4767 = vxpose.xlu0.b32.cont [8/16] 0.0, 128
  %4768 = vxpose.xlu0.b32.cont [9/16] 0.0, 128
  %4769 = vxpose.xlu0.b32.cont [10/16] 0.0, 128
  %4770 = vxpose.xlu0.b32.cont [11/16] 0.0, 128
  %4771 = vxpose.xlu0.b32.cont [12/16] 0.0, 128
  %4772 = vxpose.xlu0.b32.cont [13/16] 0.0, 128
  %4773 = vxpose.xlu0.b32.cont [14/16] 0.0, 128
  %4774 = vxpose.xlu0.b32.cont [15/16] 0.0, 128
  %4775 = vxpose.xlu0.b32.end [16/16] 0.0, 128
  %v4776 = vpop.trf.xlu0
  %v4777 = vpop.trf.xlu0
  %v4778 = vpop.trf.xlu0
  %v4779 = vpop.trf.xlu0
  %v4780 = vpop.trf.xlu0
  %v4781 = vpop.trf.xlu0
  %v4782 = vpop.trf.xlu0
  %v4783 = vpop.trf.xlu0
  %v4784 = vpop.trf.xlu0
  %v4785 = vpop.trf.xlu0
  %v4786 = vpop.trf.xlu0
  %v4787 = vpop.trf.xlu0
  %v4788 = vpop.trf.xlu0
  %v4789 = vpop.trf.xlu0
  %v4790 = vpop.trf.xlu0
  %v4791 = vpop.trf.xlu0
  %4792 = vxpose.xlu0.b32.start [1/16] %v4253, 128
  %4793 = vxpose.xlu0.b32.cont [2/16] %v4255, 128
  %4794 = vxpose.xlu0.b32.cont [3/16] 0.0, 128
  %4795 = vxpose.xlu0.b32.cont [4/16] 0.0, 128
  %4796 = vxpose.xlu0.b32.cont [5/16] 0.0, 128
  %4797 = vxpose.xlu0.b32.cont [6/16] 0.0, 128
  %4798 = vxpose.xlu0.b32.cont [7/16] 0.0, 128
  %4799 = vxpose.xlu0.b32.cont [8/16] 0.0, 128
  %4800 = vxpose.xlu0.b32.cont [9/16] 0.0, 128
  %4801 = vxpose.xlu0.b32.cont [10/16] 0.0, 128
  %4802 = vxpose.xlu0.b32.cont [11/16] 0.0, 128
  %4803 = vxpose.xlu0.b32.cont [12/16] 0.0, 128
  %4804 = vxpose.xlu0.b32.cont [13/16] 0.0, 128
  %4805 = vxpose.xlu0.b32.cont [14/16] 0.0, 128
  %4806 = vxpose.xlu0.b32.cont [15/16] 0.0, 128
  %4807 = vxpose.xlu0.b32.end [16/16] 0.0, 128
  %v4808 = vpop.trf.xlu0
  %v4809 = vpop.trf.xlu0
  %v4810 = vpop.trf.xlu0
  %v4811 = vpop.trf.xlu0
  %v4812 = vpop.trf.xlu0
  %v4813 = vpop.trf.xlu0
  %v4814 = vpop.trf.xlu0
  %v4815 = vpop.trf.xlu0
  %v4816 = vpop.trf.xlu0
  %v4817 = vpop.trf.xlu0
  %v4818 = vpop.trf.xlu0
  %v4819 = vpop.trf.xlu0
  %v4820 = vpop.trf.xlu0
  %v4821 = vpop.trf.xlu0
  %v4822 = vpop.trf.xlu0
  %v4823 = vpop.trf.xlu0
  %4824 = vxpose.xlu0.b32.start [1/16] %v4257, 128
  %4825 = vxpose.xlu0.b32.cont [2/16] %v4259, 128
  %4826 = vxpose.xlu0.b32.cont [3/16] 0.0, 128
  %4827 = vxpose.xlu0.b32.cont [4/16] 0.0, 128
  %4828 = vxpose.xlu0.b32.cont [5/16] 0.0, 128
  %4829 = vxpose.xlu0.b32.cont [6/16] 0.0, 128
  %4830 = vxpose.xlu0.b32.cont [7/16] 0.0, 128
  %4831 = vxpose.xlu0.b32.cont [8/16] 0.0, 128
  %4832 = vxpose.xlu0.b32.cont [9/16] 0.0, 128
  %4833 = vxpose.xlu0.b32.cont [10/16] 0.0, 128
  %4834 = vxpose.xlu0.b32.cont [11/16] 0.0, 128
  %4835 = vxpose.xlu0.b32.cont [12/16] 0.0, 128
  %4836 = vxpose.xlu0.b32.cont [13/16] 0.0, 128
  %4837 = vxpose.xlu0.b32.cont [14/16] 0.0, 128
  %4838 = vxpose.xlu0.b32.cont [15/16] 0.0, 128
  %4839 = vxpose.xlu0.b32.end [16/16] 0.0, 128
  %v4840 = vpop.trf.xlu0
  %v4841 = vpop.trf.xlu0
  %v4842 = vpop.trf.xlu0
  %v4843 = vpop.trf.xlu0
  %v4844 = vpop.trf.xlu0
  %v4845 = vpop.trf.xlu0
  %v4846 = vpop.trf.xlu0
  %v4847 = vpop.trf.xlu0
  %v4848 = vpop.trf.xlu0
  %v4849 = vpop.trf.xlu0
  %v4850 = vpop.trf.xlu0
  %v4851 = vpop.trf.xlu0
  %v4852 = vpop.trf.xlu0
  %v4853 = vpop.trf.xlu0
  %v4854 = vpop.trf.xlu0
  %v4855 = vpop.trf.xlu0
  %4856 = vxpose.xlu0.b32.start [1/16] %v4261, 128
  %4857 = vxpose.xlu0.b32.cont [2/16] %v4263, 128
  %4858 = vxpose.xlu0.b32.cont [3/16] 0.0, 128
  %4859 = vxpose.xlu0.b32.cont [4/16] 0.0, 128
  %4860 = vxpose.xlu0.b32.cont [5/16] 0.0, 128
  %4861 = vxpose.xlu0.b32.cont [6/16] 0.0, 128
  %4862 = vxpose.xlu0.b32.cont [7/16] 0.0, 128
  %4863 = vxpose.xlu0.b32.cont [8/16] 0.0, 128
  %4864 = vxpose.xlu0.b32.cont [9/16] 0.0, 128
  %4865 = vxpose.xlu0.b32.cont [10/16] 0.0, 128
  %4866 = vxpose.xlu0.b32.cont [11/16] 0.0, 128
  %4867 = vxpose.xlu0.b32.cont [12/16] 0.0, 128
  %4868 = vxpose.xlu0.b32.cont [13/16] 0.0, 128
  %4869 = vxpose.xlu0.b32.cont [14/16] 0.0, 128
  %4870 = vxpose.xlu0.b32.cont [15/16] 0.0, 128
  %4871 = vxpose.xlu0.b32.end [16/16] 0.0, 128
  %v4872 = vpop.trf.xlu0
  %v4873 = vpop.trf.xlu0
  %v4874 = vpop.trf.xlu0
  %v4875 = vpop.trf.xlu0
  %v4876 = vpop.trf.xlu0
  %v4877 = vpop.trf.xlu0
  %v4878 = vpop.trf.xlu0
  %v4879 = vpop.trf.xlu0
  %v4880 = vpop.trf.xlu0
  %v4881 = vpop.trf.xlu0
  %v4882 = vpop.trf.xlu0
  %v4883 = vpop.trf.xlu0
  %v4884 = vpop.trf.xlu0
  %v4885 = vpop.trf.xlu0
  %v4886 = vpop.trf.xlu0
  %v4887 = vpop.trf.xlu0
  %4888 = vxpose.xlu0.b32.start [1/16] %v4265, 128
  %4889 = vxpose.xlu0.b32.cont [2/16] %v4267, 128
  %4890 = vxpose.xlu0.b32.cont [3/16] 0.0, 128
  %4891 = vxpose.xlu0.b32.cont [4/16] 0.0, 128
  %4892 = vxpose.xlu0.b32.cont [5/16] 0.0, 128
  %4893 = vxpose.xlu0.b32.cont [6/16] 0.0, 128
  %4894 = vxpose.xlu0.b32.cont [7/16] 0.0, 128
  %4895 = vxpose.xlu0.b32.cont [8/16] 0.0, 128
  %4896 = vxpose.xlu0.b32.cont [9/16] 0.0, 128
  %4897 = vxpose.xlu0.b32.cont [10/16] 0.0, 128
  %4898 = vxpose.xlu0.b32.cont [11/16] 0.0, 128
  %4899 = vxpose.xlu0.b32.cont [12/16] 0.0, 128
  %4900 = vxpose.xlu0.b32.cont [13/16] 0.0, 128
  %4901 = vxpose.xlu0.b32.cont [14/16] 0.0, 128
  %4902 = vxpose.xlu0.b32.cont [15/16] 0.0, 128
  %4903 = vxpose.xlu0.b32.end [16/16] 0.0, 128
  %v4904 = vpop.trf.xlu0
  %v4905 = vpop.trf.xlu0
  %v4906 = vpop.trf.xlu0
  %v4907 = vpop.trf.xlu0
  %v4908 = vpop.trf.xlu0
  %v4909 = vpop.trf.xlu0
  %v4910 = vpop.trf.xlu0
  %v4911 = vpop.trf.xlu0
  %v4912 = vpop.trf.xlu0
  %v4913 = vpop.trf.xlu0
  %v4914 = vpop.trf.xlu0
  %v4915 = vpop.trf.xlu0
  %v4916 = vpop.trf.xlu0
  %v4917 = vpop.trf.xlu0
  %v4918 = vpop.trf.xlu0
  %v4919 = vpop.trf.xlu0
  %4920 = vxpose.xlu0.b32.start [1/16] %v4269, 128
  %4921 = vxpose.xlu0.b32.cont [2/16] %v4271, 128
  %4922 = vxpose.xlu0.b32.cont [3/16] 0.0, 128
  %4923 = vxpose.xlu0.b32.cont [4/16] 0.0, 128
  %4924 = vxpose.xlu0.b32.cont [5/16] 0.0, 128
  %4925 = vxpose.xlu0.b32.cont [6/16] 0.0, 128
  %4926 = vxpose.xlu0.b32.cont [7/16] 0.0, 128
  %4927 = vxpose.xlu0.b32.cont [8/16] 0.0, 128
  %4928 = vxpose.xlu0.b32.cont [9/16] 0.0, 128
  %4929 = vxpose.xlu0.b32.cont [10/16] 0.0, 128
  %4930 = vxpose.xlu0.b32.cont [11/16] 0.0, 128
  %4931 = vxpose.xlu0.b32.cont [12/16] 0.0, 128
  %4932 = vxpose.xlu0.b32.cont [13/16] 0.0, 128
  %4933 = vxpose.xlu0.b32.cont [14/16] 0.0, 128
  %4934 = vxpose.xlu0.b32.cont [15/16] 0.0, 128
  %4935 = vxpose.xlu0.b32.end [16/16] 0.0, 128
  %v4936 = vpop.trf.xlu0
  %v4937 = vpop.trf.xlu0
  %v4938 = vpop.trf.xlu0
  %v4939 = vpop.trf.xlu0
  %v4940 = vpop.trf.xlu0
  %v4941 = vpop.trf.xlu0
  %v4942 = vpop.trf.xlu0
  %v4943 = vpop.trf.xlu0
  %v4944 = vpop.trf.xlu0
  %v4945 = vpop.trf.xlu0
  %v4946 = vpop.trf.xlu0
  %v4947 = vpop.trf.xlu0
  %v4948 = vpop.trf.xlu0
  %v4949 = vpop.trf.xlu0
  %v4950 = vpop.trf.xlu0
  %v4951 = vpop.trf.xlu0
  %4952 = vset.pattern.permute.xlu0 2
  %4953 = vperm.xlu0 %4952, %v261
  %v4954 = vpop.permute.xlu0 %4953
  %4956 = vset.pattern.permute.xlu0 2
  %4957 = vperm.xlu0 %4956, %v266
  %v4958 = vpop.permute.xlu0 %4957
  %4960 = vset.pattern.permute.xlu0 2
  %4961 = vperm.xlu0 %4960, %v271
  %v4962 = vpop.permute.xlu0 %4961
  %4964 = vset.pattern.permute.xlu0 2
  %4965 = vperm.xlu0 %4964, %v276
  %v4966 = vpop.permute.xlu0 %4965
  %4968 = vset.pattern.permute.xlu0 2
  %4969 = vperm.xlu0 %4968, %v281
  %v4970 = vpop.permute.xlu0 %4969
  %4972 = vset.pattern.permute.xlu0 2
  %4973 = vperm.xlu0 %4972, %v286
  %v4974 = vpop.permute.xlu0 %4973
  %4976 = vset.pattern.permute.xlu0 2
  %4977 = vperm.xlu0 %4976, %v291
  %v4978 = vpop.permute.xlu0 %4977
  %4980 = vset.pattern.permute.xlu0 2
  %4981 = vperm.xlu0 %4980, %v296
  %v4982 = vpop.permute.xlu0 %4981
  %4984 = vset.pattern.permute.xlu0 2
  %4985 = vperm.xlu0 %4984, %v301
  %v4986 = vpop.permute.xlu0 %4985
  %4988 = vset.pattern.permute.xlu0 2
  %4989 = vperm.xlu0 %4988, %v306
  %v4990 = vpop.permute.xlu0 %4989
  %4992 = vset.pattern.permute.xlu0 2
  %4993 = vperm.xlu0 %4992, %v311
  %v4994 = vpop.permute.xlu0 %4993
  %4996 = vset.pattern.permute.xlu0 2
  %4997 = vperm.xlu0 %4996, %v316
  %v4998 = vpop.permute.xlu0 %4997
  %5000 = vset.pattern.permute.xlu0 2
  %5001 = vperm.xlu0 %5000, %v321
  %v5002 = vpop.permute.xlu0 %5001
  %5004 = vset.pattern.permute.xlu0 2
  %5005 = vperm.xlu0 %5004, %v326
  %v5006 = vpop.permute.xlu0 %5005
  %5008 = vset.pattern.permute.xlu0 2
  %5009 = vperm.xlu0 %5008, %v331
  %v5010 = vpop.permute.xlu0 %5009
  %5012 = vset.pattern.permute.xlu0 2
  %5013 = vperm.xlu0 %5012, %v336
  %v5014 = vpop.permute.xlu0 %5013
  %5016 = vset.pattern.permute.xlu0 2
  %5017 = vperm.xlu0 %5016, %v341
  %v5018 = vpop.permute.xlu0 %5017
  %5020 = vset.pattern.permute.xlu0 2
  %5021 = vperm.xlu0 %5020, %v346
  %v5022 = vpop.permute.xlu0 %5021
  %5024 = vset.pattern.permute.xlu0 2
  %5025 = vperm.xlu0 %5024, %v351
  %v5026 = vpop.permute.xlu0 %5025
  %5028 = vset.pattern.permute.xlu0 2
  %5029 = vperm.xlu0 %5028, %v356
  %v5030 = vpop.permute.xlu0 %5029
  %5032 = vset.pattern.permute.xlu0 2
  %5033 = vperm.xlu0 %5032, %v361
  %v5034 = vpop.permute.xlu0 %5033
  %5036 = vset.pattern.permute.xlu0 2
  %5037 = vperm.xlu0 %5036, %v366
  %v5038 = vpop.permute.xlu0 %5037
  %5040 = vset.pattern.permute.xlu0 2
  %5041 = vperm.xlu0 %5040, %v371
  %v5042 = vpop.permute.xlu0 %5041
  %5044 = vset.pattern.permute.xlu0 2
  %5045 = vperm.xlu0 %5044, %v376
  %v5046 = vpop.permute.xlu0 %5045
  %5048 = vset.pattern.permute.xlu0 2
  %5049 = vperm.xlu0 %5048, %v381
  %v5050 = vpop.permute.xlu0 %5049
  %5052 = vset.pattern.permute.xlu0 2
  %5053 = vperm.xlu0 %5052, %v386
  %v5054 = vpop.permute.xlu0 %5053
  %5056 = vset.pattern.permute.xlu0 2
  %5057 = vperm.xlu0 %5056, %v391
  %v5058 = vpop.permute.xlu0 %5057
  %5060 = vset.pattern.permute.xlu0 2
  %5061 = vperm.xlu0 %5060, %v396
  %v5062 = vpop.permute.xlu0 %5061
  %5064 = vset.pattern.permute.xlu0 2
  %5065 = vperm.xlu0 %5064, %v401
  %v5066 = vpop.permute.xlu0 %5065
  %5068 = vset.pattern.permute.xlu0 2
  %5069 = vperm.xlu0 %5068, %v406
  %v5070 = vpop.permute.xlu0 %5069
  %5072 = vset.pattern.permute.xlu0 2
  %5073 = vperm.xlu0 %5072, %v411
  %v5074 = vpop.permute.xlu0 %5073
  %5076 = vset.pattern.permute.xlu0 2
  %5077 = vperm.xlu0 %5076, %v416
  %v5078 = vpop.permute.xlu0 %5077
  %5080 = vset.pattern.permute.xlu0 2
  %5081 = vperm.xlu0 %5080, %v421
  %v5082 = vpop.permute.xlu0 %5081
  %5084 = vset.pattern.permute.xlu0 2
  %5085 = vperm.xlu0 %5084, %v426
  %v5086 = vpop.permute.xlu0 %5085
  %5088 = vset.pattern.permute.xlu0 2
  %5089 = vperm.xlu0 %5088, %v431
  %v5090 = vpop.permute.xlu0 %5089
  %5092 = vset.pattern.permute.xlu0 2
  %5093 = vperm.xlu0 %5092, %v436
  %v5094 = vpop.permute.xlu0 %5093
  %5096 = vset.pattern.permute.xlu0 2
  %5097 = vperm.xlu0 %5096, %v441
  %v5098 = vpop.permute.xlu0 %5097
  %5100 = vset.pattern.permute.xlu0 2
  %5101 = vperm.xlu0 %5100, %v446
  %v5102 = vpop.permute.xlu0 %5101
  %5104 = vset.pattern.permute.xlu0 2
  %5105 = vperm.xlu0 %5104, %v451
  %v5106 = vpop.permute.xlu0 %5105
  %5108 = vset.pattern.permute.xlu0 2
  %5109 = vperm.xlu0 %5108, %v456
  %v5110 = vpop.permute.xlu0 %5109
  %v5112 = vlaneseq
  %v5113 = vshrl.u32 %v5112, 7
  %v5114 = vsub.s32 0, %v5113
  %v5115 = vrot.slane %v3568, %v5114
  %v5116 = vlaneseq
  %v5117 = vshrl.u32 %v5116, 7
  %v5118 = vsub.s32 0, %v5117
  %v5119 = vrot.slane %v3600, %v5118
  %v5120 = vlaneseq
  %v5121 = vshrl.u32 %v5120, 7
  %v5122 = vsub.s32 0, %v5121
  %v5123 = vrot.slane %v3632, %v5122
  %v5124 = vlaneseq
  %v5125 = vshrl.u32 %v5124, 7
  %v5126 = vsub.s32 0, %v5125
  %v5127 = vrot.slane %v3664, %v5126
  %v5128 = vlaneseq
  %v5129 = vshrl.u32 %v5128, 7
  %v5130 = vsub.s32 0, %v5129
  %v5131 = vrot.slane %v3696, %v5130
  %v5132 = vlaneseq
  %v5133 = vshrl.u32 %v5132, 7
  %v5134 = vsub.s32 0, %v5133
  %v5135 = vrot.slane %v3728, %v5134
  %v5136 = vlaneseq
  %v5137 = vshrl.u32 %v5136, 7
  %v5138 = vsub.s32 0, %v5137
  %v5139 = vrot.slane %v3760, %v5138
  %v5140 = vlaneseq
  %v5141 = vshrl.u32 %v5140, 7
  %v5142 = vsub.s32 0, %v5141
  %v5143 = vrot.slane %v3792, %v5142
  %v5144 = vlaneseq
  %v5145 = vshrl.u32 %v5144, 7
  %v5146 = vsub.s32 0, %v5145
  %v5147 = vrot.slane %v3824, %v5146
  %v5148 = vlaneseq
  %v5149 = vshrl.u32 %v5148, 7
  %v5150 = vsub.s32 0, %v5149
  %v5151 = vrot.slane %v3856, %v5150
  %v5152 = vlaneseq
  %v5153 = vshrl.u32 %v5152, 7
  %v5154 = vsub.s32 0, %v5153
  %v5155 = vrot.slane %v3888, %v5154
  %v5156 = vlaneseq
  %v5157 = vshrl.u32 %v5156, 7
  %v5158 = vsub.s32 0, %v5157
  %v5159 = vrot.slane %v3920, %v5158
  %v5160 = vlaneseq
  %v5161 = vshrl.u32 %v5160, 7
  %v5162 = vsub.s32 0, %v5161
  %v5163 = vrot.slane %v3952, %v5162
  %v5164 = vlaneseq
  %v5165 = vshrl.u32 %v5164, 7
  %v5166 = vsub.s32 0, %v5165
  %v5167 = vrot.slane %v3984, %v5166
  %v5168 = vlaneseq
  %v5169 = vshrl.u32 %v5168, 7
  %v5170 = vsub.s32 0, %v5169
  %v5171 = vrot.slane %v4016, %v5170
  %v5172 = vlaneseq
  %v5173 = vshrl.u32 %v5172, 7
  %v5174 = vsub.s32 0, %v5173
  %v5175 = vrot.slane %v4048, %v5174
  %v5176 = vlaneseq
  %v5177 = vshrl.u32 %v5176, 7
  %v5178 = vsub.s32 0, %v5177
  %v5179 = vrot.slane %v4080, %v5178
  %v5180 = vlaneseq
  %v5181 = vshrl.u32 %v5180, 7
  %v5182 = vsub.s32 0, %v5181
  %v5183 = vrot.slane %v4112, %v5182
  %v5184 = vlaneseq
  %v5185 = vshrl.u32 %v5184, 7
  %v5186 = vsub.s32 0, %v5185
  %v5187 = vrot.slane %v4144, %v5186
  %v5188 = vlaneseq
  %v5189 = vshrl.u32 %v5188, 7
  %v5190 = vsub.s32 0, %v5189
  %v5191 = vrot.slane %v4176, %v5190
  %v5192 = vmul.f32 %v4954, %v5115
  %v5193 = vmul.f32 %v4958, %v5115
  %v5194 = vmul.f32 %v4962, %v5119
  %v5195 = vmul.f32 %v4966, %v5119
  %v5196 = vmul.f32 %v4970, %v5123
  %v5197 = vmul.f32 %v4974, %v5123
  %v5198 = vmul.f32 %v4978, %v5127
  %v5199 = vmul.f32 %v4982, %v5127
  %v5200 = vmul.f32 %v4986, %v5131
  %v5201 = vmul.f32 %v4990, %v5131
  %v5202 = vmul.f32 %v4994, %v5135
  %v5203 = vmul.f32 %v4998, %v5135
  %v5204 = vmul.f32 %v5002, %v5139
  %v5205 = vmul.f32 %v5006, %v5139
  %v5206 = vmul.f32 %v5010, %v5143
  %v5207 = vmul.f32 %v5014, %v5143
  %v5208 = vmul.f32 %v5018, %v5147
  %v5209 = vmul.f32 %v5022, %v5147
  %v5210 = vmul.f32 %v5026, %v5151
  %v5211 = vmul.f32 %v5030, %v5151
  %v5212 = vmul.f32 %v5034, %v5155
  %v5213 = vmul.f32 %v5038, %v5155
  %v5214 = vmul.f32 %v5042, %v5159
  %v5215 = vmul.f32 %v5046, %v5159
  %v5216 = vmul.f32 %v5050, %v5163
  %v5217 = vmul.f32 %v5054, %v5163
  %v5218 = vmul.f32 %v5058, %v5167
  %v5219 = vmul.f32 %v5062, %v5167
  %v5220 = vmul.f32 %v5066, %v5171
  %v5221 = vmul.f32 %v5070, %v5171
  %v5222 = vmul.f32 %v5074, %v5175
  %v5223 = vmul.f32 %v5078, %v5175
  %v5224 = vmul.f32 %v5082, %v5179
  %v5225 = vmul.f32 %v5086, %v5179
  %v5226 = vmul.f32 %v5090, %v5183
  %v5227 = vmul.f32 %v5094, %v5183
  %v5228 = vmul.f32 %v5098, %v5187
  %v5229 = vmul.f32 %v5102, %v5187
  %v5230 = vmul.f32 %v5106, %v5191
  %v5231 = vmul.f32 %v5110, %v5191
  %5232 = vset.pattern.permute.xlu0 3
  %5233 = vperm.xlu0 %5232, %v261
  %v5234 = vpop.permute.xlu0 %5233
  %5236 = vset.pattern.permute.xlu0 3
  %5237 = vperm.xlu0 %5236, %v266
  %v5238 = vpop.permute.xlu0 %5237
  %5240 = vset.pattern.permute.xlu0 3
  %5241 = vperm.xlu0 %5240, %v271
  %v5242 = vpop.permute.xlu0 %5241
  %5244 = vset.pattern.permute.xlu0 3
  %5245 = vperm.xlu0 %5244, %v276
  %v5246 = vpop.permute.xlu0 %5245
  %5248 = vset.pattern.permute.xlu0 3
  %5249 = vperm.xlu0 %5248, %v281
  %v5250 = vpop.permute.xlu0 %5249
  %5252 = vset.pattern.permute.xlu0 3
  %5253 = vperm.xlu0 %5252, %v286
  %v5254 = vpop.permute.xlu0 %5253
  %5256 = vset.pattern.permute.xlu0 3
  %5257 = vperm.xlu0 %5256, %v291
  %v5258 = vpop.permute.xlu0 %5257
  %5260 = vset.pattern.permute.xlu0 3
  %5261 = vperm.xlu0 %5260, %v296
  %v5262 = vpop.permute.xlu0 %5261
  %5264 = vset.pattern.permute.xlu0 3
  %5265 = vperm.xlu0 %5264, %v301
  %v5266 = vpop.permute.xlu0 %5265
  %5268 = vset.pattern.permute.xlu0 3
  %5269 = vperm.xlu0 %5268, %v306
  %v5270 = vpop.permute.xlu0 %5269
  %5272 = vset.pattern.permute.xlu0 3
  %5273 = vperm.xlu0 %5272, %v311
  %v5274 = vpop.permute.xlu0 %5273
  %5276 = vset.pattern.permute.xlu0 3
  %5277 = vperm.xlu0 %5276, %v316
  %v5278 = vpop.permute.xlu0 %5277
  %5280 = vset.pattern.permute.xlu0 3
  %5281 = vperm.xlu0 %5280, %v321
  %v5282 = vpop.permute.xlu0 %5281
  %5284 = vset.pattern.permute.xlu0 3
  %5285 = vperm.xlu0 %5284, %v326
  %v5286 = vpop.permute.xlu0 %5285
  %5288 = vset.pattern.permute.xlu0 3
  %5289 = vperm.xlu0 %5288, %v331
  %v5290 = vpop.permute.xlu0 %5289
  %5292 = vset.pattern.permute.xlu0 3
  %5293 = vperm.xlu0 %5292, %v336
  %v5294 = vpop.permute.xlu0 %5293
  %5296 = vset.pattern.permute.xlu0 3
  %5297 = vperm.xlu0 %5296, %v341
  %v5298 = vpop.permute.xlu0 %5297
  %5300 = vset.pattern.permute.xlu0 3
  %5301 = vperm.xlu0 %5300, %v346
  %v5302 = vpop.permute.xlu0 %5301
  %5304 = vset.pattern.permute.xlu0 3
  %5305 = vperm.xlu0 %5304, %v351
  %v5306 = vpop.permute.xlu0 %5305
  %5308 = vset.pattern.permute.xlu0 3
  %5309 = vperm.xlu0 %5308, %v356
  %v5310 = vpop.permute.xlu0 %5309
  %5312 = vset.pattern.permute.xlu0 3
  %5313 = vperm.xlu0 %5312, %v361
  %v5314 = vpop.permute.xlu0 %5313
  %5316 = vset.pattern.permute.xlu0 3
  %5317 = vperm.xlu0 %5316, %v366
  %v5318 = vpop.permute.xlu0 %5317
  %5320 = vset.pattern.permute.xlu0 3
  %5321 = vperm.xlu0 %5320, %v371
  %v5322 = vpop.permute.xlu0 %5321
  %5324 = vset.pattern.permute.xlu0 3
  %5325 = vperm.xlu0 %5324, %v376
  %v5326 = vpop.permute.xlu0 %5325
  %5328 = vset.pattern.permute.xlu0 3
  %5329 = vperm.xlu0 %5328, %v381
  %v5330 = vpop.permute.xlu0 %5329
  %5332 = vset.pattern.permute.xlu0 3
  %5333 = vperm.xlu0 %5332, %v386
  %v5334 = vpop.permute.xlu0 %5333
  %5336 = vset.pattern.permute.xlu0 3
  %5337 = vperm.xlu0 %5336, %v391
  %v5338 = vpop.permute.xlu0 %5337
  %5340 = vset.pattern.permute.xlu0 3
  %5341 = vperm.xlu0 %5340, %v396
  %v5342 = vpop.permute.xlu0 %5341
  %5344 = vset.pattern.permute.xlu0 3
  %5345 = vperm.xlu0 %5344, %v401
  %v5346 = vpop.permute.xlu0 %5345
  %5348 = vset.pattern.permute.xlu0 3
  %5349 = vperm.xlu0 %5348, %v406
  %v5350 = vpop.permute.xlu0 %5349
  %5352 = vset.pattern.permute.xlu0 3
  %5353 = vperm.xlu0 %5352, %v411
  %v5354 = vpop.permute.xlu0 %5353
  %5356 = vset.pattern.permute.xlu0 3
  %5357 = vperm.xlu0 %5356, %v416
  %v5358 = vpop.permute.xlu0 %5357
  %5360 = vset.pattern.permute.xlu0 3
  %5361 = vperm.xlu0 %5360, %v421
  %v5362 = vpop.permute.xlu0 %5361
  %5364 = vset.pattern.permute.xlu0 3
  %5365 = vperm.xlu0 %5364, %v426
  %v5366 = vpop.permute.xlu0 %5365
  %5368 = vset.pattern.permute.xlu0 3
  %5369 = vperm.xlu0 %5368, %v431
  %v5370 = vpop.permute.xlu0 %5369
  %5372 = vset.pattern.permute.xlu0 3
  %5373 = vperm.xlu0 %5372, %v436
  %v5374 = vpop.permute.xlu0 %5373
  %5376 = vset.pattern.permute.xlu0 3
  %5377 = vperm.xlu0 %5376, %v441
  %v5378 = vpop.permute.xlu0 %5377
  %5380 = vset.pattern.permute.xlu0 3
  %5381 = vperm.xlu0 %5380, %v446
  %v5382 = vpop.permute.xlu0 %5381
  %5384 = vset.pattern.permute.xlu0 3
  %5385 = vperm.xlu0 %5384, %v451
  %v5386 = vpop.permute.xlu0 %5385
  %5388 = vset.pattern.permute.xlu0 3
  %5389 = vperm.xlu0 %5388, %v456
  %v5390 = vpop.permute.xlu0 %5389
  %v5392 = vlaneseq
  %v5393 = vshrl.u32 %v5392, 7
  %v5394 = vsub.s32 1, %v5393
  %v5395 = vrot.slane %v3568, %v5394
  %v5396 = vlaneseq
  %v5397 = vshrl.u32 %v5396, 7
  %v5398 = vsub.s32 1, %v5397
  %v5399 = vrot.slane %v3600, %v5398
  %v5400 = vlaneseq
  %v5401 = vshrl.u32 %v5400, 7
  %v5402 = vsub.s32 1, %v5401
  %v5403 = vrot.slane %v3632, %v5402
  %v5404 = vlaneseq
  %v5405 = vshrl.u32 %v5404, 7
  %v5406 = vsub.s32 1, %v5405
  %v5407 = vrot.slane %v3664, %v5406
  %v5408 = vlaneseq
  %v5409 = vshrl.u32 %v5408, 7
  %v5410 = vsub.s32 1, %v5409
  %v5411 = vrot.slane %v3696, %v5410
  %v5412 = vlaneseq
  %v5413 = vshrl.u32 %v5412, 7
  %v5414 = vsub.s32 1, %v5413
  %v5415 = vrot.slane %v3728, %v5414
  %v5416 = vlaneseq
  %v5417 = vshrl.u32 %v5416, 7
  %v5418 = vsub.s32 1, %v5417
  %v5419 = vrot.slane %v3760, %v5418
  %v5420 = vlaneseq
  %v5421 = vshrl.u32 %v5420, 7
  %v5422 = vsub.s32 1, %v5421
  %v5423 = vrot.slane %v3792, %v5422
  %v5424 = vlaneseq
  %v5425 = vshrl.u32 %v5424, 7
  %v5426 = vsub.s32 1, %v5425
  %v5427 = vrot.slane %v3824, %v5426
  %v5428 = vlaneseq
  %v5429 = vshrl.u32 %v5428, 7
  %v5430 = vsub.s32 1, %v5429
  %v5431 = vrot.slane %v3856, %v5430
  %v5432 = vlaneseq
  %v5433 = vshrl.u32 %v5432, 7
  %v5434 = vsub.s32 1, %v5433
  %v5435 = vrot.slane %v3888, %v5434
  %v5436 = vlaneseq
  %v5437 = vshrl.u32 %v5436, 7
  %v5438 = vsub.s32 1, %v5437
  %v5439 = vrot.slane %v3920, %v5438
  %v5440 = vlaneseq
  %v5441 = vshrl.u32 %v5440, 7
  %v5442 = vsub.s32 1, %v5441
  %v5443 = vrot.slane %v3952, %v5442
  %v5444 = vlaneseq
  %v5445 = vshrl.u32 %v5444, 7
  %v5446 = vsub.s32 1, %v5445
  %v5447 = vrot.slane %v3984, %v5446
  %v5448 = vlaneseq
  %v5449 = vshrl.u32 %v5448, 7
  %v5450 = vsub.s32 1, %v5449
  %v5451 = vrot.slane %v4016, %v5450
  %v5452 = vlaneseq
  %v5453 = vshrl.u32 %v5452, 7
  %v5454 = vsub.s32 1, %v5453
  %v5455 = vrot.slane %v4048, %v5454
  %v5456 = vlaneseq
  %v5457 = vshrl.u32 %v5456, 7
  %v5458 = vsub.s32 1, %v5457
  %v5459 = vrot.slane %v4080, %v5458
  %v5460 = vlaneseq
  %v5461 = vshrl.u32 %v5460, 7
  %v5462 = vsub.s32 1, %v5461
  %v5463 = vrot.slane %v4112, %v5462
  %v5464 = vlaneseq
  %v5465 = vshrl.u32 %v5464, 7
  %v5466 = vsub.s32 1, %v5465
  %v5467 = vrot.slane %v4144, %v5466
  %v5468 = vlaneseq
  %v5469 = vshrl.u32 %v5468, 7
  %v5470 = vsub.s32 1, %v5469
  %v5471 = vrot.slane %v4176, %v5470
  %v5472 = vmul.f32 %v5234, %v5395
  %v5473 = vmul.f32 %v5238, %v5395
  %v5474 = vmul.f32 %v5242, %v5399
  %v5475 = vmul.f32 %v5246, %v5399
  %v5476 = vmul.f32 %v5250, %v5403
  %v5477 = vmul.f32 %v5254, %v5403
  %v5478 = vmul.f32 %v5258, %v5407
  %v5479 = vmul.f32 %v5262, %v5407
  %v5480 = vmul.f32 %v5266, %v5411
  %v5481 = vmul.f32 %v5270, %v5411
  %v5482 = vmul.f32 %v5274, %v5415
  %v5483 = vmul.f32 %v5278, %v5415
  %v5484 = vmul.f32 %v5282, %v5419
  %v5485 = vmul.f32 %v5286, %v5419
  %v5486 = vmul.f32 %v5290, %v5423
  %v5487 = vmul.f32 %v5294, %v5423
  %v5488 = vmul.f32 %v5298, %v5427
  %v5489 = vmul.f32 %v5302, %v5427
  %v5490 = vmul.f32 %v5306, %v5431
  %v5491 = vmul.f32 %v5310, %v5431
  %v5492 = vmul.f32 %v5314, %v5435
  %v5493 = vmul.f32 %v5318, %v5435
  %v5494 = vmul.f32 %v5322, %v5439
  %v5495 = vmul.f32 %v5326, %v5439
  %v5496 = vmul.f32 %v5330, %v5443
  %v5497 = vmul.f32 %v5334, %v5443
  %v5498 = vmul.f32 %v5338, %v5447
  %v5499 = vmul.f32 %v5342, %v5447
  %v5500 = vmul.f32 %v5346, %v5451
  %v5501 = vmul.f32 %v5350, %v5451
  %v5502 = vmul.f32 %v5354, %v5455
  %v5503 = vmul.f32 %v5358, %v5455
  %v5504 = vmul.f32 %v5362, %v5459
  %v5505 = vmul.f32 %v5366, %v5459
  %v5506 = vmul.f32 %v5370, %v5463
  %v5507 = vmul.f32 %v5374, %v5463
  %v5508 = vmul.f32 %v5378, %v5467
  %v5509 = vmul.f32 %v5382, %v5467
  %v5510 = vmul.f32 %v5386, %v5471
  %v5511 = vmul.f32 %v5390, %v5471
  %v5512 = vadd.f32 %v5192, %v5472
  %v5513 = vadd.f32 %v5193, %v5473
  %v5514 = vadd.f32 %v5194, %v5474
  %v5515 = vadd.f32 %v5195, %v5475
  %v5516 = vadd.f32 %v5196, %v5476
  %v5517 = vadd.f32 %v5197, %v5477
  %v5518 = vadd.f32 %v5198, %v5478
  %v5519 = vadd.f32 %v5199, %v5479
  %v5520 = vadd.f32 %v5200, %v5480
  %v5521 = vadd.f32 %v5201, %v5481
  %v5522 = vadd.f32 %v5202, %v5482
  %v5523 = vadd.f32 %v5203, %v5483
  %v5524 = vadd.f32 %v5204, %v5484
  %v5525 = vadd.f32 %v5205, %v5485
  %v5526 = vadd.f32 %v5206, %v5486
  %v5527 = vadd.f32 %v5207, %v5487
  %v5528 = vadd.f32 %v5208, %v5488
  %v5529 = vadd.f32 %v5209, %v5489
  %v5530 = vadd.f32 %v5210, %v5490
  %v5531 = vadd.f32 %v5211, %v5491
  %v5532 = vadd.f32 %v5212, %v5492
  %v5533 = vadd.f32 %v5213, %v5493
  %v5534 = vadd.f32 %v5214, %v5494
  %v5535 = vadd.f32 %v5215, %v5495
  %v5536 = vadd.f32 %v5216, %v5496
  %v5537 = vadd.f32 %v5217, %v5497
  %v5538 = vadd.f32 %v5218, %v5498
  %v5539 = vadd.f32 %v5219, %v5499
  %v5540 = vadd.f32 %v5220, %v5500
  %v5541 = vadd.f32 %v5221, %v5501
  %v5542 = vadd.f32 %v5222, %v5502
  %v5543 = vadd.f32 %v5223, %v5503
  %v5544 = vadd.f32 %v5224, %v5504
  %v5545 = vadd.f32 %v5225, %v5505
  %v5546 = vadd.f32 %v5226, %v5506
  %v5547 = vadd.f32 %v5227, %v5507
  %v5548 = vadd.f32 %v5228, %v5508
  %v5549 = vadd.f32 %v5229, %v5509
  %v5550 = vadd.f32 %v5230, %v5510
  %v5551 = vadd.f32 %v5231, %v5511
  %v5552 = vsel %vm2711, %v5512, -inf
  %5553 = vmax.xlane.f32.xlu0 %v5552
  %v5554 = vpop.xlane.xlu0 %5553
  %v5555 = vsel %vm2711, %v5513, -inf
  %5556 = vmax.xlane.f32.xlu0 %v5555
  %v5557 = vpop.xlane.xlu0 %5556
  %v5558 = vsel %vm2711, %v5514, -inf
  %5559 = vmax.xlane.f32.xlu0 %v5558
  %v5560 = vpop.xlane.xlu0 %5559
  %v5561 = vsel %vm2711, %v5515, -inf
  %5562 = vmax.xlane.f32.xlu0 %v5561
  %v5563 = vpop.xlane.xlu0 %5562
  %v5564 = vsel %vm2711, %v5516, -inf
  %5565 = vmax.xlane.f32.xlu0 %v5564
  %v5566 = vpop.xlane.xlu0 %5565
  %v5567 = vsel %vm2711, %v5517, -inf
  %5568 = vmax.xlane.f32.xlu0 %v5567
  %v5569 = vpop.xlane.xlu0 %5568
  %v5570 = vsel %vm2711, %v5518, -inf
  %5571 = vmax.xlane.f32.xlu0 %v5570
  %v5572 = vpop.xlane.xlu0 %5571
  %v5573 = vsel %vm2711, %v5519, -inf
  %5574 = vmax.xlane.f32.xlu0 %v5573
  %v5575 = vpop.xlane.xlu0 %5574
  %v5576 = vsel %vm2711, %v5520, -inf
  %5577 = vmax.xlane.f32.xlu0 %v5576
  %v5578 = vpop.xlane.xlu0 %5577
  %v5579 = vsel %vm2711, %v5521, -inf
  %5580 = vmax.xlane.f32.xlu0 %v5579
  %v5581 = vpop.xlane.xlu0 %5580
  %v5582 = vsel %vm2711, %v5522, -inf
  %5583 = vmax.xlane.f32.xlu0 %v5582
  %v5584 = vpop.xlane.xlu0 %5583
  %v5585 = vsel %vm2711, %v5523, -inf
  %5586 = vmax.xlane.f32.xlu0 %v5585
  %v5587 = vpop.xlane.xlu0 %5586
  %v5588 = vsel %vm2711, %v5524, -inf
  %5589 = vmax.xlane.f32.xlu0 %v5588
  %v5590 = vpop.xlane.xlu0 %5589
  %v5591 = vsel %vm2711, %v5525, -inf
  %5592 = vmax.xlane.f32.xlu0 %v5591
  %v5593 = vpop.xlane.xlu0 %5592
  %v5594 = vsel %vm2711, %v5526, -inf
  %5595 = vmax.xlane.f32.xlu0 %v5594
  %v5596 = vpop.xlane.xlu0 %5595
  %v5597 = vsel %vm2711, %v5527, -inf
  %5598 = vmax.xlane.f32.xlu0 %v5597
  %v5599 = vpop.xlane.xlu0 %5598
  %v5600 = vsel %vm2711, %v5528, -inf
  %5601 = vmax.xlane.f32.xlu0 %v5600
  %v5602 = vpop.xlane.xlu0 %5601
  %v5603 = vsel %vm2711, %v5529, -inf
  %5604 = vmax.xlane.f32.xlu0 %v5603
  %v5605 = vpop.xlane.xlu0 %5604
  %v5606 = vsel %vm2711, %v5530, -inf
  %5607 = vmax.xlane.f32.xlu0 %v5606
  %v5608 = vpop.xlane.xlu0 %5607
  %v5609 = vsel %vm2711, %v5531, -inf
  %5610 = vmax.xlane.f32.xlu0 %v5609
  %v5611 = vpop.xlane.xlu0 %5610
  %v5612 = vsel %vm2711, %v5532, -inf
  %5613 = vmax.xlane.f32.xlu0 %v5612
  %v5614 = vpop.xlane.xlu0 %5613
  %v5615 = vsel %vm2711, %v5533, -inf
  %5616 = vmax.xlane.f32.xlu0 %v5615
  %v5617 = vpop.xlane.xlu0 %5616
  %v5618 = vsel %vm2711, %v5534, -inf
  %5619 = vmax.xlane.f32.xlu0 %v5618
  %v5620 = vpop.xlane.xlu0 %5619
  %v5621 = vsel %vm2711, %v5535, -inf
  %5622 = vmax.xlane.f32.xlu0 %v5621
  %v5623 = vpop.xlane.xlu0 %5622
  %v5624 = vsel %vm2711, %v5536, -inf
  %5625 = vmax.xlane.f32.xlu0 %v5624
  %v5626 = vpop.xlane.xlu0 %5625
  %v5627 = vsel %vm2711, %v5537, -inf
  %5628 = vmax.xlane.f32.xlu0 %v5627
  %v5629 = vpop.xlane.xlu0 %5628
  %v5630 = vsel %vm2711, %v5538, -inf
  %5631 = vmax.xlane.f32.xlu0 %v5630
  %v5632 = vpop.xlane.xlu0 %5631
  %v5633 = vsel %vm2711, %v5539, -inf
  %5634 = vmax.xlane.f32.xlu0 %v5633
  %v5635 = vpop.xlane.xlu0 %5634
  %v5636 = vsel %vm2711, %v5540, -inf
  %5637 = vmax.xlane.f32.xlu0 %v5636
  %v5638 = vpop.xlane.xlu0 %5637
  %v5639 = vsel %vm2711, %v5541, -inf
  %5640 = vmax.xlane.f32.xlu0 %v5639
  %v5641 = vpop.xlane.xlu0 %5640
  %v5642 = vsel %vm2711, %v5542, -inf
  %5643 = vmax.xlane.f32.xlu0 %v5642
  %v5644 = vpop.xlane.xlu0 %5643
  %v5645 = vsel %vm2711, %v5543, -inf
  %5646 = vmax.xlane.f32.xlu0 %v5645
  %v5647 = vpop.xlane.xlu0 %5646
  %v5648 = vsel %vm2711, %v5544, -inf
  %5649 = vmax.xlane.f32.xlu0 %v5648
  %v5650 = vpop.xlane.xlu0 %5649
  %v5651 = vsel %vm2711, %v5545, -inf
  %5652 = vmax.xlane.f32.xlu0 %v5651
  %v5653 = vpop.xlane.xlu0 %5652
  %v5654 = vsel %vm2711, %v5546, -inf
  %5655 = vmax.xlane.f32.xlu0 %v5654
  %v5656 = vpop.xlane.xlu0 %5655
  %v5657 = vsel %vm2711, %v5547, -inf
  %5658 = vmax.xlane.f32.xlu0 %v5657
  %v5659 = vpop.xlane.xlu0 %5658
  %v5660 = vsel %vm2711, %v5548, -inf
  %5661 = vmax.xlane.f32.xlu0 %v5660
  %v5662 = vpop.xlane.xlu0 %5661
  %v5663 = vsel %vm2711, %v5549, -inf
  %5664 = vmax.xlane.f32.xlu0 %v5663
  %v5665 = vpop.xlane.xlu0 %5664
  %v5666 = vsel %vm2711, %v5550, -inf
  %5667 = vmax.xlane.f32.xlu0 %v5666
  %v5668 = vpop.xlane.xlu0 %5667
  %v5669 = vsel %vm2711, %v5551, -inf
  %5670 = vmax.xlane.f32.xlu0 %v5669
  %v5671 = vpop.xlane.xlu0 %5670
  %v5672 = vsub.f32 %v5512, %v5554
  %v5673 = vsub.f32 %v5513, %v5557
  %v5674 = vsub.f32 %v5514, %v5560
  %v5675 = vsub.f32 %v5515, %v5563
  %v5676 = vsub.f32 %v5516, %v5566
  %v5677 = vsub.f32 %v5517, %v5569
  %v5678 = vsub.f32 %v5518, %v5572
  %v5679 = vsub.f32 %v5519, %v5575
  %v5680 = vsub.f32 %v5520, %v5578
  %v5681 = vsub.f32 %v5521, %v5581
  %v5682 = vsub.f32 %v5522, %v5584
  %v5683 = vsub.f32 %v5523, %v5587
  %v5684 = vsub.f32 %v5524, %v5590
  %v5685 = vsub.f32 %v5525, %v5593
  %v5686 = vsub.f32 %v5526, %v5596
  %v5687 = vsub.f32 %v5527, %v5599
  %v5688 = vsub.f32 %v5528, %v5602
  %v5689 = vsub.f32 %v5529, %v5605
  %v5690 = vsub.f32 %v5530, %v5608
  %v5691 = vsub.f32 %v5531, %v5611
  %v5692 = vsub.f32 %v5532, %v5614
  %v5693 = vsub.f32 %v5533, %v5617
  %v5694 = vsub.f32 %v5534, %v5620
  %v5695 = vsub.f32 %v5535, %v5623
  %v5696 = vsub.f32 %v5536, %v5626
  %v5697 = vsub.f32 %v5537, %v5629
  %v5698 = vsub.f32 %v5538, %v5632
  %v5699 = vsub.f32 %v5539, %v5635
  %v5700 = vsub.f32 %v5540, %v5638
  %v5701 = vsub.f32 %v5541, %v5641
  %v5702 = vsub.f32 %v5542, %v5644
  %v5703 = vsub.f32 %v5543, %v5647
  %v5704 = vsub.f32 %v5544, %v5650
  %v5705 = vsub.f32 %v5545, %v5653
  %v5706 = vsub.f32 %v5546, %v5656
  %v5707 = vsub.f32 %v5547, %v5659
  %v5708 = vsub.f32 %v5548, %v5662
  %v5709 = vsub.f32 %v5549, %v5665
  %v5710 = vsub.f32 %v5550, %v5668
  %v5711 = vsub.f32 %v5551, %v5671
  %v5712 = vmul.f32 %v5672, 1.442695
  %v5713 = vpow.pop %v5712
  %v5714 = vmul.f32 %v5673, 1.442695
  %v5715 = vpow.pop %v5714
  %v5716 = vmul.f32 %v5674, 1.442695
  %v5717 = vpow.pop %v5716
  %v5718 = vmul.f32 %v5675, 1.442695
  %v5719 = vpow.pop %v5718
  %v5720 = vmul.f32 %v5676, 1.442695
  %v5721 = vpow.pop %v5720
  %v5722 = vmul.f32 %v5677, 1.442695
  %v5723 = vpow.pop %v5722
  %v5724 = vmul.f32 %v5678, 1.442695
  %v5725 = vpow.pop %v5724
  %v5726 = vmul.f32 %v5679, 1.442695
  %v5727 = vpow.pop %v5726
  %v5728 = vmul.f32 %v5680, 1.442695
  %v5729 = vpow.pop %v5728
  %v5730 = vmul.f32 %v5681, 1.442695
  %v5731 = vpow.pop %v5730
  %v5732 = vmul.f32 %v5682, 1.442695
  %v5733 = vpow.pop %v5732
  %v5734 = vmul.f32 %v5683, 1.442695
  %v5735 = vpow.pop %v5734
  %v5736 = vmul.f32 %v5684, 1.442695
  %v5737 = vpow.pop %v5736
  %v5738 = vmul.f32 %v5685, 1.442695
  %v5739 = vpow.pop %v5738
  %v5740 = vmul.f32 %v5686, 1.442695
  %v5741 = vpow.pop %v5740
  %v5742 = vmul.f32 %v5687, 1.442695
  %v5743 = vpow.pop %v5742
  %v5744 = vmul.f32 %v5688, 1.442695
  %v5745 = vpow.pop %v5744
  %v5746 = vmul.f32 %v5689, 1.442695
  %v5747 = vpow.pop %v5746
  %v5748 = vmul.f32 %v5690, 1.442695
  %v5749 = vpow.pop %v5748
  %v5750 = vmul.f32 %v5691, 1.442695
  %v5751 = vpow.pop %v5750
  %v5752 = vmul.f32 %v5692, 1.442695
  %v5753 = vpow.pop %v5752
  %v5754 = vmul.f32 %v5693, 1.442695
  %v5755 = vpow.pop %v5754
  %v5756 = vmul.f32 %v5694, 1.442695
  %v5757 = vpow.pop %v5756
  %v5758 = vmul.f32 %v5695, 1.442695
  %v5759 = vpow.pop %v5758
  %v5760 = vmul.f32 %v5696, 1.442695
  %v5761 = vpow.pop %v5760
  %v5762 = vmul.f32 %v5697, 1.442695
  %v5763 = vpow.pop %v5762
  %v5764 = vmul.f32 %v5698, 1.442695
  %v5765 = vpow.pop %v5764
  %v5766 = vmul.f32 %v5699, 1.442695
  %v5767 = vpow.pop %v5766
  %v5768 = vmul.f32 %v5700, 1.442695
  %v5769 = vpow.pop %v5768
  %v5770 = vmul.f32 %v5701, 1.442695
  %v5771 = vpow.pop %v5770
  %v5772 = vmul.f32 %v5702, 1.442695
  %v5773 = vpow.pop %v5772
  %v5774 = vmul.f32 %v5703, 1.442695
  %v5775 = vpow.pop %v5774
  %v5776 = vmul.f32 %v5704, 1.442695
  %v5777 = vpow.pop %v5776
  %v5778 = vmul.f32 %v5705, 1.442695
  %v5779 = vpow.pop %v5778
  %v5780 = vmul.f32 %v5706, 1.442695
  %v5781 = vpow.pop %v5780
  %v5782 = vmul.f32 %v5707, 1.442695
  %v5783 = vpow.pop %v5782
  %v5784 = vmul.f32 %v5708, 1.442695
  %v5785 = vpow.pop %v5784
  %v5786 = vmul.f32 %v5709, 1.442695
  %v5787 = vpow.pop %v5786
  %v5788 = vmul.f32 %v5710, 1.442695
  %v5789 = vpow.pop %v5788
  %v5790 = vmul.f32 %v5711, 1.442695
  %v5791 = vpow.pop %v5790
  %v5792 = vsel %vm2711, %v5713, 0.0
  %5793 = vadd.xlane.f32.xlu0 %v5792
  %v5794 = vpop.xlane.xlu0 %5793
  %v5795 = vsel %vm2711, %v5715, 0.0
  %5796 = vadd.xlane.f32.xlu0 %v5795
  %v5797 = vpop.xlane.xlu0 %5796
  %v5798 = vsel %vm2711, %v5717, 0.0
  %5799 = vadd.xlane.f32.xlu0 %v5798
  %v5800 = vpop.xlane.xlu0 %5799
  %v5801 = vsel %vm2711, %v5719, 0.0
  %5802 = vadd.xlane.f32.xlu0 %v5801
  %v5803 = vpop.xlane.xlu0 %5802
  %v5804 = vsel %vm2711, %v5721, 0.0
  %5805 = vadd.xlane.f32.xlu0 %v5804
  %v5806 = vpop.xlane.xlu0 %5805
  %v5807 = vsel %vm2711, %v5723, 0.0
  %5808 = vadd.xlane.f32.xlu0 %v5807
  %v5809 = vpop.xlane.xlu0 %5808
  %v5810 = vsel %vm2711, %v5725, 0.0
  %5811 = vadd.xlane.f32.xlu0 %v5810
  %v5812 = vpop.xlane.xlu0 %5811
  %v5813 = vsel %vm2711, %v5727, 0.0
  %5814 = vadd.xlane.f32.xlu0 %v5813
  %v5815 = vpop.xlane.xlu0 %5814
  %v5816 = vsel %vm2711, %v5729, 0.0
  %5817 = vadd.xlane.f32.xlu0 %v5816
  %v5818 = vpop.xlane.xlu0 %5817
  %v5819 = vsel %vm2711, %v5731, 0.0
  %5820 = vadd.xlane.f32.xlu0 %v5819
  %v5821 = vpop.xlane.xlu0 %5820
  %v5822 = vsel %vm2711, %v5733, 0.0
  %5823 = vadd.xlane.f32.xlu0 %v5822
  %v5824 = vpop.xlane.xlu0 %5823
  %v5825 = vsel %vm2711, %v5735, 0.0
  %5826 = vadd.xlane.f32.xlu0 %v5825
  %v5827 = vpop.xlane.xlu0 %5826
  %v5828 = vsel %vm2711, %v5737, 0.0
  %5829 = vadd.xlane.f32.xlu0 %v5828
  %v5830 = vpop.xlane.xlu0 %5829
  %v5831 = vsel %vm2711, %v5739, 0.0
  %5832 = vadd.xlane.f32.xlu0 %v5831
  %v5833 = vpop.xlane.xlu0 %5832
  %v5834 = vsel %vm2711, %v5741, 0.0
  %5835 = vadd.xlane.f32.xlu0 %v5834
  %v5836 = vpop.xlane.xlu0 %5835
  %v5837 = vsel %vm2711, %v5743, 0.0
  %5838 = vadd.xlane.f32.xlu0 %v5837
  %v5839 = vpop.xlane.xlu0 %5838
  %v5840 = vsel %vm2711, %v5745, 0.0
  %5841 = vadd.xlane.f32.xlu0 %v5840
  %v5842 = vpop.xlane.xlu0 %5841
  %v5843 = vsel %vm2711, %v5747, 0.0
  %5844 = vadd.xlane.f32.xlu0 %v5843
  %v5845 = vpop.xlane.xlu0 %5844
  %v5846 = vsel %vm2711, %v5749, 0.0
  %5847 = vadd.xlane.f32.xlu0 %v5846
  %v5848 = vpop.xlane.xlu0 %5847
  %v5849 = vsel %vm2711, %v5751, 0.0
  %5850 = vadd.xlane.f32.xlu0 %v5849
  %v5851 = vpop.xlane.xlu0 %5850
  %v5852 = vsel %vm2711, %v5753, 0.0
  %5853 = vadd.xlane.f32.xlu0 %v5852
  %v5854 = vpop.xlane.xlu0 %5853
  %v5855 = vsel %vm2711, %v5755, 0.0
  %5856 = vadd.xlane.f32.xlu0 %v5855
  %v5857 = vpop.xlane.xlu0 %5856
  %v5858 = vsel %vm2711, %v5757, 0.0
  %5859 = vadd.xlane.f32.xlu0 %v5858
  %v5860 = vpop.xlane.xlu0 %5859
  %v5861 = vsel %vm2711, %v5759, 0.0
  %5862 = vadd.xlane.f32.xlu0 %v5861
  %v5863 = vpop.xlane.xlu0 %5862
  %v5864 = vsel %vm2711, %v5761, 0.0
  %5865 = vadd.xlane.f32.xlu0 %v5864
  %v5866 = vpop.xlane.xlu0 %5865
  %v5867 = vsel %vm2711, %v5763, 0.0
  %5868 = vadd.xlane.f32.xlu0 %v5867
  %v5869 = vpop.xlane.xlu0 %5868
  %v5870 = vsel %vm2711, %v5765, 0.0
  %5871 = vadd.xlane.f32.xlu0 %v5870
  %v5872 = vpop.xlane.xlu0 %5871
  %v5873 = vsel %vm2711, %v5767, 0.0
  %5874 = vadd.xlane.f32.xlu0 %v5873
  %v5875 = vpop.xlane.xlu0 %5874
  %v5876 = vsel %vm2711, %v5769, 0.0
  %5877 = vadd.xlane.f32.xlu0 %v5876
  %v5878 = vpop.xlane.xlu0 %5877
  %v5879 = vsel %vm2711, %v5771, 0.0
  %5880 = vadd.xlane.f32.xlu0 %v5879
  %v5881 = vpop.xlane.xlu0 %5880
  %v5882 = vsel %vm2711, %v5773, 0.0
  %5883 = vadd.xlane.f32.xlu0 %v5882
  %v5884 = vpop.xlane.xlu0 %5883
  %v5885 = vsel %vm2711, %v5775, 0.0
  %5886 = vadd.xlane.f32.xlu0 %v5885
  %v5887 = vpop.xlane.xlu0 %5886
  %v5888 = vsel %vm2711, %v5777, 0.0
  %5889 = vadd.xlane.f32.xlu0 %v5888
  %v5890 = vpop.xlane.xlu0 %5889
  %v5891 = vsel %vm2711, %v5779, 0.0
  %5892 = vadd.xlane.f32.xlu0 %v5891
  %v5893 = vpop.xlane.xlu0 %5892
  %v5894 = vsel %vm2711, %v5781, 0.0
  %5895 = vadd.xlane.f32.xlu0 %v5894
  %v5896 = vpop.xlane.xlu0 %5895
  %v5897 = vsel %vm2711, %v5783, 0.0
  %5898 = vadd.xlane.f32.xlu0 %v5897
  %v5899 = vpop.xlane.xlu0 %5898
  %v5900 = vsel %vm2711, %v5785, 0.0
  %5901 = vadd.xlane.f32.xlu0 %v5900
  %v5902 = vpop.xlane.xlu0 %5901
  %v5903 = vsel %vm2711, %v5787, 0.0
  %5904 = vadd.xlane.f32.xlu0 %v5903
  %v5905 = vpop.xlane.xlu0 %5904
  %v5906 = vsel %vm2711, %v5789, 0.0
  %5907 = vadd.xlane.f32.xlu0 %v5906
  %v5908 = vpop.xlane.xlu0 %5907
  %v5909 = vsel %vm2711, %v5791, 0.0
  %5910 = vadd.xlane.f32.xlu0 %v5909
  %v5911 = vpop.xlane.xlu0 %5910
  %v5912 = vrcp.pop %v5794
  %v5913 = vrcp.pop %v5797
  %v5914 = vrcp.pop %v5800
  %v5915 = vrcp.pop %v5803
  %v5916 = vrcp.pop %v5806
  %v5917 = vrcp.pop %v5809
  %v5918 = vrcp.pop %v5812
  %v5919 = vrcp.pop %v5815
  %v5920 = vrcp.pop %v5818
  %v5921 = vrcp.pop %v5821
  %v5922 = vrcp.pop %v5824
  %v5923 = vrcp.pop %v5827
  %v5924 = vrcp.pop %v5830
  %v5925 = vrcp.pop %v5833
  %v5926 = vrcp.pop %v5836
  %v5927 = vrcp.pop %v5839
  %v5928 = vrcp.pop %v5842
  %v5929 = vrcp.pop %v5845
  %v5930 = vrcp.pop %v5848
  %v5931 = vrcp.pop %v5851
  %v5932 = vrcp.pop %v5854
  %v5933 = vrcp.pop %v5857
  %v5934 = vrcp.pop %v5860
  %v5935 = vrcp.pop %v5863
  %v5936 = vrcp.pop %v5866
  %v5937 = vrcp.pop %v5869
  %v5938 = vrcp.pop %v5872
  %v5939 = vrcp.pop %v5875
  %v5940 = vrcp.pop %v5878
  %v5941 = vrcp.pop %v5881
  %v5942 = vrcp.pop %v5884
  %v5943 = vrcp.pop %v5887
  %v5944 = vrcp.pop %v5890
  %v5945 = vrcp.pop %v5893
  %v5946 = vrcp.pop %v5896
  %v5947 = vrcp.pop %v5899
  %v5948 = vrcp.pop %v5902
  %v5949 = vrcp.pop %v5905
  %v5950 = vrcp.pop %v5908
  %v5951 = vrcp.pop %v5911
  %v5952 = vmul.f32 %v5713, %v5912
  %v5953 = vmul.f32 %v5715, %v5913
  %v5954 = vmul.f32 %v5717, %v5914
  %v5955 = vmul.f32 %v5719, %v5915
  %v5956 = vmul.f32 %v5721, %v5916
  %v5957 = vmul.f32 %v5723, %v5917
  %v5958 = vmul.f32 %v5725, %v5918
  %v5959 = vmul.f32 %v5727, %v5919
  %v5960 = vmul.f32 %v5729, %v5920
  %v5961 = vmul.f32 %v5731, %v5921
  %v5962 = vmul.f32 %v5733, %v5922
  %v5963 = vmul.f32 %v5735, %v5923
  %v5964 = vmul.f32 %v5737, %v5924
  %v5965 = vmul.f32 %v5739, %v5925
  %v5966 = vmul.f32 %v5741, %v5926
  %v5967 = vmul.f32 %v5743, %v5927
  %v5968 = vmul.f32 %v5745, %v5928
  %v5969 = vmul.f32 %v5747, %v5929
  %v5970 = vmul.f32 %v5749, %v5930
  %v5971 = vmul.f32 %v5751, %v5931
  %v5972 = vmul.f32 %v5753, %v5932
  %v5973 = vmul.f32 %v5755, %v5933
  %v5974 = vmul.f32 %v5757, %v5934
  %v5975 = vmul.f32 %v5759, %v5935
  %v5976 = vmul.f32 %v5761, %v5936
  %v5977 = vmul.f32 %v5763, %v5937
  %v5978 = vmul.f32 %v5765, %v5938
  %v5979 = vmul.f32 %v5767, %v5939
  %v5980 = vmul.f32 %v5769, %v5940
  %v5981 = vmul.f32 %v5771, %v5941
  %v5982 = vmul.f32 %v5773, %v5942
  %v5983 = vmul.f32 %v5775, %v5943
  %v5984 = vmul.f32 %v5777, %v5944
  %v5985 = vmul.f32 %v5779, %v5945
  %v5986 = vmul.f32 %v5781, %v5946
  %v5987 = vmul.f32 %v5783, %v5947
  %v5988 = vmul.f32 %v5785, %v5948
  %v5989 = vmul.f32 %v5787, %v5949
  %v5990 = vmul.f32 %v5789, %v5950
  %v5991 = vmul.f32 %v5791, %v5951
  %v5992 = vlaneseq
  %v5993 = vshrl.u32 %v5992, 7
  %v5994 = vsub.s32 0, %v5993
  %v5995 = vrot.slane %v4328, %v5994
  %v5996 = vlaneseq
  %v5997 = vshrl.u32 %v5996, 7
  %v5998 = vsub.s32 0, %v5997
  %v5999 = vrot.slane %v4360, %v5998
  %v6000 = vlaneseq
  %v6001 = vshrl.u32 %v6000, 7
  %v6002 = vsub.s32 0, %v6001
  %v6003 = vrot.slane %v4392, %v6002
  %v6004 = vlaneseq
  %v6005 = vshrl.u32 %v6004, 7
  %v6006 = vsub.s32 0, %v6005
  %v6007 = vrot.slane %v4424, %v6006
  %v6008 = vlaneseq
  %v6009 = vshrl.u32 %v6008, 7
  %v6010 = vsub.s32 0, %v6009
  %v6011 = vrot.slane %v4456, %v6010
  %v6012 = vlaneseq
  %v6013 = vshrl.u32 %v6012, 7
  %v6014 = vsub.s32 0, %v6013
  %v6015 = vrot.slane %v4488, %v6014
  %v6016 = vlaneseq
  %v6017 = vshrl.u32 %v6016, 7
  %v6018 = vsub.s32 0, %v6017
  %v6019 = vrot.slane %v4520, %v6018
  %v6020 = vlaneseq
  %v6021 = vshrl.u32 %v6020, 7
  %v6022 = vsub.s32 0, %v6021
  %v6023 = vrot.slane %v4552, %v6022
  %v6024 = vlaneseq
  %v6025 = vshrl.u32 %v6024, 7
  %v6026 = vsub.s32 0, %v6025
  %v6027 = vrot.slane %v4584, %v6026
  %v6028 = vlaneseq
  %v6029 = vshrl.u32 %v6028, 7
  %v6030 = vsub.s32 0, %v6029
  %v6031 = vrot.slane %v4616, %v6030
  %v6032 = vlaneseq
  %v6033 = vshrl.u32 %v6032, 7
  %v6034 = vsub.s32 0, %v6033
  %v6035 = vrot.slane %v4648, %v6034
  %v6036 = vlaneseq
  %v6037 = vshrl.u32 %v6036, 7
  %v6038 = vsub.s32 0, %v6037
  %v6039 = vrot.slane %v4680, %v6038
  %v6040 = vlaneseq
  %v6041 = vshrl.u32 %v6040, 7
  %v6042 = vsub.s32 0, %v6041
  %v6043 = vrot.slane %v4712, %v6042
  %v6044 = vlaneseq
  %v6045 = vshrl.u32 %v6044, 7
  %v6046 = vsub.s32 0, %v6045
  %v6047 = vrot.slane %v4744, %v6046
  %v6048 = vlaneseq
  %v6049 = vshrl.u32 %v6048, 7
  %v6050 = vsub.s32 0, %v6049
  %v6051 = vrot.slane %v4776, %v6050
  %v6052 = vlaneseq
  %v6053 = vshrl.u32 %v6052, 7
  %v6054 = vsub.s32 0, %v6053
  %v6055 = vrot.slane %v4808, %v6054
  %v6056 = vlaneseq
  %v6057 = vshrl.u32 %v6056, 7
  %v6058 = vsub.s32 0, %v6057
  %v6059 = vrot.slane %v4840, %v6058
  %v6060 = vlaneseq
  %v6061 = vshrl.u32 %v6060, 7
  %v6062 = vsub.s32 0, %v6061
  %v6063 = vrot.slane %v4872, %v6062
  %v6064 = vlaneseq
  %v6065 = vshrl.u32 %v6064, 7
  %v6066 = vsub.s32 0, %v6065
  %v6067 = vrot.slane %v4904, %v6066
  %v6068 = vlaneseq
  %v6069 = vshrl.u32 %v6068, 7
  %v6070 = vsub.s32 0, %v6069
  %v6071 = vrot.slane %v4936, %v6070
  %v6072 = vmul.f32 %v5952, %v5995
  %v6073 = vmul.f32 %v5953, %v5995
  %v6074 = vmul.f32 %v5954, %v5999
  %v6075 = vmul.f32 %v5955, %v5999
  %v6076 = vmul.f32 %v5956, %v6003
  %v6077 = vmul.f32 %v5957, %v6003
  %v6078 = vmul.f32 %v5958, %v6007
  %v6079 = vmul.f32 %v5959, %v6007
  %v6080 = vmul.f32 %v5960, %v6011
  %v6081 = vmul.f32 %v5961, %v6011
  %v6082 = vmul.f32 %v5962, %v6015
  %v6083 = vmul.f32 %v5963, %v6015
  %v6084 = vmul.f32 %v5964, %v6019
  %v6085 = vmul.f32 %v5965, %v6019
  %v6086 = vmul.f32 %v5966, %v6023
  %v6087 = vmul.f32 %v5967, %v6023
  %v6088 = vmul.f32 %v5968, %v6027
  %v6089 = vmul.f32 %v5969, %v6027
  %v6090 = vmul.f32 %v5970, %v6031
  %v6091 = vmul.f32 %v5971, %v6031
  %v6092 = vmul.f32 %v5972, %v6035
  %v6093 = vmul.f32 %v5973, %v6035
  %v6094 = vmul.f32 %v5974, %v6039
  %v6095 = vmul.f32 %v5975, %v6039
  %v6096 = vmul.f32 %v5976, %v6043
  %v6097 = vmul.f32 %v5977, %v6043
  %v6098 = vmul.f32 %v5978, %v6047
  %v6099 = vmul.f32 %v5979, %v6047
  %v6100 = vmul.f32 %v5980, %v6051
  %v6101 = vmul.f32 %v5981, %v6051
  %v6102 = vmul.f32 %v5982, %v6055
  %v6103 = vmul.f32 %v5983, %v6055
  %v6104 = vmul.f32 %v5984, %v6059
  %v6105 = vmul.f32 %v5985, %v6059
  %v6106 = vmul.f32 %v5986, %v6063
  %v6107 = vmul.f32 %v5987, %v6063
  %v6108 = vmul.f32 %v5988, %v6067
  %v6109 = vmul.f32 %v5989, %v6067
  %v6110 = vmul.f32 %v5990, %v6071
  %v6111 = vmul.f32 %v5991, %v6071
  %v6112 = vsel %vm2711, %v6072, 0.0
  %6113 = vadd.xlane.f32.xlu0 %v6112
  %v6114 = vpop.xlane.xlu0 %6113
  %v6115 = vsel %vm2711, %v6073, 0.0
  %6116 = vadd.xlane.f32.xlu0 %v6115
  %v6117 = vpop.xlane.xlu0 %6116
  %v6118 = vsel %vm2711, %v6074, 0.0
  %6119 = vadd.xlane.f32.xlu0 %v6118
  %v6120 = vpop.xlane.xlu0 %6119
  %v6121 = vsel %vm2711, %v6075, 0.0
  %6122 = vadd.xlane.f32.xlu0 %v6121
  %v6123 = vpop.xlane.xlu0 %6122
  %v6124 = vsel %vm2711, %v6076, 0.0
  %6125 = vadd.xlane.f32.xlu0 %v6124
  %v6126 = vpop.xlane.xlu0 %6125
  %v6127 = vsel %vm2711, %v6077, 0.0
  %6128 = vadd.xlane.f32.xlu0 %v6127
  %v6129 = vpop.xlane.xlu0 %6128
  %v6130 = vsel %vm2711, %v6078, 0.0
  %6131 = vadd.xlane.f32.xlu0 %v6130
  %v6132 = vpop.xlane.xlu0 %6131
  %v6133 = vsel %vm2711, %v6079, 0.0
  %6134 = vadd.xlane.f32.xlu0 %v6133
  %v6135 = vpop.xlane.xlu0 %6134
  %v6136 = vsel %vm2711, %v6080, 0.0
  %6137 = vadd.xlane.f32.xlu0 %v6136
  %v6138 = vpop.xlane.xlu0 %6137
  %v6139 = vsel %vm2711, %v6081, 0.0
  %6140 = vadd.xlane.f32.xlu0 %v6139
  %v6141 = vpop.xlane.xlu0 %6140
  %v6142 = vsel %vm2711, %v6082, 0.0
  %6143 = vadd.xlane.f32.xlu0 %v6142
  %v6144 = vpop.xlane.xlu0 %6143
  %v6145 = vsel %vm2711, %v6083, 0.0
  %6146 = vadd.xlane.f32.xlu0 %v6145
  %v6147 = vpop.xlane.xlu0 %6146
  %v6148 = vsel %vm2711, %v6084, 0.0
  %6149 = vadd.xlane.f32.xlu0 %v6148
  %v6150 = vpop.xlane.xlu0 %6149
  %v6151 = vsel %vm2711, %v6085, 0.0
  %6152 = vadd.xlane.f32.xlu0 %v6151
  %v6153 = vpop.xlane.xlu0 %6152
  %v6154 = vsel %vm2711, %v6086, 0.0
  %6155 = vadd.xlane.f32.xlu0 %v6154
  %v6156 = vpop.xlane.xlu0 %6155
  %v6157 = vsel %vm2711, %v6087, 0.0
  %6158 = vadd.xlane.f32.xlu0 %v6157
  %v6159 = vpop.xlane.xlu0 %6158
  %v6160 = vsel %vm2711, %v6088, 0.0
  %6161 = vadd.xlane.f32.xlu0 %v6160
  %v6162 = vpop.xlane.xlu0 %6161
  %v6163 = vsel %vm2711, %v6089, 0.0
  %6164 = vadd.xlane.f32.xlu0 %v6163
  %v6165 = vpop.xlane.xlu0 %6164
  %v6166 = vsel %vm2711, %v6090, 0.0
  %6167 = vadd.xlane.f32.xlu0 %v6166
  %v6168 = vpop.xlane.xlu0 %6167
  %v6169 = vsel %vm2711, %v6091, 0.0
  %6170 = vadd.xlane.f32.xlu0 %v6169
  %v6171 = vpop.xlane.xlu0 %6170
  %v6172 = vsel %vm2711, %v6092, 0.0
  %6173 = vadd.xlane.f32.xlu0 %v6172
  %v6174 = vpop.xlane.xlu0 %6173
  %v6175 = vsel %vm2711, %v6093, 0.0
  %6176 = vadd.xlane.f32.xlu0 %v6175
  %v6177 = vpop.xlane.xlu0 %6176
  %v6178 = vsel %vm2711, %v6094, 0.0
  %6179 = vadd.xlane.f32.xlu0 %v6178
  %v6180 = vpop.xlane.xlu0 %6179
  %v6181 = vsel %vm2711, %v6095, 0.0
  %6182 = vadd.xlane.f32.xlu0 %v6181
  %v6183 = vpop.xlane.xlu0 %6182
  %v6184 = vsel %vm2711, %v6096, 0.0
  %6185 = vadd.xlane.f32.xlu0 %v6184
  %v6186 = vpop.xlane.xlu0 %6185
  %v6187 = vsel %vm2711, %v6097, 0.0
  %6188 = vadd.xlane.f32.xlu0 %v6187
  %v6189 = vpop.xlane.xlu0 %6188
  %v6190 = vsel %vm2711, %v6098, 0.0
  %6191 = vadd.xlane.f32.xlu0 %v6190
  %v6192 = vpop.xlane.xlu0 %6191
  %v6193 = vsel %vm2711, %v6099, 0.0
  %6194 = vadd.xlane.f32.xlu0 %v6193
  %v6195 = vpop.xlane.xlu0 %6194
  %v6196 = vsel %vm2711, %v6100, 0.0
  %6197 = vadd.xlane.f32.xlu0 %v6196
  %v6198 = vpop.xlane.xlu0 %6197
  %v6199 = vsel %vm2711, %v6101, 0.0
  %6200 = vadd.xlane.f32.xlu0 %v6199
  %v6201 = vpop.xlane.xlu0 %6200
  %v6202 = vsel %vm2711, %v6102, 0.0
  %6203 = vadd.xlane.f32.xlu0 %v6202
  %v6204 = vpop.xlane.xlu0 %6203
  %v6205 = vsel %vm2711, %v6103, 0.0
  %6206 = vadd.xlane.f32.xlu0 %v6205
  %v6207 = vpop.xlane.xlu0 %6206
  %v6208 = vsel %vm2711, %v6104, 0.0
  %6209 = vadd.xlane.f32.xlu0 %v6208
  %v6210 = vpop.xlane.xlu0 %6209
  %v6211 = vsel %vm2711, %v6105, 0.0
  %6212 = vadd.xlane.f32.xlu0 %v6211
  %v6213 = vpop.xlane.xlu0 %6212
  %v6214 = vsel %vm2711, %v6106, 0.0
  %6215 = vadd.xlane.f32.xlu0 %v6214
  %v6216 = vpop.xlane.xlu0 %6215
  %v6217 = vsel %vm2711, %v6107, 0.0
  %6218 = vadd.xlane.f32.xlu0 %v6217
  %v6219 = vpop.xlane.xlu0 %6218
  %v6220 = vsel %vm2711, %v6108, 0.0
  %6221 = vadd.xlane.f32.xlu0 %v6220
  %v6222 = vpop.xlane.xlu0 %6221
  %v6223 = vsel %vm2711, %v6109, 0.0
  %6224 = vadd.xlane.f32.xlu0 %v6223
  %v6225 = vpop.xlane.xlu0 %6224
  %v6226 = vsel %vm2711, %v6110, 0.0
  %6227 = vadd.xlane.f32.xlu0 %v6226
  %v6228 = vpop.xlane.xlu0 %6227
  %v6229 = vsel %vm2711, %v6111, 0.0
  %6230 = vadd.xlane.f32.xlu0 %v6229
  %v6231 = vpop.xlane.xlu0 %6230
  %v6232 = vadd.f32 %v3392, %v6114
  %v6233 = vadd.f32 %v3393, %v6117
  %v6234 = vadd.f32 %v3394, %v6120
  %v6235 = vadd.f32 %v3395, %v6123
  %v6236 = vadd.f32 %v3396, %v6126
  %v6237 = vadd.f32 %v3397, %v6129
  %v6238 = vadd.f32 %v3398, %v6132
  %v6239 = vadd.f32 %v3399, %v6135
  %v6240 = vadd.f32 %v3400, %v6138
  %v6241 = vadd.f32 %v3401, %v6141
  %v6242 = vadd.f32 %v3402, %v6144
  %v6243 = vadd.f32 %v3403, %v6147
  %v6244 = vadd.f32 %v3404, %v6150
  %v6245 = vadd.f32 %v3405, %v6153
  %v6246 = vadd.f32 %v3406, %v6156
  %v6247 = vadd.f32 %v3407, %v6159
  %v6248 = vadd.f32 %v3408, %v6162
  %v6249 = vadd.f32 %v3409, %v6165
  %v6250 = vadd.f32 %v3410, %v6168
  %v6251 = vadd.f32 %v3411, %v6171
  %v6252 = vadd.f32 %v3412, %v6174
  %v6253 = vadd.f32 %v3413, %v6177
  %v6254 = vadd.f32 %v3414, %v6180
  %v6255 = vadd.f32 %v3415, %v6183
  %v6256 = vadd.f32 %v3416, %v6186
  %v6257 = vadd.f32 %v3417, %v6189
  %v6258 = vadd.f32 %v3418, %v6192
  %v6259 = vadd.f32 %v3419, %v6195
  %v6260 = vadd.f32 %v3420, %v6198
  %v6261 = vadd.f32 %v3421, %v6201
  %v6262 = vadd.f32 %v3422, %v6204
  %v6263 = vadd.f32 %v3423, %v6207
  %v6264 = vadd.f32 %v3424, %v6210
  %v6265 = vadd.f32 %v3425, %v6213
  %v6266 = vadd.f32 %v3426, %v6216
  %v6267 = vadd.f32 %v3427, %v6219
  %v6268 = vadd.f32 %v3428, %v6222
  %v6269 = vadd.f32 %v3429, %v6225
  %v6270 = vadd.f32 %v3430, %v6228
  %v6271 = vadd.f32 %v3431, %v6231
  %s6272 = sld [smem:[#allocation2]]
  %v6273 = vstv %s6272
  %v6274 = vadd.f32 %v6232, %v6273
  %v6275 = vadd.f32 %v6233, %v6273
  %v6276 = vadd.f32 %v6234, %v6273
  %v6277 = vadd.f32 %v6235, %v6273
  %v6278 = vadd.f32 %v6236, %v6273
  %v6279 = vadd.f32 %v6237, %v6273
  %v6280 = vadd.f32 %v6238, %v6273
  %v6281 = vadd.f32 %v6239, %v6273
  %v6282 = vadd.f32 %v6240, %v6273
  %v6283 = vadd.f32 %v6241, %v6273
  %v6284 = vadd.f32 %v6242, %v6273
  %v6285 = vadd.f32 %v6243, %v6273
  %v6286 = vadd.f32 %v6244, %v6273
  %v6287 = vadd.f32 %v6245, %v6273
  %v6288 = vadd.f32 %v6246, %v6273
  %v6289 = vadd.f32 %v6247, %v6273
  %v6290 = vadd.f32 %v6248, %v6273
  %v6291 = vadd.f32 %v6249, %v6273
  %v6292 = vadd.f32 %v6250, %v6273
  %v6293 = vadd.f32 %v6251, %v6273
  %v6294 = vadd.f32 %v6252, %v6273
  %v6295 = vadd.f32 %v6253, %v6273
  %v6296 = vadd.f32 %v6254, %v6273
  %v6297 = vadd.f32 %v6255, %v6273
  %v6298 = vadd.f32 %v6256, %v6273
  %v6299 = vadd.f32 %v6257, %v6273
  %v6300 = vadd.f32 %v6258, %v6273
  %v6301 = vadd.f32 %v6259, %v6273
  %v6302 = vadd.f32 %v6260, %v6273
  %v6303 = vadd.f32 %v6261, %v6273
  %v6304 = vadd.f32 %v6262, %v6273
  %v6305 = vadd.f32 %v6263, %v6273
  %v6306 = vadd.f32 %v6264, %v6273
  %v6307 = vadd.f32 %v6265, %v6273
  %v6308 = vadd.f32 %v6266, %v6273
  %v6309 = vadd.f32 %v6267, %v6273
  %v6310 = vadd.f32 %v6268, %v6273
  %v6311 = vadd.f32 %v6269, %v6273
  %v6312 = vadd.f32 %v6270, %v6273
  %v6313 = vadd.f32 %v6271, %v6273
  %v6354 = vlaneseq
  %v6355 = vand.u32 %v6354, 127
  %v6356 = vlaneseq
  %v6357 = vshrl.u32 %v6356, 7
  %v6358 = vsub.s32 %v6355, %v6357
  %v6359 = vrot.slane %v6274, %v6358
  %v6360 = vadd.s32 %v6355, 4294967288
  %v6361 = vlaneseq
  %v6362 = vshrl.u32 %v6361, 7
  %v6363 = vsub.s32 %v6360, %v6362
  %v6364 = vrot.slane %v6275, %v6363
  %vm6365 = vcmask 130112
  %v6366 = vsel %vm6365, %v6364, %v6359
  %v6367 = vlaneseq
  %v6368 = vshrl.u32 %v6367, 7
  %v6369 = vsub.s32 %v6355, %v6368
  %v6370 = vrot.slane %v6276, %v6369
  %v6371 = vlaneseq
  %v6372 = vshrl.u32 %v6371, 7
  %v6373 = vsub.s32 %v6360, %v6372
  %v6374 = vrot.slane %v6277, %v6373
  %v6375 = vsel %vm6365, %v6374, %v6370
  %v6376 = vlaneseq
  %v6377 = vshrl.u32 %v6376, 7
  %v6378 = vsub.s32 %v6355, %v6377
  %v6379 = vrot.slane %v6278, %v6378
  %v6380 = vlaneseq
  %v6381 = vshrl.u32 %v6380, 7
  %v6382 = vsub.s32 %v6360, %v6381
  %v6383 = vrot.slane %v6279, %v6382
  %v6384 = vsel %vm6365, %v6383, %v6379
  %v6385 = vlaneseq
  %v6386 = vshrl.u32 %v6385, 7
  %v6387 = vsub.s32 %v6355, %v6386
  %v6388 = vrot.slane %v6280, %v6387
  %v6389 = vlaneseq
  %v6390 = vshrl.u32 %v6389, 7
  %v6391 = vsub.s32 %v6360, %v6390
  %v6392 = vrot.slane %v6281, %v6391
  %v6393 = vsel %vm6365, %v6392, %v6388
  %v6394 = vlaneseq
  %v6395 = vshrl.u32 %v6394, 7
  %v6396 = vsub.s32 %v6355, %v6395
  %v6397 = vrot.slane %v6282, %v6396
  %v6398 = vlaneseq
  %v6399 = vshrl.u32 %v6398, 7
  %v6400 = vsub.s32 %v6360, %v6399
  %v6401 = vrot.slane %v6283, %v6400
  %v6402 = vsel %vm6365, %v6401, %v6397
  %v6403 = vlaneseq
  %v6404 = vshrl.u32 %v6403, 7
  %v6405 = vsub.s32 %v6355, %v6404
  %v6406 = vrot.slane %v6284, %v6405
  %v6407 = vlaneseq
  %v6408 = vshrl.u32 %v6407, 7
  %v6409 = vsub.s32 %v6360, %v6408
  %v6410 = vrot.slane %v6285, %v6409
  %v6411 = vsel %vm6365, %v6410, %v6406
  %v6412 = vlaneseq
  %v6413 = vshrl.u32 %v6412, 7
  %v6414 = vsub.s32 %v6355, %v6413
  %v6415 = vrot.slane %v6286, %v6414
  %v6416 = vlaneseq
  %v6417 = vshrl.u32 %v6416, 7
  %v6418 = vsub.s32 %v6360, %v6417
  %v6419 = vrot.slane %v6287, %v6418
  %v6420 = vsel %vm6365, %v6419, %v6415
  %v6421 = vlaneseq
  %v6422 = vshrl.u32 %v6421, 7
  %v6423 = vsub.s32 %v6355, %v6422
  %v6424 = vrot.slane %v6288, %v6423
  %v6425 = vlaneseq
  %v6426 = vshrl.u32 %v6425, 7
  %v6427 = vsub.s32 %v6360, %v6426
  %v6428 = vrot.slane %v6289, %v6427
  %v6429 = vsel %vm6365, %v6428, %v6424
  %v6430 = vlaneseq
  %v6431 = vshrl.u32 %v6430, 7
  %v6432 = vsub.s32 %v6355, %v6431
  %v6433 = vrot.slane %v6290, %v6432
  %v6434 = vlaneseq
  %v6435 = vshrl.u32 %v6434, 7
  %v6436 = vsub.s32 %v6360, %v6435
  %v6437 = vrot.slane %v6291, %v6436
  %v6438 = vsel %vm6365, %v6437, %v6433
  %v6439 = vlaneseq
  %v6440 = vshrl.u32 %v6439, 7
  %v6441 = vsub.s32 %v6355, %v6440
  %v6442 = vrot.slane %v6292, %v6441
  %v6443 = vlaneseq
  %v6444 = vshrl.u32 %v6443, 7
  %v6445 = vsub.s32 %v6360, %v6444
  %v6446 = vrot.slane %v6293, %v6445
  %v6447 = vsel %vm6365, %v6446, %v6442
  %v6448 = vlaneseq
  %v6449 = vshrl.u32 %v6448, 7
  %v6450 = vsub.s32 %v6355, %v6449
  %v6451 = vrot.slane %v6294, %v6450
  %v6452 = vlaneseq
  %v6453 = vshrl.u32 %v6452, 7
  %v6454 = vsub.s32 %v6360, %v6453
  %v6455 = vrot.slane %v6295, %v6454
  %v6456 = vsel %vm6365, %v6455, %v6451
  %v6457 = vlaneseq
  %v6458 = vshrl.u32 %v6457, 7
  %v6459 = vsub.s32 %v6355, %v6458
  %v6460 = vrot.slane %v6296, %v6459
  %v6461 = vlaneseq
  %v6462 = vshrl.u32 %v6461, 7
  %v6463 = vsub.s32 %v6360, %v6462
  %v6464 = vrot.slane %v6297, %v6463
  %v6465 = vsel %vm6365, %v6464, %v6460
  %v6466 = vlaneseq
  %v6467 = vshrl.u32 %v6466, 7
  %v6468 = vsub.s32 %v6355, %v6467
  %v6469 = vrot.slane %v6298, %v6468
  %v6470 = vlaneseq
  %v6471 = vshrl.u32 %v6470, 7
  %v6472 = vsub.s32 %v6360, %v6471
  %v6473 = vrot.slane %v6299, %v6472
  %v6474 = vsel %vm6365, %v6473, %v6469
  %v6475 = vlaneseq
  %v6476 = vshrl.u32 %v6475, 7
  %v6477 = vsub.s32 %v6355, %v6476
  %v6478 = vrot.slane %v6300, %v6477
  %v6479 = vlaneseq
  %v6480 = vshrl.u32 %v6479, 7
  %v6481 = vsub.s32 %v6360, %v6480
  %v6482 = vrot.slane %v6301, %v6481
  %v6483 = vsel %vm6365, %v6482, %v6478
  %v6484 = vlaneseq
  %v6485 = vshrl.u32 %v6484, 7
  %v6486 = vsub.s32 %v6355, %v6485
  %v6487 = vrot.slane %v6302, %v6486
  %v6488 = vlaneseq
  %v6489 = vshrl.u32 %v6488, 7
  %v6490 = vsub.s32 %v6360, %v6489
  %v6491 = vrot.slane %v6303, %v6490
  %v6492 = vsel %vm6365, %v6491, %v6487
  %v6493 = vlaneseq
  %v6494 = vshrl.u32 %v6493, 7
  %v6495 = vsub.s32 %v6355, %v6494
  %v6496 = vrot.slane %v6304, %v6495
  %v6497 = vlaneseq
  %v6498 = vshrl.u32 %v6497, 7
  %v6499 = vsub.s32 %v6360, %v6498
  %v6500 = vrot.slane %v6305, %v6499
  %v6501 = vsel %vm6365, %v6500, %v6496
  %v6502 = vlaneseq
  %v6503 = vshrl.u32 %v6502, 7
  %v6504 = vsub.s32 %v6355, %v6503
  %v6505 = vrot.slane %v6306, %v6504
  %v6506 = vlaneseq
  %v6507 = vshrl.u32 %v6506, 7
  %v6508 = vsub.s32 %v6360, %v6507
  %v6509 = vrot.slane %v6307, %v6508
  %v6510 = vsel %vm6365, %v6509, %v6505
  %v6511 = vlaneseq
  %v6512 = vshrl.u32 %v6511, 7
  %v6513 = vsub.s32 %v6355, %v6512
  %v6514 = vrot.slane %v6308, %v6513
  %v6515 = vlaneseq
  %v6516 = vshrl.u32 %v6515, 7
  %v6517 = vsub.s32 %v6360, %v6516
  %v6518 = vrot.slane %v6309, %v6517
  %v6519 = vsel %vm6365, %v6518, %v6514
  %v6520 = vlaneseq
  %v6521 = vshrl.u32 %v6520, 7
  %v6522 = vsub.s32 %v6355, %v6521
  %v6523 = vrot.slane %v6310, %v6522
  %v6524 = vlaneseq
  %v6525 = vshrl.u32 %v6524, 7
  %v6526 = vsub.s32 %v6360, %v6525
  %v6527 = vrot.slane %v6311, %v6526
  %v6528 = vsel %vm6365, %v6527, %v6523
  %v6529 = vlaneseq
  %v6530 = vshrl.u32 %v6529, 7
  %v6531 = vsub.s32 %v6355, %v6530
  %v6532 = vrot.slane %v6312, %v6531
  %v6533 = vlaneseq
  %v6534 = vshrl.u32 %v6533, 7
  %v6535 = vsub.s32 %v6360, %v6534
  %v6536 = vrot.slane %v6313, %v6535
  %v6537 = vsel %vm6365, %v6536, %v6532
  %vm6538 = vcmask 1041409
  %v6539 = vsel %vm6538, %v6375, %v6366
  %vm6540 = vcmask 1042434
  %v6541 = vsel %vm6540, %v6384, %v6539
  %vm6542 = vcmask 1043459
  %v6543 = vsel %vm6542, %v6393, %v6541
  %vm6544 = vcmask 1044484
  %v6545 = vsel %vm6544, %v6402, %v6543
  %vm6546 = vcmask 1045509
  %v6547 = vsel %vm6546, %v6411, %v6545
  %vm6548 = vcmask 1046534
  %v6549 = vsel %vm6548, %v6420, %v6547
  %vm6550 = vcmask 1047559
  %v6551 = vsel %vm6550, %v6429, %v6549
  %v6552 = vsel %vm6538, %v6447, %v6438
  %v6553 = vsel %vm6540, %v6456, %v6552
  %v6554 = vsel %vm6542, %v6465, %v6553
  %v6555 = vsel %vm6544, %v6474, %v6554
  %v6556 = vsel %vm6546, %v6483, %v6555
  %v6557 = vsel %vm6548, %v6492, %v6556
  %v6558 = vsel %vm6550, %v6501, %v6557
  %v6559 = vsel %vm6538, %v6519, %v6510
  %v6560 = vsel %vm6540, %v6528, %v6559
  %v6561 = vsel %vm6542, %v6537, %v6560
  %6565 = vst.msk [vmem:[%s5] sm:$0xff] %vm2711, %v6551
  %6566 = vst.msk [vmem:[%s5 + $0x8] sm:$0xff] %vm2711, %v6558
  %vm6567 = vcmask 125952
  %6568 = vst.msk [vmem:[%s5 + $0x10] sm:$0xf] %vm6567, %v6561
  // Predicated region
  $region22: #{temporal_mhsa.1} parent=0 // pred_check
    _
  $region23: #{temporal_mhsa.1} parent=0 // pred_check_branch
    %6570 = sbr.rel (0) target = $region25
  $region24: #{temporal_mhsa.1} parent=0 // pred_region
    _
  $region25: #{temporal_mhsa.1} parent=0 // pred_fallthru
    _
  // Predicated region
  $region26: #{temporal_mhsa.1} parent=0 // pred_check
    _
  $region27: #{temporal_mhsa.1} parent=0 // pred_check_branch
    %6572 = sbr.rel (0) target = $region29
  $region28: #{temporal_mhsa.1} parent=0 // pred_region
    _
  $region29: #{temporal_mhsa.1} parent=0 // pred_fallthru
    _

</llo_original>
